<compile_context>
chip_gen: v5e
topology: v5e:2x2
jax: 0.10.0
libtpu: 0.0.40
codegen_flags: <defaults>
</compile_context>

<pallas_src>
import functools

import jax
import jax.numpy as jnp
from jax.experimental import pallas as pl
from jax.experimental.pallas import tpu as pltpu

IN_FEAT = 512
HIDDEN = 256
OUT_FEAT = 64
N_HEADS = 4
N_REL = 2

# Safe on v5e/v6e/v7x (raises v5e's 16 MiB default scoped limit; well under
# v7x's 64 MiB physical VMEM).  For production graph sizes, re-derive
# node_tile per generation against this budget.
VMEM_LIMIT_BYTES = 32 * 1024 * 1024


# ----------------------------------------------------------------------------
# Kernel 1: per-relation projection (all heads fused) + attention logits.
#   feat[r]   = x @ W[r]                     (bf16 MXU, f32 accum)
#   logits[r] = feat_bf16 @ attn_blockdiag[r]  -> [el_h | er_h] per head
# grid = (node_tile, relation), both parallel (distinct output blocks).
# ----------------------------------------------------------------------------
def gat_proj_kernel(x_ref, w_ref, attn_ref, feat_ref, logit_ref):
    feat = jnp.dot(x_ref[...], w_ref[0], preferred_element_type=jnp.float32)
    featb = feat.astype(jnp.bfloat16)
    logit_ref[0] = jnp.dot(featb, attn_ref[0],
                           preferred_element_type=jnp.float32)   # (TN, 2H)
    feat_ref[0] = featb                                          # (TN, HD)


# ----------------------------------------------------------------------------
# Kernel 2: masked dense attention + aggregation.
# grid = (dst_tile "parallel", relation "arbitrary" / innermost); the output
# block is resident across the relation axis and accumulated (aggregate='sum').
# ----------------------------------------------------------------------------
def gat_attn_kernel(feat_ref, elt_ref, er_ref, bias_ref, adj_ref, out_ref,
                    *, n_heads, head_dim):
    r = pl.program_id(1)

    @pl.when(r == 0)
    def _():
        out_ref[...] = jnp.zeros_like(out_ref)

    feat = feat_ref[0]            # (N_src, HD)  bf16
    el_t = elt_ref[0]             # (H, N_src)   f32   (el, pre-transposed)
    er = er_ref[0]                # (TD, H)      f32
    mask = adj_ref[0] > 0         # (TD, N_src)  bool  (adj streamed as bf16)

    for h in range(n_heads):      # static unroll, H = 4
        lo = h * head_dim
        hi = lo + head_dim
        # e[dst, src] = leaky_relu(el[src] + er[dst], slope=0.2)   (f32)
        e = er[:, h:h + 1] + el_t[h:h + 1, :]            # (TD, N_src)
        e = jnp.where(e > 0, e, 0.2 * e)
        e = jnp.where(mask, e, -1e30)
        m = jnp.max(e, axis=-1, keepdims=True)
        p = jnp.where(mask, jnp.exp(e - m), 0.0)
        denom = jnp.sum(p, axis=-1, keepdims=True)
        alpha = p / jnp.where(denom > 0, denom, 1.0)     # zero in-degree -> 0
        head_out = jnp.dot(alpha.astype(jnp.bfloat16), feat[:, lo:hi],
                           preferred_element_type=jnp.float32)   # (TD, D)
        out_ref[:, lo:hi] += head_out                    # direct slice write

    out_ref[...] += bias_ref[0]                          # per-relation bias


# ----------------------------------------------------------------------------
# Kernel 3: MLP edge predictor, edges on the lane axis (lane-dense output).
#   z  = W1a^T @ h_src^T + W1b^T @ h_dst^T + b1   (Fh, TE)
#   s  = sum_Fh(relu(z) * w2) + b2                (1, TE)
# ----------------------------------------------------------------------------
def mlp_pred_kernel(hsrc_ref, hdst_ref, w1a_ref, w1b_ref, b1_ref, w2_ref,
                    b2_ref, out_ref):
    z = (jnp.dot(w1a_ref[...], hsrc_ref[...], preferred_element_type=jnp.float32)
         + jnp.dot(w1b_ref[...], hdst_ref[...], preferred_element_type=jnp.float32)
         + b1_ref[...])                               # (Fh, TE)
    z = jnp.maximum(z, 0.0)
    out_ref[...] = jnp.sum(z * w2_ref[...], axis=0, keepdims=True) + b2_ref[...]


# ----------------------------------------------------------------------------
# Wrappers.
# ----------------------------------------------------------------------------
def build_attn_mat(al, ar, n_heads, head_dim):
    """(R,1,HD) attn_l/attn_r -> block-diagonal (R, HD, 2H) so el/er become one matmul."""
    HD = n_heads * head_dim
    head_id = jnp.arange(HD) // head_dim
    sel = jax.nn.one_hot(head_id, n_heads, dtype=jnp.float32)     # (HD, H)
    attn_l = al[:, 0, :, None] * sel[None]                        # (R, HD, H)
    attn_r = ar[:, 0, :, None] * sel[None]
    return jnp.concatenate([attn_l, attn_r], axis=-1)             # (R, HD, 2H)


def gat_layer(x_bf16, w_bf16, attn_bf16, bias, adj_bf16, *, n_heads, head_dim,
              node_tile):
    """One hetero-GAT layer (sum over relations).  Returns (N, H*D) float32."""
    R, F_in, HD = w_bf16.shape
    N = x_bf16.shape[0]
    H2 = 2 * n_heads
    assert HD == n_heads * head_dim
    assert N % node_tile == 0 and node_tile % 8 == 0
    nt = N // node_tile

    # --- projection + attention logits ---
    feat, logits = pl.pallas_call(
        gat_proj_kernel,
        out_shape=(jax.ShapeDtypeStruct((R, N, HD), jnp.bfloat16),
                   jax.ShapeDtypeStruct((R, N, H2), jnp.float32)),
        grid_spec=pltpu.PrefetchScalarGridSpec(
            num_scalar_prefetch=0,
            grid=(nt, R),
            in_specs=[
                pl.BlockSpec((node_tile, F_in), lambda i, r: (i, 0)),
                pl.BlockSpec((1, F_in, HD), lambda i, r: (r, 0, 0)),
                pl.BlockSpec((1, HD, H2), lambda i, r: (r, 0, 0)),
            ],
            out_specs=[
                pl.BlockSpec((1, node_tile, HD), lambda i, r: (r, i, 0)),
                pl.BlockSpec((1, node_tile, H2), lambda i, r: (r, i, 0)),
            ],
        ),
        compiler_params=pltpu.CompilerParams(
            dimension_semantics=("parallel", "parallel"),
            vmem_limit_bytes=VMEM_LIMIT_BYTES),
    )(x_bf16, w_bf16, attn_bf16)

    el_t = jnp.transpose(logits[:, :, :n_heads], (0, 2, 1))   # (R, H, N)
    er = logits[:, :, n_heads:]                                # (R, N, H)

    # --- masked attention + aggregation, accumulated over relations ---
    # TODO(synk): for very large N the src axis also needs tiling (online
    #             softmax); here src is kept whole per dst tile.
    kernel = functools.partial(gat_attn_kernel, n_heads=n_heads,
                               head_dim=head_dim)
    out = pl.pallas_call(
        kernel,
        out_shape=jax.ShapeDtypeStruct((N, HD), jnp.float32),
        grid_spec=pltpu.PrefetchScalarGridSpec(
            num_scalar_prefetch=0,
            grid=(nt, R),
            in_specs=[
                pl.BlockSpec((1, N, HD), lambda i, r: (r, 0, 0)),          # feat
                pl.BlockSpec((1, n_heads, N), lambda i, r: (r, 0, 0)),     # el^T
                pl.BlockSpec((1, node_tile, n_heads), lambda i, r: (r, i, 0)),
                pl.BlockSpec((1, 1, HD), lambda i, r: (r, 0, 0)),          # bias
                pl.BlockSpec((1, node_tile, N), lambda i, r: (r, i, 0)),   # adj
            ],
            out_specs=pl.BlockSpec((node_tile, HD), lambda i, r: (i, 0)),
        ),
        compiler_params=pltpu.CompilerParams(
            dimension_semantics=("parallel", "arbitrary"),
            vmem_limit_bytes=VMEM_LIMIT_BYTES),
    )(feat, el_t, er, bias, adj_bf16)
    return out


def mlp_predict(hsrc_t, hdst_t, w1a_t, w1b_t, b1, w2, b2, *, edge_tile):
    Fh, F = w1a_t.shape
    E_pad = hsrc_t.shape[1]
    assert E_pad % edge_tile == 0 and edge_tile % 128 == 0
    return pl.pallas_call(
        mlp_pred_kernel,
        out_shape=jax.ShapeDtypeStruct((1, E_pad), jnp.float32),
        grid_spec=pltpu.PrefetchScalarGridSpec(
            num_scalar_prefetch=0,
            grid=(E_pad // edge_tile,),
            in_specs=[
                pl.BlockSpec((F, edge_tile), lambda e: (0, e)),
                pl.BlockSpec((F, edge_tile), lambda e: (0, e)),
                pl.BlockSpec((Fh, F), lambda e: (0, 0)),
                pl.BlockSpec((Fh, F), lambda e: (0, 0)),
                pl.BlockSpec((Fh, 1), lambda e: (0, 0)),
                pl.BlockSpec((Fh, 1), lambda e: (0, 0)),
                pl.BlockSpec((1, 1), lambda e: (0, 0)),
            ],
            out_specs=pl.BlockSpec((1, edge_tile), lambda e: (0, e)),
        ),
        compiler_params=pltpu.CompilerParams(
            dimension_semantics=("parallel",),
            vmem_limit_bytes=VMEM_LIMIT_BYTES),
    )(hsrc_t, hdst_t, w1a_t, w1b_t, b1, w2, b2)


# ----------------------------------------------------------------------------
# Model wrapper (glue: casts, gathers, padding, parameter plumbing in JAX).
# ----------------------------------------------------------------------------
def init_params(key):
    ks = jax.random.split(key, 12)
    s = 0.05
    p = {}
    hd1 = N_HEADS * HIDDEN
    p["w1"] = jax.random.normal(ks[0], (N_REL, IN_FEAT, hd1), jnp.float32) * s
    p["al1"] = jax.random.normal(ks[1], (N_REL, 1, hd1), jnp.float32) * s
    p["ar1"] = jax.random.normal(ks[2], (N_REL, 1, hd1), jnp.float32) * s
    p["b1"] = jax.random.normal(ks[3], (N_REL, 1, hd1), jnp.float32) * s
    hd2 = N_HEADS * OUT_FEAT
    p["w2"] = jax.random.normal(ks[4], (N_REL, hd1, hd2), jnp.float32) * s
    p["al2"] = jax.random.normal(ks[5], (N_REL, 1, hd2), jnp.float32) * s
    p["ar2"] = jax.random.normal(ks[6], (N_REL, 1, hd2), jnp.float32) * s
    p["b2"] = jax.random.normal(ks[7], (N_REL, 1, hd2), jnp.float32) * s
    F = OUT_FEAT * N_HEADS
    p["pw1"] = jax.random.normal(ks[8], (2 * F, F), jnp.float32) * s
    p["pb1"] = jax.random.normal(ks[9], (1, F), jnp.float32) * s
    p["pw2"] = jax.random.normal(ks[10], (F, 1), jnp.float32) * s
    p["pb2"] = jax.random.normal(ks[11], (1, 1), jnp.float32) * s
    return p


def double_gat_forward(params, pos_edges, neg_edges, adj_blocks, x,
                       *, node_tile=64, edge_tile=128):
    """pos/neg_edges: (2, E) int32 (src, dst); adj_blocks: [(R,N,N), (R,N,N)]."""
    bf = jnp.bfloat16
    attn1 = build_attn_mat(params["al1"], params["ar1"], N_HEADS, HIDDEN).astype(bf)
    h = gat_layer(x.astype(bf), params["w1"].astype(bf), attn1, params["b1"],
                  adj_blocks[0].astype(bf), n_heads=N_HEADS, head_dim=HIDDEN,
                  node_tile=node_tile)
    h = jax.nn.elu(h)                                   # inter-layer activation
    attn2 = build_attn_mat(params["al2"], params["ar2"], N_HEADS, OUT_FEAT).astype(bf)
    h = gat_layer(h.astype(bf), params["w2"].astype(bf), attn2, params["b2"],
                  adj_blocks[1].astype(bf), n_heads=N_HEADS, head_dim=OUT_FEAT,
                  node_tile=node_tile)

    # Edge scoring: pos + neg fused into one lane-dense, edge-tiled call.
    # TODO(synk): fuse the src/dst row gather into the predictor kernel
    #             (scalar-prefetch / DMA gather) to avoid the HBM round trip.
    F = OUT_FEAT * N_HEADS
    n_pos = pos_edges.shape[1]
    src = jnp.concatenate([pos_edges[0], neg_edges[0]])
    dst = jnp.concatenate([pos_edges[1], neg_edges[1]])
    e_total = src.shape[0]
    e_pad = ((e_total + edge_tile - 1) // edge_tile) * edge_tile
    src = jnp.pad(src, (0, e_pad - e_total))
    dst = jnp.pad(dst, (0, e_pad - e_total))
    hsrc_t = jnp.take(h, src, axis=0).T.astype(bf)      # (F, E_pad) edges on lanes
    hdst_t = jnp.take(h, dst, axis=0).T.astype(bf)
    w1a_t = params["pw1"][:F].T.astype(bf)              # (Fh, F)
    w1b_t = params["pw1"][F:].T.astype(bf)
    b1 = params["pb1"].T                                # (Fh, 1) f32
    scores = mlp_predict(hsrc_t, hdst_t, w1a_t, w1b_t, b1,
                         params["pw2"], params["pb2"], edge_tile=edge_tile)[0]
    return scores[:n_pos], scores[n_pos:e_total]


# ----------------------------------------------------------------------------
# Pure-JAX reference (same math & same bf16 cast points) for correctness check.
# ----------------------------------------------------------------------------
def gat_layer_ref(x, w, al, ar, bias, adj, n_heads, head_dim):
    bf = jnp.bfloat16
    R, F_in, HD = w.shape
    N = x.shape[0]
    attn = build_attn_mat(al, ar, n_heads, head_dim)
    xb = x.astype(bf)
    out = jnp.zeros((N, HD), jnp.float32)
    for r in range(R):
        feat = jnp.dot(xb, w[r].astype(bf), preferred_element_type=jnp.float32)
        featb = feat.astype(bf)
        logits = jnp.dot(featb, attn[r].astype(bf),
                         preferred_element_type=jnp.float32)
        el, er = logits[:, :n_heads], logits[:, n_heads:]
        heads = []
        for h in range(n_heads):
            lo, hi = h * head_dim, (h + 1) * head_dim
            e = er[:, h][:, None] + el[:, h][None, :]
            e = jnp.where(e > 0, e, 0.2 * e)
            mask = adj[r] > 0
            e = jnp.where(mask, e, -1e30)
            m = jnp.max(e, axis=-1, keepdims=True)
            p = jnp.where(mask, jnp.exp(e - m), 0.0)
            d = jnp.sum(p, axis=-1, keepdims=True)
            alpha = p / jnp.where(d > 0, d, 1.0)
            heads.append(jnp.dot(alpha.astype(bf), featb[:, lo:hi],
                                 preferred_element_type=jnp.float32))
        out = out + jnp.concatenate(heads, -1) + bias[r, 0]
    return out


def forward_ref(params, pos_edges, neg_edges, adj_blocks, x):
    bf = jnp.bfloat16
    h = gat_layer_ref(x, params["w1"], params["al1"], params["ar1"],
                      params["b1"], adj_blocks[0], N_HEADS, HIDDEN)
    h = jax.nn.elu(h)
    h = gat_layer_ref(h, params["w2"], params["al2"], params["ar2"],
                      params["b2"], adj_blocks[1], N_HEADS, OUT_FEAT)
    F = OUT_FEAT * N_HEADS
    w1a = params["pw1"][:F].astype(bf)
    w1b = params["pw1"][F:].astype(bf)

    def score(edges):
        src, dst = edges[0], edges[1]
        hs = h[src].astype(bf)
        hd = h[dst].astype(bf)
        z = (jnp.dot(hs, w1a, preferred_element_type=jnp.float32)
             + jnp.dot(hd, w1b, preferred_element_type=jnp.float32)
             + params["pb1"])
        z = jnp.maximum(z, 0.0)
        return (z @ params["pw2"] + params["pb2"])[:, 0]

    return score(pos_edges), score(neg_edges)


if __name__ == "__main__":
    key = jax.random.PRNGKey(0)
    k_param, k_x = jax.random.split(key)

    N = 128         # nodes (small, but exercises node tiling: 2 dst tiles x 2 rel)
    E = 8           # edges in each of pos / neg graphs

    params = init_params(k_param)
    x = jax.random.normal(k_x, (N, IN_FEAT), jnp.float32)

    # Dense adjacency masks per relation for the two message-flow blocks.
    ii = jnp.arange(N)[:, None]
    jj = jnp.arange(N)[None, :]
    adj1 = jnp.stack([((ii + jj + r) % 3 == 0).astype(jnp.float32)
                      for r in range(N_REL)])            # (R, N, N)
    adj2 = jnp.stack([((2 * ii + jj + r) % 4 == 0).astype(jnp.float32)
                      for r in range(N_REL)])            # (R, N, N)

    pos_edges = jnp.stack([jnp.arange(E, dtype=jnp.int32) % N,
                           (3 * jnp.arange(E, dtype=jnp.int32) + 1) % N])
    neg_edges = jnp.stack([(5 * jnp.arange(E, dtype=jnp.int32) + 2) % N,
                           (7 * jnp.arange(E, dtype=jnp.int32) + 3) % N])

    pos_score, neg_score = double_gat_forward(
        params, pos_edges, neg_edges, (adj1, adj2), x)
    jax.block_until_ready((pos_score, neg_score))

    pos_ref, neg_ref = forward_ref(params, pos_edges, neg_edges, (adj1, adj2), x)
    assert pos_score.shape == (E,) and neg_score.shape == (E,)
    assert jnp.allclose(pos_score, pos_ref, rtol=2e-2, atol=2e-2)
    assert jnp.allclose(neg_score, neg_ref, rtol=2e-2, atol=2e-2)

    print("KERNEL_OK")
</pallas_src>

<mosaic_0001>
module attributes {stable_mosaic.version = 11 : i64} {
  func.func @gat_proj_kernel(%arg0: i32, %arg1: i32, %arg2: memref<64x512xbf16, #tpu.memory_space<vmem>>, %arg3: memref<1x512x1024xbf16, #tpu.memory_space<vmem>>, %arg4: memref<1x1024x8xbf16, #tpu.memory_space<vmem>>, %arg5: memref<1x64x1024xbf16, #tpu.memory_space<vmem>>, %arg6: memref<1x64x8xf32, #tpu.memory_space<vmem>>) attributes {dimension_semantics = [#tpu.dimension_semantics<parallel>, #tpu.dimension_semantics<parallel>], iteration_bounds = array<i64: 2, 2>, scalar_prefetch = 0 : i64, scratch_operands = 0 : i64, tpu.core_type = #tpu.core_type<tc>, window_params = [{transform_indices = @transform_0, window_bounds = array<i64: 64, 512>}, {transform_indices = @transform_1, window_bounds = array<i64: 1, 512, 1024>}, {transform_indices = @transform_2, window_bounds = array<i64: 1, 1024, 8>}, {transform_indices = @transform_3, window_bounds = array<i64: 1, 64, 1024>}, {transform_indices = @transform_4, window_bounds = array<i64: 1, 64, 8>}]} {
    %c0 = arith.constant 0 : index
    %c0_0 = arith.constant 0 : index
    %0 = vector.load %arg2[%c0, %c0_0] : memref<64x512xbf16, #tpu.memory_space<vmem>>, vector<64x512xbf16>
    %c0_1 = arith.constant 0 : index
    %c0_2 = arith.constant 0 : index
    %c0_3 = arith.constant 0 : index
    %1 = vector.load %arg3[%c0_1, %c0_2, %c0_3] : memref<1x512x1024xbf16, #tpu.memory_space<vmem>>, vector<1x512x1024xbf16>
    %2 = vector.shape_cast %1 : vector<1x512x1024xbf16> to vector<512x1024xbf16>
    %cst = arith.constant dense<0.000000e+00> : vector<64x1024xf32>
    %3 = tpu.matmul %0, %2, %cst {dimension_numbers = #tpu.dot_dimension_numbers<[1], [0], [0], [1], [0, 0, 1, 1], [], []>} : vector<64x512xbf16>, vector<512x1024xbf16>, vector<64x1024xf32> -> vector<64x1024xf32>
    %4 = arith.truncf %3 : vector<64x1024xf32> to vector<64x1024xbf16>
    %c0_4 = arith.constant 0 : index
    %c0_5 = arith.constant 0 : index
    %c0_6 = arith.constant 0 : index
    %5 = vector.load %arg4[%c0_4, %c0_5, %c0_6] : memref<1x1024x8xbf16, #tpu.memory_space<vmem>>, vector<1x1024x8xbf16>
    %6 = vector.shape_cast %5 : vector<1x1024x8xbf16> to vector<1024x8xbf16>
    %cst_7 = arith.constant dense<0.000000e+00> : vector<64x8xf32>
    %7 = tpu.matmul %4, %6, %cst_7 {dimension_numbers = #tpu.dot_dimension_numbers<[1], [0], [0], [1], [0, 0, 1, 1], [], []>} : vector<64x1024xbf16>, vector<1024x8xbf16>, vector<64x8xf32> -> vector<64x8xf32>
    %c0_8 = arith.constant 0 : index
    %c0_9 = arith.constant 0 : index
    %c0_10 = arith.constant 0 : index
    %8 = vector.load %arg6[%c0_8, %c0_9, %c0_10] : memref<1x64x8xf32, #tpu.memory_space<vmem>>, vector<1x64x8xf32>
    %9 = vector.shape_cast %8 : vector<1x64x8xf32> to vector<64x8xf32>
    %10 = vector.shape_cast %7 : vector<64x8xf32> to vector<1x64x8xf32>
    tpu.vector_store %arg6[%c0_8, %c0_9, %c0_10], %10 {strides = array<i32>} : memref<1x64x8xf32, #tpu.memory_space<vmem>>, vector<1x64x8xf32>,
    %c0_11 = arith.constant 0 : index
    %c0_12 = arith.constant 0 : index
    %c0_13 = arith.constant 0 : index
    %11 = vector.load %arg5[%c0_11, %c0_12, %c0_13] : memref<1x64x1024xbf16, #tpu.memory_space<vmem>>, vector<1x64x1024xbf16>
    %12 = vector.shape_cast %11 : vector<1x64x1024xbf16> to vector<64x1024xbf16>
    %13 = vector.shape_cast %4 : vector<64x1024xbf16> to vector<1x64x1024xbf16>
    tpu.vector_store %arg5[%c0_11, %c0_12, %c0_13], %13 {strides = array<i32>} : memref<1x64x1024xbf16, #tpu.memory_space<vmem>>, vector<1x64x1024xbf16>,
    return
  }
  func.func @transform_0(%arg0: i32, %arg1: i32) -> (i32, i32) {
    %c0_i32 = arith.constant 0 : i32
    %c0_i32_0 = arith.constant 0 : i32
    return %arg0, %c0_i32 : i32, i32
  }
  func.func @transform_1(%arg0: i32, %arg1: i32) -> (i32, i32, i32) {
    %c0_i32 = arith.constant 0 : i32
    %c0_i32_0 = arith.constant 0 : i32
    %c0_i32_1 = arith.constant 0 : i32
    return %arg1, %c0_i32, %c0_i32_0 : i32, i32, i32
  }
  func.func @transform_2(%arg0: i32, %arg1: i32) -> (i32, i32, i32) {
    %c0_i32 = arith.constant 0 : i32
    %c0_i32_0 = arith.constant 0 : i32
    %c0_i32_1 = arith.constant 0 : i32
    return %arg1, %c0_i32, %c0_i32_0 : i32, i32, i32
  }
  func.func @transform_3(%arg0: i32, %arg1: i32) -> (i32, i32, i32) {
    %c0_i32 = arith.constant 0 : i32
    %c0_i32_0 = arith.constant 0 : i32
    return %arg1, %arg0, %c0_i32 : i32, i32, i32
  }
  func.func @transform_4(%arg0: i32, %arg1: i32) -> (i32, i32, i32) {
    %c0_i32 = arith.constant 0 : i32
    %c0_i32_0 = arith.constant 0 : i32
    return %arg1, %arg0, %c0_i32 : i32, i32, i32
  }
}

</mosaic_0001>

<llo_original>
// kernel: tpu_custom_call.1
$region0: #{tpu_custom_call.1}
  #allocation0 [shape = 'u32[]', space=smem, size = 0x4, offset = 0x4, fixed_abs, tag = 'smem constant byte address 0x4 - core index']
  #allocation1 [shape = 'u32[72,128]{1,0:T(1,128)}', space=vmem, size = 0x9000, scoped, tag = 'internal scratch']
  %s0 = inlined_call_operand.hbm [shape: bf16[128,512], index: 0, kind: input, shape index: {}]
  %s1 = inlined_call_operand.hbm [shape: bf16[2,512,1024], index: 1, kind: input, shape index: {}]
  %s2 = inlined_call_operand.vmem [shape: bf16[2,1024,8], index: 2, kind: input, shape index: {}]
  %s3 = inlined_call_operand.hbm [shape: bf16[2,128,1024], index: 3, kind: output, shape index: {0}]
  %s4 = inlined_call_operand.vmem [shape: f32[2,128,8], index: 4, kind: output, shape index: {1}]
  %5 = xla_tuple %s3, %s4
  %s6 = sld [smem:[#allocation0]]
  $region61: #{tpu_custom_call.1} parent=0
    _
  %s8 = ssub.s32 1, %s6
  %s9 = scalar_select 0, %s8, %s6
  $region1: #{tpu_custom_call.1} parent=0
    #allocation2 [shape = 'u8[131072]{0}', space=vmem, size = 0x20000, scoped, tag = 'input window, operand 0']
    #allocation3 [shape = 's32[2]{0}', space=sflag, size = 0x8, scoped, tag = 'scoped memory for tpu_custom_call.1']
    #allocation4 [shape = 's32[2]{0}', space=sflag, size = 0x8, scoped, tag = 'scoped memory for tpu_custom_call.1']
    #allocation5 [shape = 'u8[2097152]{0}', space=vmem, size = 0x200000, scoped, tag = 'input window, operand 1']
    #allocation6 [shape = 's32[2]{0}', space=sflag, size = 0x8, scoped, tag = 'scoped memory for tpu_custom_call.1']
    #allocation7 [shape = 'u8[262144]{0}', space=vmem, size = 0x40000, scoped, tag = 'output window, operand 0']
    %10 = vsyncpa [#allocation3], 0
    %s11 = scalar_lea.sflag [#allocation3], 1
    %12 = vsyncpa %s11, 0
    %13 = vsyncpa [#allocation6], 0
    %s14 = scalar_lea.sflag [#allocation6], 1
    %15 = vsyncpa %s14, 0
    %16 = vsyncpa [#allocation4], 0
    %s17 = scalar_lea.sflag [#allocation4], 1
    %18 = vsyncpa %s17, 0
    loop: start=0, step=1, limit=6
    $region2: #{tpu_custom_call.1} parent=1 // loop_pre_header
      _
    $region3: #{tpu_custom_call.1} parent=1 // loop_header
      %s20 = sphi 0, %s24
      %p21 = scmp.ge.s32.totalorder %s20, 6
      %s27 = sphi 0, %s39
      %s28 = sphi 0, %s35
      %s29 = sphi 0, %s27
      %s30 = sphi 0, %s28
      %s31 = sphi 0, %s29
      %s32 = sphi 0, %s30
      %s42 = sphi 0, %s44
      %s45 = sphi 0, %s42
      %s46 = sphi 0, %s45
      %s62 = sphi 0, %s46
      %s68 = sphi 0, %s70
      %s71 = sphi 0, %s68
      %s72 = sphi 0, %s71
      %s88 = sphi 0, %s72
      %s94 = sphi 0, %s96
      %s97 = sphi 0, %s94
      %s98 = sphi 0, %s97
      %s114 = sphi 0, %s98
      %s122 = sphi 0, %s124
      %s125 = sphi 0, %s122
      %s126 = sphi 0, %s125
      %s142 = sphi 0, %s126
      %s150 = sphi 0, %s152
      %s153 = sphi 0, %s150
      %s154 = sphi 0, %s153
      %s170 = sphi 0, %s154
    $region4: #{tpu_custom_call.1} parent=1 // loop_header_branch
      %23 = sbr.rel (%p21) target = $region8
    $region5: #{tpu_custom_call.1} parent=1 // loop_body
      %s25 = ssub.s32 %s20, 1
      %s26 = ssub.s32 %s20, 2
      %s33 = sadd.s32 1, %s28
      %p34 = scmp.ge.s32.totalorder %s33, 2
      %s35 = scalar_select %p34, 0, %s33
      %s36 = sadd.s32 1, %s27
      %s37 = scalar_select %p34, %s36, %s27
      %p38 = scmp.ge.s32.totalorder %s37, 2
      %s39 = scalar_select %p38, 0, %s37
      %s40 = ssub.s32 %s27, %s39
      %p41 = scmp.eq.s32.totalorder %s40, 0
      %s43 = sadd.s32 %s42, 1
      %s44 = scalar_select %p41, %s42, %s43
      %p47 = pneg %p41
      %p48 = scmp.eq.s32.totalorder %s20, 3
      %p49 = por %p47, %p48
      %p50 = scmp.ne.s32.totalorder %s42, %s45
      %p51 = scmp.eq.s32.totalorder %s20, 0
      %p52 = por %p50, %p51
      %p53 = scmp.ne.s32.totalorder %s42, %s45
      %p54 = scmp.eq.s32.totalorder %s25, 3
      %p55 = por %p53, %p54
      %p56 = scmp.ne.s32.totalorder %s45, %s46
      %p57 = scmp.eq.s32.totalorder %s25, 0
      %p58 = por %p56, %p57
      %p59 = scmp.ne.s32.totalorder %s45, %s46
      %p60 = scmp.eq.s32.totalorder %s26, 3
      %p61 = por %p59, %p60
      %p63 = scmp.ne.s32.totalorder %s46, %s62
      %p64 = scmp.eq.s32.totalorder %s26, 0
      %p65 = por %p63, %p64
      %s66 = ssub.s32 %s28, %s35
      %p67 = scmp.eq.s32.totalorder %s66, 0
      %s69 = sadd.s32 %s68, 1
      %s70 = scalar_select %p67, %s68, %s69
      %p73 = pneg %p67
      %p74 = scmp.eq.s32.totalorder %s20, 3
      %p75 = por %p73, %p74
      %p76 = scmp.ne.s32.totalorder %s68, %s71
      %p77 = scmp.eq.s32.totalorder %s20, 0
      %p78 = por %p76, %p77
      %p79 = scmp.ne.s32.totalorder %s68, %s71
      %p80 = scmp.eq.s32.totalorder %s25, 3
      %p81 = por %p79, %p80
      %p82 = scmp.ne.s32.totalorder %s71, %s72
      %p83 = scmp.eq.s32.totalorder %s25, 0
      %p84 = por %p82, %p83
      %p85 = scmp.ne.s32.totalorder %s71, %s72
      %p86 = scmp.eq.s32.totalorder %s26, 3
      %p87 = por %p85, %p86
      %p89 = scmp.ne.s32.totalorder %s72, %s88
      %p90 = scmp.eq.s32.totalorder %s26, 0
      %p91 = por %p89, %p90
      %s92 = ssub.s32 %s28, %s35
      %p93 = scmp.eq.s32.totalorder %s92, 0
      %s95 = sadd.s32 %s94, 1
      %s96 = scalar_select %p93, %s94, %s95
      %p99 = pneg %p93
      %p100 = scmp.eq.s32.totalorder %s20, 3
      %p101 = por %p99, %p100
      %p102 = scmp.ne.s32.totalorder %s94, %s97
      %p103 = scmp.eq.s32.totalorder %s20, 0
      %p104 = por %p102, %p103
      %p105 = scmp.ne.s32.totalorder %s94, %s97
      %p106 = scmp.eq.s32.totalorder %s25, 3
      %p107 = por %p105, %p106
      %p108 = scmp.ne.s32.totalorder %s97, %s98
      %p109 = scmp.eq.s32.totalorder %s25, 0
      %p110 = por %p108, %p109
      %p111 = scmp.ne.s32.totalorder %s97, %s98
      %p112 = scmp.eq.s32.totalorder %s26, 3
      %p113 = por %p111, %p112
      %p115 = scmp.ne.s32.totalorder %s98, %s114
      %p116 = scmp.eq.s32.totalorder %s26, 0
      %p117 = por %p115, %p116
      %s118 = ssub.s32 %s28, %s35
      %s119 = ssub.s32 %s27, %s39
      %s120 = sor.u32 %s118, %s119
      %p121 = scmp.eq.s32.totalorder %s120, 0
      %s123 = sadd.s32 %s122, 1
      %s124 = scalar_select %p121, %s122, %s123
      %p127 = pneg %p121
      %p128 = scmp.eq.s32.totalorder %s20, 3
      %p129 = por %p127, %p128
      %p130 = scmp.ne.s32.totalorder %s122, %s125
      %p131 = scmp.eq.s32.totalorder %s20, 0
      %p132 = por %p130, %p131
      %p133 = scmp.ne.s32.totalorder %s122, %s125
      %p134 = scmp.eq.s32.totalorder %s25, 3
      %p135 = por %p133, %p134
      %p136 = scmp.ne.s32.totalorder %s125, %s126
      %p137 = scmp.eq.s32.totalorder %s25, 0
      %p138 = por %p136, %p137
      %p139 = scmp.ne.s32.totalorder %s125, %s126
      %p140 = scmp.eq.s32.totalorder %s26, 3
      %p141 = por %p139, %p140
      %p143 = scmp.ne.s32.totalorder %s126, %s142
      %p144 = scmp.eq.s32.totalorder %s26, 0
      %p145 = por %p143, %p144
      %s146 = ssub.s32 %s28, %s35
      %s147 = ssub.s32 %s27, %s39
      %s148 = sor.u32 %s146, %s147
      %p149 = scmp.eq.s32.totalorder %s148, 0
      %s151 = sadd.s32 %s150, 1
      %s152 = scalar_select %p149, %s150, %s151
      %p155 = pneg %p149
      %p156 = scmp.eq.s32.totalorder %s20, 3
      %p157 = por %p155, %p156
      %p158 = scmp.ne.s32.totalorder %s150, %s153
      %p159 = scmp.eq.s32.totalorder %s20, 0
      %p160 = por %p158, %p159
      %p161 = scmp.ne.s32.totalorder %s150, %s153
      %p162 = scmp.eq.s32.totalorder %s25, 3
      %p163 = por %p161, %p162
      %p164 = scmp.ne.s32.totalorder %s153, %s154
      %p165 = scmp.eq.s32.totalorder %s25, 0
      %p166 = por %p164, %p165
      %p167 = scmp.ne.s32.totalorder %s153, %s154
      %p168 = scmp.eq.s32.totalorder %s26, 3
      %p169 = por %p167, %p168
      %p171 = scmp.ne.s32.totalorder %s154, %s170
      %p172 = scmp.eq.s32.totalorder %s26, 0
      %p173 = por %p171, %p172
      %p174 = scmp.le.s32.totalorder 1, %s20
      %p175 = scmp.lt.s32.totalorder %s20, 5
      %p176 = pnand %p174, %p175
      %p177 = pneg %p176
      // Predicated region
      $region9: #{tpu_custom_call.1} parent=5 // pred_check
        _
      $region10: #{tpu_custom_call.1} parent=5 // pred_check_branch
        %179 = sbr.rel (%p176) target = $region12
      $region11: #{tpu_custom_call.1} parent=5 // pred_region
        %s180 = ssub.s32 %s20, 1
      $region12: #{tpu_custom_call.1} parent=5 // pred_fallthru
        _
      %p181 = scmp.lt.s32.totalorder %s20, 4
      // Predicated region
      $region13: #{tpu_custom_call.1} parent=5 // pred_check
        %p182 = pneg %p181
      $region14: #{tpu_custom_call.1} parent=5 // pred_check_branch
        %184 = sbr.rel (%p182) target = $region16
      $region15: #{tpu_custom_call.1} parent=5 // pred_region
        // Predicated region
        $region17: #{tpu_custom_call.1} parent=15 // pred_check
          %p185 = pneg %p52
        $region18: #{tpu_custom_call.1} parent=15 // pred_check_branch
          %187 = sbr.rel (%p185) target = $region20
        $region19: #{tpu_custom_call.1} parent=15 // pred_region
          %s188 = sand.u32 %s42, 1
          %s189 = scalar_lea.sflag [#allocation3], %s188
          %s190 = sand.u32 %s42, 1
          %s191 = smul.addr %s190, 128
          %s192 = scalar_lea.vmem [#allocation2], %s191
          %s193 = smul.u32 8, %s27
          %195 = vsyncadd %s189, 0
          %s196 = smul.addr %s193, 4
          %s197 = smul.addr %s196, 4
          %s198 = scalar_lea.hbm %s0, %s197
          %s199 = sshll.u32 %s198, 4
          %s200 = int_to_ptr.hbm [resolvable:$true] %s199
          %s201 = sshll.u32 %s192, 4
          %s202 = int_to_ptr.vmem [resolvable:$true] %s201
          %207 = dma.hbm_to_vmem [thread:$0]  %s200, 2048, %s202, %s189, 256, 256, 16
        $region20: #{tpu_custom_call.1} parent=15 // pred_fallthru
          _
        // Predicated region
        $region21: #{tpu_custom_call.1} parent=15 // pred_check
          %p208 = pneg %p78
        $region22: #{tpu_custom_call.1} parent=15 // pred_check_branch
          %210 = sbr.rel (%p208) target = $region24
        $region23: #{tpu_custom_call.1} parent=15 // pred_region
          %s211 = sand.u32 %s68, 1
          %s212 = scalar_lea.sflag [#allocation6], %s211
          %s213 = sand.u32 %s68, 1
          %s214 = smul.addr %s213, 2048
          %s215 = scalar_lea.vmem [#allocation5], %s214
          %217 = vsyncadd %s212, 0
          %s218 = smul.addr %s28, 512
          %s219 = smul.addr %s218, 4
          %s220 = scalar_lea.hbm %s1, %s219
          %s221 = sshll.u32 %s220, 4
          %s222 = int_to_ptr.hbm [resolvable:$true] %s221
          %s223 = sshll.u32 %s215, 4
          %s224 = int_to_ptr.vmem [resolvable:$true] %s223
          %229 = dma.hbm_to_vmem [thread:$0]  %s222, 32768, %s224, %s212, 512, 512, 32
        $region24: #{tpu_custom_call.1} parent=15 // pred_fallthru
          _
        // Predicated region
        $region25: #{tpu_custom_call.1} parent=15 // pred_check
          %p230 = pneg %p104
        $region26: #{tpu_custom_call.1} parent=15 // pred_check_branch
          %232 = sbr.rel (%p230) target = $region28
        $region27: #{tpu_custom_call.1} parent=15 // pred_region
          %p233 = scmp.lt.s32.totalorder %s28, 1
          %s234 = scalar_select %p233, %s28, 1
          %s235 = smul.addr %s234, 128
          %s236 = smul.addr %s235, 4
          %s237 = scalar_lea.vmem %s2, %s236
        $region28: #{tpu_custom_call.1} parent=15 // pred_fallthru
          _
      $region16: #{tpu_custom_call.1} parent=5 // pred_fallthru
        _
      %p238 = scmp.le.s32.totalorder 1, %s20
      %p239 = scmp.lt.s32.totalorder %s20, 5
      %p240 = pnand %p238, %p239
      %p241 = pneg %p240
      // Predicated region
      $region29: #{tpu_custom_call.1} parent=5 // pred_check
        _
      $region30: #{tpu_custom_call.1} parent=5 // pred_check_branch
        %243 = sbr.rel (%p240) target = $region32
      $region31: #{tpu_custom_call.1} parent=5 // pred_region
        %s244 = ssub.s32 %s20, 1
        %s245 = sand.u32 %s45, 1
        %s246 = scalar_lea.sflag [#allocation3], %s245
        %s247 = sand.u32 %s45, 1
        %s248 = smul.addr %s247, 128
        %s249 = scalar_lea.vmem [#allocation2], %s248
        // Predicated region
        $region33: #{tpu_custom_call.1} parent=31 // pred_check
          %p250 = pneg %p58
        $region34: #{tpu_custom_call.1} parent=31 // pred_check_branch
          %252 = sbr.rel (%p250) target = $region36
        $region35: #{tpu_custom_call.1} parent=31 // pred_region
          %254 = dma.done %s246, 2048
        $region36: #{tpu_custom_call.1} parent=31 // pred_fallthru
          _
        %s255 = sand.u32 %s71, 1
        %s256 = scalar_lea.sflag [#allocation6], %s255
        %s257 = sand.u32 %s71, 1
        %s258 = smul.addr %s257, 2048
        %s259 = scalar_lea.vmem [#allocation5], %s258
        // Predicated region
        $region37: #{tpu_custom_call.1} parent=31 // pred_check
          %p260 = pneg %p84
        $region38: #{tpu_custom_call.1} parent=31 // pred_check_branch
          %262 = sbr.rel (%p260) target = $region40
        $region39: #{tpu_custom_call.1} parent=31 // pred_region
          %264 = dma.done %s256, 32768
        $region40: #{tpu_custom_call.1} parent=31 // pred_fallthru
          _
        %s265 = sand.u32 %s45, 1
        %s266 = scalar_lea.sflag [#allocation3], %s265
        %s267 = sand.u32 %s45, 1
        %s268 = smul.addr %s267, 128
        %s269 = scalar_lea.vmem [#allocation2], %s268
        %p270 = pneg %p58
        %p271 = pneg %p55
        %s272 = sand.u32 %s71, 1
        %s273 = scalar_lea.sflag [#allocation6], %s272
        %s274 = sand.u32 %s71, 1
        %s275 = smul.addr %s274, 2048
        %s276 = scalar_lea.vmem [#allocation5], %s275
        %p277 = pneg %p84
        %p278 = pneg %p81
        %p279 = scmp.lt.s32.totalorder %s30, 1
        %s280 = scalar_select %p279, %s30, 1
        %s281 = smul.addr %s280, 128
        %s282 = smul.addr %s281, 4
        %s283 = scalar_lea.vmem %s2, %s282
        %p284 = pneg %p110
        %p285 = pneg %p107
        %p286 = pneg %p138
        %p287 = pneg %p135
        %s288 = sand.u32 %s125, 1
        %s289 = scalar_lea.sflag [#allocation4], %s288
        %s290 = sand.u32 %s125, 1
        %s291 = smul.addr %s290, 256
        %s292 = scalar_lea.vmem [#allocation7], %s291
        %p293 = pneg %p166
        %p294 = pneg %p163
        %s295 = smul.u32 8, %s29
        %p296 = scmp.lt.s32.totalorder %s30, 1
        %s297 = scalar_select %p296, %s30, 1
        %p298 = scmp.lt.s32.totalorder %s295, 15
        %s299 = scalar_select %p298, %s295, 15
        %s300 = smul.addr %s297, 16
        %s301 = sadd.s32 %s299, %s300
        %s302 = smul.addr %s301, 8
        %s303 = scalar_lea.vmem %s4, %s302
        %s304 = smul.u32 8, %s29
        %p305 = scmp.lt.s32.totalorder %s30, 1
        %s306 = scalar_select %p305, %s30, 1
        %s307 = smul.addr %s306, 128
        %s308 = smul.addr %s307, 4
        %s309 = scalar_lea.vmem %s2, %s308
        %s310 = smul.u32 8, %s29
        %s311 = smul.u32 8, %s29
        %p312 = scmp.lt.s32.totalorder %s30, 1
        %s313 = scalar_select %p312, %s30, 1
        %p314 = scmp.lt.s32.totalorder %s311, 15
        %s315 = scalar_select %p314, %s311, 15
        %s316 = smul.addr %s313, 16
        %s317 = sadd.s32 %s315, %s316
        %s318 = smul.addr %s317, 8
        %s319 = scalar_lea.vmem %s4, %s318
        %s320 = smul.u32 8, %s29
        %v321 = vld [vmem:[%s249] sm:$0xff]
        %v322 = vld [vmem:[%s249 + $0x8] sm:$0xff]
        %v323 = vld [vmem:[%s249 + $0x10] sm:$0xff]
        %v324 = vld [vmem:[%s249 + $0x18] sm:$0xff]
        %v325 = vld [vmem:[%s249 + $0x20] sm:$0xff]
        %v326 = vld [vmem:[%s249 + $0x28] sm:$0xff]
        %v327 = vld [vmem:[%s249 + $0x30] sm:$0xff]
        %v328 = vld [vmem:[%s249 + $0x38] sm:$0xff]
        %v329 = vld [vmem:[%s249 + $0x40] sm:$0xff]
        %v330 = vld [vmem:[%s249 + $0x48] sm:$0xff]
        %v331 = vld [vmem:[%s249 + $0x50] sm:$0xff]
        %v332 = vld [vmem:[%s249 + $0x58] sm:$0xff]
        %v333 = vld [vmem:[%s249 + $0x60] sm:$0xff]
        %v334 = vld [vmem:[%s249 + $0x68] sm:$0xff]
        %v335 = vld [vmem:[%s249 + $0x70] sm:$0xff]
        %v336 = vld [vmem:[%s249 + $0x78] sm:$0xff]
        %v337 = vld [vmem:[%s259] sm:$0xff]
        %v338 = vld [vmem:[%s259 + $0x8] sm:$0xff]
        %v339 = vld [vmem:[%s259 + $0x10] sm:$0xff]
        %v340 = vld [vmem:[%s259 + $0x18] sm:$0xff]
        %v341 = vld [vmem:[%s259 + $0x20] sm:$0xff]
        %v342 = vld [vmem:[%s259 + $0x28] sm:$0xff]
        %v343 = vld [vmem:[%s259 + $0x30] sm:$0xff]
        %v344 = vld [vmem:[%s259 + $0x38] sm:$0xff]
        %v345 = vld [vmem:[%s259 + $0x40] sm:$0xff]
        %v346 = vld [vmem:[%s259 + $0x48] sm:$0xff]
        %v347 = vld [vmem:[%s259 + $0x50] sm:$0xff]
        %v348 = vld [vmem:[%s259 + $0x58] sm:$0xff]
        %v349 = vld [vmem:[%s259 + $0x60] sm:$0xff]
        %v350 = vld [vmem:[%s259 + $0x68] sm:$0xff]
        %v351 = vld [vmem:[%s259 + $0x70] sm:$0xff]
        %v352 = vld [vmem:[%s259 + $0x78] sm:$0xff]
        %v353 = vld [vmem:[%s259 + $0x80] sm:$0xff]
        %v354 = vld [vmem:[%s259 + $0x88] sm:$0xff]
        %v355 = vld [vmem:[%s259 + $0x90] sm:$0xff]
        %v356 = vld [vmem:[%s259 + $0x98] sm:$0xff]
        %v357 = vld [vmem:[%s259 + $0xa0] sm:$0xff]
        %v358 = vld [vmem:[%s259 + $0xa8] sm:$0xff]
        %v359 = vld [vmem:[%s259 + $0xb0] sm:$0xff]
        %v360 = vld [vmem:[%s259 + $0xb8] sm:$0xff]
        %v361 = vld [vmem:[%s259 + $0xc0] sm:$0xff]
        %v362 = vld [vmem:[%s259 + $0xc8] sm:$0xff]
        %v363 = vld [vmem:[%s259 + $0xd0] sm:$0xff]
        %v364 = vld [vmem:[%s259 + $0xd8] sm:$0xff]
        %v365 = vld [vmem:[%s259 + $0xe0] sm:$0xff]
        %v366 = vld [vmem:[%s259 + $0xe8] sm:$0xff]
        %v367 = vld [vmem:[%s259 + $0xf0] sm:$0xff]
        %v368 = vld [vmem:[%s259 + $0xf8] sm:$0xff]
        %v369 = vld [vmem:[%s259 + $0x100] sm:$0xff]
        %v370 = vld [vmem:[%s259 + $0x108] sm:$0xff]
        %v371 = vld [vmem:[%s259 + $0x110] sm:$0xff]
        %v372 = vld [vmem:[%s259 + $0x118] sm:$0xff]
        %v373 = vld [vmem:[%s259 + $0x120] sm:$0xff]
        %v374 = vld [vmem:[%s259 + $0x128] sm:$0xff]
        %v375 = vld [vmem:[%s259 + $0x130] sm:$0xff]
        %v376 = vld [vmem:[%s259 + $0x138] sm:$0xff]
        %v377 = vld [vmem:[%s259 + $0x140] sm:$0xff]
        %v378 = vld [vmem:[%s259 + $0x148] sm:$0xff]
        %v379 = vld [vmem:[%s259 + $0x150] sm:$0xff]
        %v380 = vld [vmem:[%s259 + $0x158] sm:$0xff]
        %v381 = vld [vmem:[%s259 + $0x160] sm:$0xff]
        %v382 = vld [vmem:[%s259 + $0x168] sm:$0xff]
        %v383 = vld [vmem:[%s259 + $0x170] sm:$0xff]
        %v384 = vld [vmem:[%s259 + $0x178] sm:$0xff]
        %v385 = vld [vmem:[%s259 + $0x180] sm:$0xff]
        %v386 = vld [vmem:[%s259 + $0x188] sm:$0xff]
        %v387 = vld [vmem:[%s259 + $0x190] sm:$0xff]
        %v388 = vld [vmem:[%s259 + $0x198] sm:$0xff]
        %v389 = vld [vmem:[%s259 + $0x1a0] sm:$0xff]
        %v390 = vld [vmem:[%s259 + $0x1a8] sm:$0xff]
        %v391 = vld [vmem:[%s259 + $0x1b0] sm:$0xff]
        %v392 = vld [vmem:[%s259 + $0x1b8] sm:$0xff]
        %v393 = vld [vmem:[%s259 + $0x1c0] sm:$0xff]
        %v394 = vld [vmem:[%s259 + $0x1c8] sm:$0xff]
        %v395 = vld [vmem:[%s259 + $0x1d0] sm:$0xff]
        %v396 = vld [vmem:[%s259 + $0x1d8] sm:$0xff]
        %v397 = vld [vmem:[%s259 + $0x1e0] sm:$0xff]
        %v398 = vld [vmem:[%s259 + $0x1e8] sm:$0xff]
        %v399 = vld [vmem:[%s259 + $0x1f0] sm:$0xff]
        %v400 = vld [vmem:[%s259 + $0x1f8] sm:$0xff]
        %v401 = vld [vmem:[%s259 + $0x200] sm:$0xff]
        %v402 = vld [vmem:[%s259 + $0x208] sm:$0xff]
        %v403 = vld [vmem:[%s259 + $0x210] sm:$0xff]
        %v404 = vld [vmem:[%s259 + $0x218] sm:$0xff]
        %v405 = vld [vmem:[%s259 + $0x220] sm:$0xff]
        %v406 = vld [vmem:[%s259 + $0x228] sm:$0xff]
        %v407 = vld [vmem:[%s259 + $0x230] sm:$0xff]
        %v408 = vld [vmem:[%s259 + $0x238] sm:$0xff]
        %v409 = vld [vmem:[%s259 + $0x240] sm:$0xff]
        %v410 = vld [vmem:[%s259 + $0x248] sm:$0xff]
        %v411 = vld [vmem:[%s259 + $0x250] sm:$0xff]
        %v412 = vld [vmem:[%s259 + $0x258] sm:$0xff]
        %v413 = vld [vmem:[%s259 + $0x260] sm:$0xff]
        %v414 = vld [vmem:[%s259 + $0x268] sm:$0xff]
        %v415 = vld [vmem:[%s259 + $0x270] sm:$0xff]
        %v416 = vld [vmem:[%s259 + $0x278] sm:$0xff]
        %v417 = vld [vmem:[%s259 + $0x280] sm:$0xff]
        %v418 = vld [vmem:[%s259 + $0x288] sm:$0xff]
        %v419 = vld [vmem:[%s259 + $0x290] sm:$0xff]
        %v420 = vld [vmem:[%s259 + $0x298] sm:$0xff]
        %v421 = vld [vmem:[%s259 + $0x2a0] sm:$0xff]
        %v422 = vld [vmem:[%s259 + $0x2a8] sm:$0xff]
        %v423 = vld [vmem:[%s259 + $0x2b0] sm:$0xff]
        %v424 = vld [vmem:[%s259 + $0x2b8] sm:$0xff]
        %v425 = vld [vmem:[%s259 + $0x2c0] sm:$0xff]
        %v426 = vld [vmem:[%s259 + $0x2c8] sm:$0xff]
        %v427 = vld [vmem:[%s259 + $0x2d0] sm:$0xff]
        %v428 = vld [vmem:[%s259 + $0x2d8] sm:$0xff]
        %v429 = vld [vmem:[%s259 + $0x2e0] sm:$0xff]
        %v430 = vld [vmem:[%s259 + $0x2e8] sm:$0xff]
        %v431 = vld [vmem:[%s259 + $0x2f0] sm:$0xff]
        %v432 = vld [vmem:[%s259 + $0x2f8] sm:$0xff]
        %v433 = vld [vmem:[%s259 + $0x300] sm:$0xff]
        %v434 = vld [vmem:[%s259 + $0x308] sm:$0xff]
        %v435 = vld [vmem:[%s259 + $0x310] sm:$0xff]
        %v436 = vld [vmem:[%s259 + $0x318] sm:$0xff]
        %v437 = vld [vmem:[%s259 + $0x320] sm:$0xff]
        %v438 = vld [vmem:[%s259 + $0x328] sm:$0xff]
        %v439 = vld [vmem:[%s259 + $0x330] sm:$0xff]
        %v440 = vld [vmem:[%s259 + $0x338] sm:$0xff]
        %v441 = vld [vmem:[%s259 + $0x340] sm:$0xff]
        %v442 = vld [vmem:[%s259 + $0x348] sm:$0xff]
        %v443 = vld [vmem:[%s259 + $0x350] sm:$0xff]
        %v444 = vld [vmem:[%s259 + $0x358] sm:$0xff]
        %v445 = vld [vmem:[%s259 + $0x360] sm:$0xff]
        %v446 = vld [vmem:[%s259 + $0x368] sm:$0xff]
        %v447 = vld [vmem:[%s259 + $0x370] sm:$0xff]
        %v448 = vld [vmem:[%s259 + $0x378] sm:$0xff]
        %v449 = vld [vmem:[%s259 + $0x380] sm:$0xff]
        %v450 = vld [vmem:[%s259 + $0x388] sm:$0xff]
        %v451 = vld [vmem:[%s259 + $0x390] sm:$0xff]
        %v452 = vld [vmem:[%s259 + $0x398] sm:$0xff]
        %v453 = vld [vmem:[%s259 + $0x3a0] sm:$0xff]
        %v454 = vld [vmem:[%s259 + $0x3a8] sm:$0xff]
        %v455 = vld [vmem:[%s259 + $0x3b0] sm:$0xff]
        %v456 = vld [vmem:[%s259 + $0x3b8] sm:$0xff]
        %v457 = vld [vmem:[%s259 + $0x3c0] sm:$0xff]
        %v458 = vld [vmem:[%s259 + $0x3c8] sm:$0xff]
        %v459 = vld [vmem:[%s259 + $0x3d0] sm:$0xff]
        %v460 = vld [vmem:[%s259 + $0x3d8] sm:$0xff]
        %v461 = vld [vmem:[%s259 + $0x3e0] sm:$0xff]
        %v462 = vld [vmem:[%s259 + $0x3e8] sm:$0xff]
        %v463 = vld [vmem:[%s259 + $0x3f0] sm:$0xff]
        %v464 = vld [vmem:[%s259 + $0x3f8] sm:$0xff]
        %v465 = vld [vmem:[%s259 + $0x400] sm:$0xff]
        %v466 = vld [vmem:[%s259 + $0x408] sm:$0xff]
        %v467 = vld [vmem:[%s259 + $0x410] sm:$0xff]
        %v468 = vld [vmem:[%s259 + $0x418] sm:$0xff]
        %v469 = vld [vmem:[%s259 + $0x420] sm:$0xff]
        %v470 = vld [vmem:[%s259 + $0x428] sm:$0xff]
        %v471 = vld [vmem:[%s259 + $0x430] sm:$0xff]
        %v472 = vld [vmem:[%s259 + $0x438] sm:$0xff]
        %v473 = vld [vmem:[%s259 + $0x440] sm:$0xff]
        %v474 = vld [vmem:[%s259 + $0x448] sm:$0xff]
        %v475 = vld [vmem:[%s259 + $0x450] sm:$0xff]
        %v476 = vld [vmem:[%s259 + $0x458] sm:$0xff]
        %v477 = vld [vmem:[%s259 + $0x460] sm:$0xff]
        %v478 = vld [vmem:[%s259 + $0x468] sm:$0xff]
        %v479 = vld [vmem:[%s259 + $0x470] sm:$0xff]
        %v480 = vld [vmem:[%s259 + $0x478] sm:$0xff]
        %v481 = vld [vmem:[%s259 + $0x480] sm:$0xff]
        %v482 = vld [vmem:[%s259 + $0x488] sm:$0xff]
        %v483 = vld [vmem:[%s259 + $0x490] sm:$0xff]
        %v484 = vld [vmem:[%s259 + $0x498] sm:$0xff]
        %v485 = vld [vmem:[%s259 + $0x4a0] sm:$0xff]
        %v486 = vld [vmem:[%s259 + $0x4a8] sm:$0xff]
        %v487 = vld [vmem:[%s259 + $0x4b0] sm:$0xff]
        %v488 = vld [vmem:[%s259 + $0x4b8] sm:$0xff]
        %v489 = vld [vmem:[%s259 + $0x4c0] sm:$0xff]
        %v490 = vld [vmem:[%s259 + $0x4c8] sm:$0xff]
        %v491 = vld [vmem:[%s259 + $0x4d0] sm:$0xff]
        %v492 = vld [vmem:[%s259 + $0x4d8] sm:$0xff]
        %v493 = vld [vmem:[%s259 + $0x4e0] sm:$0xff]
        %v494 = vld [vmem:[%s259 + $0x4e8] sm:$0xff]
        %v495 = vld [vmem:[%s259 + $0x4f0] sm:$0xff]
        %v496 = vld [vmem:[%s259 + $0x4f8] sm:$0xff]
        %v497 = vld [vmem:[%s259 + $0x500] sm:$0xff]
        %v498 = vld [vmem:[%s259 + $0x508] sm:$0xff]
        %v499 = vld [vmem:[%s259 + $0x510] sm:$0xff]
        %v500 = vld [vmem:[%s259 + $0x518] sm:$0xff]
        %v501 = vld [vmem:[%s259 + $0x520] sm:$0xff]
        %v502 = vld [vmem:[%s259 + $0x528] sm:$0xff]
        %v503 = vld [vmem:[%s259 + $0x530] sm:$0xff]
        %v504 = vld [vmem:[%s259 + $0x538] sm:$0xff]
        %v505 = vld [vmem:[%s259 + $0x540] sm:$0xff]
        %v506 = vld [vmem:[%s259 + $0x548] sm:$0xff]
        %v507 = vld [vmem:[%s259 + $0x550] sm:$0xff]
        %v508 = vld [vmem:[%s259 + $0x558] sm:$0xff]
        %v509 = vld [vmem:[%s259 + $0x560] sm:$0xff]
        %v510 = vld [vmem:[%s259 + $0x568] sm:$0xff]
        %v511 = vld [vmem:[%s259 + $0x570] sm:$0xff]
        %v512 = vld [vmem:[%s259 + $0x578] sm:$0xff]
        %v513 = vld [vmem:[%s259 + $0x580] sm:$0xff]
        %v514 = vld [vmem:[%s259 + $0x588] sm:$0xff]
        %v515 = vld [vmem:[%s259 + $0x590] sm:$0xff]
        %v516 = vld [vmem:[%s259 + $0x598] sm:$0xff]
        %v517 = vld [vmem:[%s259 + $0x5a0] sm:$0xff]
        %v518 = vld [vmem:[%s259 + $0x5a8] sm:$0xff]
        %v519 = vld [vmem:[%s259 + $0x5b0] sm:$0xff]
        %v520 = vld [vmem:[%s259 + $0x5b8] sm:$0xff]
        %v521 = vld [vmem:[%s259 + $0x5c0] sm:$0xff]
        %v522 = vld [vmem:[%s259 + $0x5c8] sm:$0xff]
        %v523 = vld [vmem:[%s259 + $0x5d0] sm:$0xff]
        %v524 = vld [vmem:[%s259 + $0x5d8] sm:$0xff]
        %v525 = vld [vmem:[%s259 + $0x5e0] sm:$0xff]
        %v526 = vld [vmem:[%s259 + $0x5e8] sm:$0xff]
        %v527 = vld [vmem:[%s259 + $0x5f0] sm:$0xff]
        %v528 = vld [vmem:[%s259 + $0x5f8] sm:$0xff]
        %v529 = vld [vmem:[%s259 + $0x600] sm:$0xff]
        %v530 = vld [vmem:[%s259 + $0x608] sm:$0xff]
        %v531 = vld [vmem:[%s259 + $0x610] sm:$0xff]
        %v532 = vld [vmem:[%s259 + $0x618] sm:$0xff]
        %v533 = vld [vmem:[%s259 + $0x620] sm:$0xff]
        %v534 = vld [vmem:[%s259 + $0x628] sm:$0xff]
        %v535 = vld [vmem:[%s259 + $0x630] sm:$0xff]
        %v536 = vld [vmem:[%s259 + $0x638] sm:$0xff]
        %v537 = vld [vmem:[%s259 + $0x640] sm:$0xff]
        %v538 = vld [vmem:[%s259 + $0x648] sm:$0xff]
        %v539 = vld [vmem:[%s259 + $0x650] sm:$0xff]
        %v540 = vld [vmem:[%s259 + $0x658] sm:$0xff]
        %v541 = vld [vmem:[%s259 + $0x660] sm:$0xff]
        %v542 = vld [vmem:[%s259 + $0x668] sm:$0xff]
        %v543 = vld [vmem:[%s259 + $0x670] sm:$0xff]
        %v544 = vld [vmem:[%s259 + $0x678] sm:$0xff]
        %v545 = vld [vmem:[%s259 + $0x680] sm:$0xff]
        %v546 = vld [vmem:[%s259 + $0x688] sm:$0xff]
        %v547 = vld [vmem:[%s259 + $0x690] sm:$0xff]
        %v548 = vld [vmem:[%s259 + $0x698] sm:$0xff]
        %v549 = vld [vmem:[%s259 + $0x6a0] sm:$0xff]
        %v550 = vld [vmem:[%s259 + $0x6a8] sm:$0xff]
        %v551 = vld [vmem:[%s259 + $0x6b0] sm:$0xff]
        %v552 = vld [vmem:[%s259 + $0x6b8] sm:$0xff]
        %v553 = vld [vmem:[%s259 + $0x6c0] sm:$0xff]
        %v554 = vld [vmem:[%s259 + $0x6c8] sm:$0xff]
        %v555 = vld [vmem:[%s259 + $0x6d0] sm:$0xff]
        %v556 = vld [vmem:[%s259 + $0x6d8] sm:$0xff]
        %v557 = vld [vmem:[%s259 + $0x6e0] sm:$0xff]
        %v558 = vld [vmem:[%s259 + $0x6e8] sm:$0xff]
        %v559 = vld [vmem:[%s259 + $0x6f0] sm:$0xff]
        %v560 = vld [vmem:[%s259 + $0x6f8] sm:$0xff]
        %v561 = vld [vmem:[%s259 + $0x700] sm:$0xff]
        %v562 = vld [vmem:[%s259 + $0x708] sm:$0xff]
        %v563 = vld [vmem:[%s259 + $0x710] sm:$0xff]
        %v564 = vld [vmem:[%s259 + $0x718] sm:$0xff]
        %v565 = vld [vmem:[%s259 + $0x720] sm:$0xff]
        %v566 = vld [vmem:[%s259 + $0x728] sm:$0xff]
        %v567 = vld [vmem:[%s259 + $0x730] sm:$0xff]
        %v568 = vld [vmem:[%s259 + $0x738] sm:$0xff]
        %v569 = vld [vmem:[%s259 + $0x740] sm:$0xff]
        %v570 = vld [vmem:[%s259 + $0x748] sm:$0xff]
        %v571 = vld [vmem:[%s259 + $0x750] sm:$0xff]
        %v572 = vld [vmem:[%s259 + $0x758] sm:$0xff]
        %v573 = vld [vmem:[%s259 + $0x760] sm:$0xff]
        %v574 = vld [vmem:[%s259 + $0x768] sm:$0xff]
        %v575 = vld [vmem:[%s259 + $0x770] sm:$0xff]
        %v576 = vld [vmem:[%s259 + $0x778] sm:$0xff]
        %v577 = vld [vmem:[%s259 + $0x780] sm:$0xff]
        %v578 = vld [vmem:[%s259 + $0x788] sm:$0xff]
        %v579 = vld [vmem:[%s259 + $0x790] sm:$0xff]
        %v580 = vld [vmem:[%s259 + $0x798] sm:$0xff]
        %v581 = vld [vmem:[%s259 + $0x7a0] sm:$0xff]
        %v582 = vld [vmem:[%s259 + $0x7a8] sm:$0xff]
        %v583 = vld [vmem:[%s259 + $0x7b0] sm:$0xff]
        %v584 = vld [vmem:[%s259 + $0x7b8] sm:$0xff]
        %v585 = vld [vmem:[%s259 + $0x7c0] sm:$0xff]
        %v586 = vld [vmem:[%s259 + $0x7c8] sm:$0xff]
        %v587 = vld [vmem:[%s259 + $0x7d0] sm:$0xff]
        %v588 = vld [vmem:[%s259 + $0x7d8] sm:$0xff]
        %v589 = vld [vmem:[%s259 + $0x7e0] sm:$0xff]
        %v590 = vld [vmem:[%s259 + $0x7e8] sm:$0xff]
        %v591 = vld [vmem:[%s259 + $0x7f0] sm:$0xff]
        %v592 = vld [vmem:[%s259 + $0x7f8] sm:$0xff]
        %v609 = vunpack.c.l.b16 %v321
        %v610 = vunpack.c.h.b16 %v321
        %v611 = vunpack.c.l.b16 %v322
        %v612 = vunpack.c.h.b16 %v322
        %v613 = vunpack.c.l.b16 %v323
        %v614 = vunpack.c.h.b16 %v323
        %v615 = vunpack.c.l.b16 %v324
        %v616 = vunpack.c.h.b16 %v324
        %v617 = vunpack.c.l.b16 %v325
        %v618 = vunpack.c.h.b16 %v325
        %v619 = vunpack.c.l.b16 %v326
        %v620 = vunpack.c.h.b16 %v326
        %v621 = vunpack.c.l.b16 %v327
        %v622 = vunpack.c.h.b16 %v327
        %v623 = vunpack.c.l.b16 %v328
        %v624 = vunpack.c.h.b16 %v328
        %v625 = vunpack.c.l.b16 %v329
        %v626 = vunpack.c.h.b16 %v329
        %v627 = vunpack.c.l.b16 %v330
        %v628 = vunpack.c.h.b16 %v330
        %v629 = vunpack.c.l.b16 %v331
        %v630 = vunpack.c.h.b16 %v331
        %v631 = vunpack.c.l.b16 %v332
        %v632 = vunpack.c.h.b16 %v332
        %v633 = vunpack.c.l.b16 %v333
        %v634 = vunpack.c.h.b16 %v333
        %v635 = vunpack.c.l.b16 %v334
        %v636 = vunpack.c.h.b16 %v334
        %v637 = vunpack.c.l.b16 %v335
        %v638 = vunpack.c.h.b16 %v335
        %v639 = vunpack.c.l.b16 %v336
        %v640 = vunpack.c.h.b16 %v336
        %v641 = vpack.c.b16 %v613, %v609
        %v642 = vpack.c.b16 %v614, %v610
        %v643 = vpack.c.b16 %v615, %v611
        %v644 = vpack.c.b16 %v616, %v612
        %v645 = vpack.c.b16 %v621, %v617
        %v646 = vpack.c.b16 %v622, %v618
        %v647 = vpack.c.b16 %v623, %v619
        %v648 = vpack.c.b16 %v624, %v620
        %v649 = vpack.c.b16 %v629, %v625
        %v650 = vpack.c.b16 %v630, %v626
        %v651 = vpack.c.b16 %v631, %v627
        %v652 = vpack.c.b16 %v632, %v628
        %v653 = vpack.c.b16 %v637, %v633
        %v654 = vpack.c.b16 %v638, %v634
        %v655 = vpack.c.b16 %v639, %v635
        %v656 = vpack.c.b16 %v640, %v636
        %v929 = vunpack.c.l.b16 %v337
        %v930 = vunpack.c.h.b16 %v337
        %v931 = vunpack.c.l.b16 %v338
        %v932 = vunpack.c.h.b16 %v338
        %v933 = vunpack.c.l.b16 %v339
        %v934 = vunpack.c.h.b16 %v339
        %v935 = vunpack.c.l.b16 %v340
        %v936 = vunpack.c.h.b16 %v340
        %v937 = vunpack.c.l.b16 %v341
        %v938 = vunpack.c.h.b16 %v341
        %v939 = vunpack.c.l.b16 %v342
        %v940 = vunpack.c.h.b16 %v342
        %v941 = vunpack.c.l.b16 %v343
        %v942 = vunpack.c.h.b16 %v343
        %v943 = vunpack.c.l.b16 %v344
        %v944 = vunpack.c.h.b16 %v344
        %v945 = vunpack.c.l.b16 %v345
        %v946 = vunpack.c.h.b16 %v345
        %v947 = vunpack.c.l.b16 %v346
        %v948 = vunpack.c.h.b16 %v346
        %v949 = vunpack.c.l.b16 %v347
        %v950 = vunpack.c.h.b16 %v347
        %v951 = vunpack.c.l.b16 %v348
        %v952 = vunpack.c.h.b16 %v348
        %v953 = vunpack.c.l.b16 %v349
        %v954 = vunpack.c.h.b16 %v349
        %v955 = vunpack.c.l.b16 %v350
        %v956 = vunpack.c.h.b16 %v350
        %v957 = vunpack.c.l.b16 %v351
        %v958 = vunpack.c.h.b16 %v351
        %v959 = vunpack.c.l.b16 %v352
        %v960 = vunpack.c.h.b16 %v352
        %v961 = vunpack.c.l.b16 %v353
        %v962 = vunpack.c.h.b16 %v353
        %v963 = vunpack.c.l.b16 %v354
        %v964 = vunpack.c.h.b16 %v354
        %v965 = vunpack.c.l.b16 %v355
        %v966 = vunpack.c.h.b16 %v355
        %v967 = vunpack.c.l.b16 %v356
        %v968 = vunpack.c.h.b16 %v356
        %v969 = vunpack.c.l.b16 %v357
        %v970 = vunpack.c.h.b16 %v357
        %v971 = vunpack.c.l.b16 %v358
        %v972 = vunpack.c.h.b16 %v358
        %v973 = vunpack.c.l.b16 %v359
        %v974 = vunpack.c.h.b16 %v359
        %v975 = vunpack.c.l.b16 %v360
        %v976 = vunpack.c.h.b16 %v360
        %v977 = vunpack.c.l.b16 %v361
        %v978 = vunpack.c.h.b16 %v361
        %v979 = vunpack.c.l.b16 %v362
        %v980 = vunpack.c.h.b16 %v362
        %v981 = vunpack.c.l.b16 %v363
        %v982 = vunpack.c.h.b16 %v363
        %v983 = vunpack.c.l.b16 %v364
        %v984 = vunpack.c.h.b16 %v364
        %v985 = vunpack.c.l.b16 %v365
        %v986 = vunpack.c.h.b16 %v365
        %v987 = vunpack.c.l.b16 %v366
        %v988 = vunpack.c.h.b16 %v366
        %v989 = vunpack.c.l.b16 %v367
        %v990 = vunpack.c.h.b16 %v367
        %v991 = vunpack.c.l.b16 %v368
        %v992 = vunpack.c.h.b16 %v368
        %v993 = vunpack.c.l.b16 %v369
        %v994 = vunpack.c.h.b16 %v369
        %v995 = vunpack.c.l.b16 %v370
        %v996 = vunpack.c.h.b16 %v370
        %v997 = vunpack.c.l.b16 %v371
        %v998 = vunpack.c.h.b16 %v371
        %v999 = vunpack.c.l.b16 %v372
        %v1000 = vunpack.c.h.b16 %v372
        %v1001 = vunpack.c.l.b16 %v373
        %v1002 = vunpack.c.h.b16 %v373
        %v1003 = vunpack.c.l.b16 %v374
        %v1004 = vunpack.c.h.b16 %v374
        %v1005 = vunpack.c.l.b16 %v375
        %v1006 = vunpack.c.h.b16 %v375
        %v1007 = vunpack.c.l.b16 %v376
        %v1008 = vunpack.c.h.b16 %v376
        %v1009 = vunpack.c.l.b16 %v377
        %v1010 = vunpack.c.h.b16 %v377
        %v1011 = vunpack.c.l.b16 %v378
        %v1012 = vunpack.c.h.b16 %v378
        %v1013 = vunpack.c.l.b16 %v379
        %v1014 = vunpack.c.h.b16 %v379
        %v1015 = vunpack.c.l.b16 %v380
        %v1016 = vunpack.c.h.b16 %v380
        %v1017 = vunpack.c.l.b16 %v381
        %v1018 = vunpack.c.h.b16 %v381
        %v1019 = vunpack.c.l.b16 %v382
        %v1020 = vunpack.c.h.b16 %v382
        %v1021 = vunpack.c.l.b16 %v383
        %v1022 = vunpack.c.h.b16 %v383
        %v1023 = vunpack.c.l.b16 %v384
        %v1024 = vunpack.c.h.b16 %v384
        %v1025 = vunpack.c.l.b16 %v385
        %v1026 = vunpack.c.h.b16 %v385
        %v1027 = vunpack.c.l.b16 %v386
        %v1028 = vunpack.c.h.b16 %v386
        %v1029 = vunpack.c.l.b16 %v387
        %v1030 = vunpack.c.h.b16 %v387
        %v1031 = vunpack.c.l.b16 %v388
        %v1032 = vunpack.c.h.b16 %v388
        %v1033 = vunpack.c.l.b16 %v389
        %v1034 = vunpack.c.h.b16 %v389
        %v1035 = vunpack.c.l.b16 %v390
        %v1036 = vunpack.c.h.b16 %v390
        %v1037 = vunpack.c.l.b16 %v391
        %v1038 = vunpack.c.h.b16 %v391
        %v1039 = vunpack.c.l.b16 %v392
        %v1040 = vunpack.c.h.b16 %v392
        %v1041 = vunpack.c.l.b16 %v393
        %v1042 = vunpack.c.h.b16 %v393
        %v1043 = vunpack.c.l.b16 %v394
        %v1044 = vunpack.c.h.b16 %v394
        %v1045 = vunpack.c.l.b16 %v395
        %v1046 = vunpack.c.h.b16 %v395
        %v1047 = vunpack.c.l.b16 %v396
        %v1048 = vunpack.c.h.b16 %v396
        %v1049 = vunpack.c.l.b16 %v397
        %v1050 = vunpack.c.h.b16 %v397
        %v1051 = vunpack.c.l.b16 %v398
        %v1052 = vunpack.c.h.b16 %v398
        %v1053 = vunpack.c.l.b16 %v399
        %v1054 = vunpack.c.h.b16 %v399
        %v1055 = vunpack.c.l.b16 %v400
        %v1056 = vunpack.c.h.b16 %v400
        %v1057 = vunpack.c.l.b16 %v401
        %v1058 = vunpack.c.h.b16 %v401
        %v1059 = vunpack.c.l.b16 %v402
        %v1060 = vunpack.c.h.b16 %v402
        %v1061 = vunpack.c.l.b16 %v403
        %v1062 = vunpack.c.h.b16 %v403
        %v1063 = vunpack.c.l.b16 %v404
        %v1064 = vunpack.c.h.b16 %v404
        %v1065 = vunpack.c.l.b16 %v405
        %v1066 = vunpack.c.h.b16 %v405
        %v1067 = vunpack.c.l.b16 %v406
        %v1068 = vunpack.c.h.b16 %v406
        %v1069 = vunpack.c.l.b16 %v407
        %v1070 = vunpack.c.h.b16 %v407
        %v1071 = vunpack.c.l.b16 %v408
        %v1072 = vunpack.c.h.b16 %v408
        %v1073 = vunpack.c.l.b16 %v409
        %v1074 = vunpack.c.h.b16 %v409
        %v1075 = vunpack.c.l.b16 %v410
        %v1076 = vunpack.c.h.b16 %v410
        %v1077 = vunpack.c.l.b16 %v411
        %v1078 = vunpack.c.h.b16 %v411
        %v1079 = vunpack.c.l.b16 %v412
        %v1080 = vunpack.c.h.b16 %v412
        %v1081 = vunpack.c.l.b16 %v413
        %v1082 = vunpack.c.h.b16 %v413
        %v1083 = vunpack.c.l.b16 %v414
        %v1084 = vunpack.c.h.b16 %v414
        %v1085 = vunpack.c.l.b16 %v415
        %v1086 = vunpack.c.h.b16 %v415
        %v1087 = vunpack.c.l.b16 %v416
        %v1088 = vunpack.c.h.b16 %v416
        %v1089 = vunpack.c.l.b16 %v417
        %v1090 = vunpack.c.h.b16 %v417
        %v1091 = vunpack.c.l.b16 %v418
        %v1092 = vunpack.c.h.b16 %v418
        %v1093 = vunpack.c.l.b16 %v419
        %v1094 = vunpack.c.h.b16 %v419
        %v1095 = vunpack.c.l.b16 %v420
        %v1096 = vunpack.c.h.b16 %v420
        %v1097 = vunpack.c.l.b16 %v421
        %v1098 = vunpack.c.h.b16 %v421
        %v1099 = vunpack.c.l.b16 %v422
        %v1100 = vunpack.c.h.b16 %v422
        %v1101 = vunpack.c.l.b16 %v423
        %v1102 = vunpack.c.h.b16 %v423
        %v1103 = vunpack.c.l.b16 %v424
        %v1104 = vunpack.c.h.b16 %v424
        %v1105 = vunpack.c.l.b16 %v425
        %v1106 = vunpack.c.h.b16 %v425
        %v1107 = vunpack.c.l.b16 %v426
        %v1108 = vunpack.c.h.b16 %v426
        %v1109 = vunpack.c.l.b16 %v427
        %v1110 = vunpack.c.h.b16 %v427
        %v1111 = vunpack.c.l.b16 %v428
        %v1112 = vunpack.c.h.b16 %v428
        %v1113 = vunpack.c.l.b16 %v429
        %v1114 = vunpack.c.h.b16 %v429
        %v1115 = vunpack.c.l.b16 %v430
        %v1116 = vunpack.c.h.b16 %v430
        %v1117 = vunpack.c.l.b16 %v431
        %v1118 = vunpack.c.h.b16 %v431
        %v1119 = vunpack.c.l.b16 %v432
        %v1120 = vunpack.c.h.b16 %v432
        %v1121 = vunpack.c.l.b16 %v433
        %v1122 = vunpack.c.h.b16 %v433
        %v1123 = vunpack.c.l.b16 %v434
        %v1124 = vunpack.c.h.b16 %v434
        %v1125 = vunpack.c.l.b16 %v435
        %v1126 = vunpack.c.h.b16 %v435
        %v1127 = vunpack.c.l.b16 %v436
        %v1128 = vunpack.c.h.b16 %v436
        %v1129 = vunpack.c.l.b16 %v437
        %v1130 = vunpack.c.h.b16 %v437
        %v1131 = vunpack.c.l.b16 %v438
        %v1132 = vunpack.c.h.b16 %v438
        %v1133 = vunpack.c.l.b16 %v439
        %v1134 = vunpack.c.h.b16 %v439
        %v1135 = vunpack.c.l.b16 %v440
        %v1136 = vunpack.c.h.b16 %v440
        %v1137 = vunpack.c.l.b16 %v441
        %v1138 = vunpack.c.h.b16 %v441
        %v1139 = vunpack.c.l.b16 %v442
        %v1140 = vunpack.c.h.b16 %v442
        %v1141 = vunpack.c.l.b16 %v443
        %v1142 = vunpack.c.h.b16 %v443
        %v1143 = vunpack.c.l.b16 %v444
        %v1144 = vunpack.c.h.b16 %v444
        %v1145 = vunpack.c.l.b16 %v445
        %v1146 = vunpack.c.h.b16 %v445
        %v1147 = vunpack.c.l.b16 %v446
        %v1148 = vunpack.c.h.b16 %v446
        %v1149 = vunpack.c.l.b16 %v447
        %v1150 = vunpack.c.h.b16 %v447
        %v1151 = vunpack.c.l.b16 %v448
        %v1152 = vunpack.c.h.b16 %v448
        %v1153 = vunpack.c.l.b16 %v449
        %v1154 = vunpack.c.h.b16 %v449
        %v1155 = vunpack.c.l.b16 %v450
        %v1156 = vunpack.c.h.b16 %v450
        %v1157 = vunpack.c.l.b16 %v451
        %v1158 = vunpack.c.h.b16 %v451
        %v1159 = vunpack.c.l.b16 %v452
        %v1160 = vunpack.c.h.b16 %v452
        %v1161 = vunpack.c.l.b16 %v453
        %v1162 = vunpack.c.h.b16 %v453
        %v1163 = vunpack.c.l.b16 %v454
        %v1164 = vunpack.c.h.b16 %v454
        %v1165 = vunpack.c.l.b16 %v455
        %v1166 = vunpack.c.h.b16 %v455
        %v1167 = vunpack.c.l.b16 %v456
        %v1168 = vunpack.c.h.b16 %v456
        %v1169 = vunpack.c.l.b16 %v457
        %v1170 = vunpack.c.h.b16 %v457
        %v1171 = vunpack.c.l.b16 %v458
        %v1172 = vunpack.c.h.b16 %v458
        %v1173 = vunpack.c.l.b16 %v459
        %v1174 = vunpack.c.h.b16 %v459
        %v1175 = vunpack.c.l.b16 %v460
        %v1176 = vunpack.c.h.b16 %v460
        %v1177 = vunpack.c.l.b16 %v461
        %v1178 = vunpack.c.h.b16 %v461
        %v1179 = vunpack.c.l.b16 %v462
        %v1180 = vunpack.c.h.b16 %v462
        %v1181 = vunpack.c.l.b16 %v463
        %v1182 = vunpack.c.h.b16 %v463
        %v1183 = vunpack.c.l.b16 %v464
        %v1184 = vunpack.c.h.b16 %v464
        %v1185 = vunpack.c.l.b16 %v465
        %v1186 = vunpack.c.h.b16 %v465
        %v1187 = vunpack.c.l.b16 %v466
        %v1188 = vunpack.c.h.b16 %v466
        %v1189 = vunpack.c.l.b16 %v467
        %v1190 = vunpack.c.h.b16 %v467
        %v1191 = vunpack.c.l.b16 %v468
        %v1192 = vunpack.c.h.b16 %v468
        %v1193 = vunpack.c.l.b16 %v469
        %v1194 = vunpack.c.h.b16 %v469
        %v1195 = vunpack.c.l.b16 %v470
        %v1196 = vunpack.c.h.b16 %v470
        %v1197 = vunpack.c.l.b16 %v471
        %v1198 = vunpack.c.h.b16 %v471
        %v1199 = vunpack.c.l.b16 %v472
        %v1200 = vunpack.c.h.b16 %v472
        %v1201 = vunpack.c.l.b16 %v473
        %v1202 = vunpack.c.h.b16 %v473
        %v1203 = vunpack.c.l.b16 %v474
        %v1204 = vunpack.c.h.b16 %v474
        %v1205 = vunpack.c.l.b16 %v475
        %v1206 = vunpack.c.h.b16 %v475
        %v1207 = vunpack.c.l.b16 %v476
        %v1208 = vunpack.c.h.b16 %v476
        %v1209 = vunpack.c.l.b16 %v477
        %v1210 = vunpack.c.h.b16 %v477
        %v1211 = vunpack.c.l.b16 %v478
        %v1212 = vunpack.c.h.b16 %v478
        %v1213 = vunpack.c.l.b16 %v479
        %v1214 = vunpack.c.h.b16 %v479
        %v1215 = vunpack.c.l.b16 %v480
        %v1216 = vunpack.c.h.b16 %v480
        %v1217 = vunpack.c.l.b16 %v481
        %v1218 = vunpack.c.h.b16 %v481
        %v1219 = vunpack.c.l.b16 %v482
        %v1220 = vunpack.c.h.b16 %v482
        %v1221 = vunpack.c.l.b16 %v483
        %v1222 = vunpack.c.h.b16 %v483
        %v1223 = vunpack.c.l.b16 %v484
        %v1224 = vunpack.c.h.b16 %v484
        %v1225 = vunpack.c.l.b16 %v485
        %v1226 = vunpack.c.h.b16 %v485
        %v1227 = vunpack.c.l.b16 %v486
        %v1228 = vunpack.c.h.b16 %v486
        %v1229 = vunpack.c.l.b16 %v487
        %v1230 = vunpack.c.h.b16 %v487
        %v1231 = vunpack.c.l.b16 %v488
        %v1232 = vunpack.c.h.b16 %v488
        %v1233 = vunpack.c.l.b16 %v489
        %v1234 = vunpack.c.h.b16 %v489
        %v1235 = vunpack.c.l.b16 %v490
        %v1236 = vunpack.c.h.b16 %v490
        %v1237 = vunpack.c.l.b16 %v491
        %v1238 = vunpack.c.h.b16 %v491
        %v1239 = vunpack.c.l.b16 %v492
        %v1240 = vunpack.c.h.b16 %v492
        %v1241 = vunpack.c.l.b16 %v493
        %v1242 = vunpack.c.h.b16 %v493
        %v1243 = vunpack.c.l.b16 %v494
        %v1244 = vunpack.c.h.b16 %v494
        %v1245 = vunpack.c.l.b16 %v495
        %v1246 = vunpack.c.h.b16 %v495
        %v1247 = vunpack.c.l.b16 %v496
        %v1248 = vunpack.c.h.b16 %v496
        %v1249 = vunpack.c.l.b16 %v497
        %v1250 = vunpack.c.h.b16 %v497
        %v1251 = vunpack.c.l.b16 %v498
        %v1252 = vunpack.c.h.b16 %v498
        %v1253 = vunpack.c.l.b16 %v499
        %v1254 = vunpack.c.h.b16 %v499
        %v1255 = vunpack.c.l.b16 %v500
        %v1256 = vunpack.c.h.b16 %v500
        %v1257 = vunpack.c.l.b16 %v501
        %v1258 = vunpack.c.h.b16 %v501
        %v1259 = vunpack.c.l.b16 %v502
        %v1260 = vunpack.c.h.b16 %v502
        %v1261 = vunpack.c.l.b16 %v503
        %v1262 = vunpack.c.h.b16 %v503
        %v1263 = vunpack.c.l.b16 %v504
        %v1264 = vunpack.c.h.b16 %v504
        %v1265 = vunpack.c.l.b16 %v505
        %v1266 = vunpack.c.h.b16 %v505
        %v1267 = vunpack.c.l.b16 %v506
        %v1268 = vunpack.c.h.b16 %v506
        %v1269 = vunpack.c.l.b16 %v507
        %v1270 = vunpack.c.h.b16 %v507
        %v1271 = vunpack.c.l.b16 %v508
        %v1272 = vunpack.c.h.b16 %v508
        %v1273 = vunpack.c.l.b16 %v509
        %v1274 = vunpack.c.h.b16 %v509
        %v1275 = vunpack.c.l.b16 %v510
        %v1276 = vunpack.c.h.b16 %v510
        %v1277 = vunpack.c.l.b16 %v511
        %v1278 = vunpack.c.h.b16 %v511
        %v1279 = vunpack.c.l.b16 %v512
        %v1280 = vunpack.c.h.b16 %v512
        %v1281 = vunpack.c.l.b16 %v513
        %v1282 = vunpack.c.h.b16 %v513
        %v1283 = vunpack.c.l.b16 %v514
        %v1284 = vunpack.c.h.b16 %v514
        %v1285 = vunpack.c.l.b16 %v515
        %v1286 = vunpack.c.h.b16 %v515
        %v1287 = vunpack.c.l.b16 %v516
        %v1288 = vunpack.c.h.b16 %v516
        %v1289 = vunpack.c.l.b16 %v517
        %v1290 = vunpack.c.h.b16 %v517
        %v1291 = vunpack.c.l.b16 %v518
        %v1292 = vunpack.c.h.b16 %v518
        %v1293 = vunpack.c.l.b16 %v519
        %v1294 = vunpack.c.h.b16 %v519
        %v1295 = vunpack.c.l.b16 %v520
        %v1296 = vunpack.c.h.b16 %v520
        %v1297 = vunpack.c.l.b16 %v521
        %v1298 = vunpack.c.h.b16 %v521
        %v1299 = vunpack.c.l.b16 %v522
        %v1300 = vunpack.c.h.b16 %v522
        %v1301 = vunpack.c.l.b16 %v523
        %v1302 = vunpack.c.h.b16 %v523
        %v1303 = vunpack.c.l.b16 %v524
        %v1304 = vunpack.c.h.b16 %v524
        %v1305 = vunpack.c.l.b16 %v525
        %v1306 = vunpack.c.h.b16 %v525
        %v1307 = vunpack.c.l.b16 %v526
        %v1308 = vunpack.c.h.b16 %v526
        %v1309 = vunpack.c.l.b16 %v527
        %v1310 = vunpack.c.h.b16 %v527
        %v1311 = vunpack.c.l.b16 %v528
        %v1312 = vunpack.c.h.b16 %v528
        %v1313 = vunpack.c.l.b16 %v529
        %v1314 = vunpack.c.h.b16 %v529
        %v1315 = vunpack.c.l.b16 %v530
        %v1316 = vunpack.c.h.b16 %v530
        %v1317 = vunpack.c.l.b16 %v531
        %v1318 = vunpack.c.h.b16 %v531
        %v1319 = vunpack.c.l.b16 %v532
        %v1320 = vunpack.c.h.b16 %v532
        %v1321 = vunpack.c.l.b16 %v533
        %v1322 = vunpack.c.h.b16 %v533
        %v1323 = vunpack.c.l.b16 %v534
        %v1324 = vunpack.c.h.b16 %v534
        %v1325 = vunpack.c.l.b16 %v535
        %v1326 = vunpack.c.h.b16 %v535
        %v1327 = vunpack.c.l.b16 %v536
        %v1328 = vunpack.c.h.b16 %v536
        %v1329 = vunpack.c.l.b16 %v537
        %v1330 = vunpack.c.h.b16 %v537
        %v1331 = vunpack.c.l.b16 %v538
        %v1332 = vunpack.c.h.b16 %v538
        %v1333 = vunpack.c.l.b16 %v539
        %v1334 = vunpack.c.h.b16 %v539
        %v1335 = vunpack.c.l.b16 %v540
        %v1336 = vunpack.c.h.b16 %v540
        %v1337 = vunpack.c.l.b16 %v541
        %v1338 = vunpack.c.h.b16 %v541
        %v1339 = vunpack.c.l.b16 %v542
        %v1340 = vunpack.c.h.b16 %v542
        %v1341 = vunpack.c.l.b16 %v543
        %v1342 = vunpack.c.h.b16 %v543
        %v1343 = vunpack.c.l.b16 %v544
        %v1344 = vunpack.c.h.b16 %v544
        %v1345 = vunpack.c.l.b16 %v545
        %v1346 = vunpack.c.h.b16 %v545
        %v1347 = vunpack.c.l.b16 %v546
        %v1348 = vunpack.c.h.b16 %v546
        %v1349 = vunpack.c.l.b16 %v547
        %v1350 = vunpack.c.h.b16 %v547
        %v1351 = vunpack.c.l.b16 %v548
        %v1352 = vunpack.c.h.b16 %v548
        %v1353 = vunpack.c.l.b16 %v549
        %v1354 = vunpack.c.h.b16 %v549
        %v1355 = vunpack.c.l.b16 %v550
        %v1356 = vunpack.c.h.b16 %v550
        %v1357 = vunpack.c.l.b16 %v551
        %v1358 = vunpack.c.h.b16 %v551
        %v1359 = vunpack.c.l.b16 %v552
        %v1360 = vunpack.c.h.b16 %v552
        %v1361 = vunpack.c.l.b16 %v553
        %v1362 = vunpack.c.h.b16 %v553
        %v1363 = vunpack.c.l.b16 %v554
        %v1364 = vunpack.c.h.b16 %v554
        %v1365 = vunpack.c.l.b16 %v555
        %v1366 = vunpack.c.h.b16 %v555
        %v1367 = vunpack.c.l.b16 %v556
        %v1368 = vunpack.c.h.b16 %v556
        %v1369 = vunpack.c.l.b16 %v557
        %v1370 = vunpack.c.h.b16 %v557
        %v1371 = vunpack.c.l.b16 %v558
        %v1372 = vunpack.c.h.b16 %v558
        %v1373 = vunpack.c.l.b16 %v559
        %v1374 = vunpack.c.h.b16 %v559
        %v1375 = vunpack.c.l.b16 %v560
        %v1376 = vunpack.c.h.b16 %v560
        %v1377 = vunpack.c.l.b16 %v561
        %v1378 = vunpack.c.h.b16 %v561
        %v1379 = vunpack.c.l.b16 %v562
        %v1380 = vunpack.c.h.b16 %v562
        %v1381 = vunpack.c.l.b16 %v563
        %v1382 = vunpack.c.h.b16 %v563
        %v1383 = vunpack.c.l.b16 %v564
        %v1384 = vunpack.c.h.b16 %v564
        %v1385 = vunpack.c.l.b16 %v565
        %v1386 = vunpack.c.h.b16 %v565
        %v1387 = vunpack.c.l.b16 %v566
        %v1388 = vunpack.c.h.b16 %v566
        %v1389 = vunpack.c.l.b16 %v567
        %v1390 = vunpack.c.h.b16 %v567
        %v1391 = vunpack.c.l.b16 %v568
        %v1392 = vunpack.c.h.b16 %v568
        %v1393 = vunpack.c.l.b16 %v569
        %v1394 = vunpack.c.h.b16 %v569
        %v1395 = vunpack.c.l.b16 %v570
        %v1396 = vunpack.c.h.b16 %v570
        %v1397 = vunpack.c.l.b16 %v571
        %v1398 = vunpack.c.h.b16 %v571
        %v1399 = vunpack.c.l.b16 %v572
        %v1400 = vunpack.c.h.b16 %v572
        %v1401 = vunpack.c.l.b16 %v573
        %v1402 = vunpack.c.h.b16 %v573
        %v1403 = vunpack.c.l.b16 %v574
        %v1404 = vunpack.c.h.b16 %v574
        %v1405 = vunpack.c.l.b16 %v575
        %v1406 = vunpack.c.h.b16 %v575
        %v1407 = vunpack.c.l.b16 %v576
        %v1408 = vunpack.c.h.b16 %v576
        %v1409 = vunpack.c.l.b16 %v577
        %v1410 = vunpack.c.h.b16 %v577
        %v1411 = vunpack.c.l.b16 %v578
        %v1412 = vunpack.c.h.b16 %v578
        %v1413 = vunpack.c.l.b16 %v579
        %v1414 = vunpack.c.h.b16 %v579
        %v1415 = vunpack.c.l.b16 %v580
        %v1416 = vunpack.c.h.b16 %v580
        %v1417 = vunpack.c.l.b16 %v581
        %v1418 = vunpack.c.h.b16 %v581
        %v1419 = vunpack.c.l.b16 %v582
        %v1420 = vunpack.c.h.b16 %v582
        %v1421 = vunpack.c.l.b16 %v583
        %v1422 = vunpack.c.h.b16 %v583
        %v1423 = vunpack.c.l.b16 %v584
        %v1424 = vunpack.c.h.b16 %v584
        %v1425 = vunpack.c.l.b16 %v585
        %v1426 = vunpack.c.h.b16 %v585
        %v1427 = vunpack.c.l.b16 %v586
        %v1428 = vunpack.c.h.b16 %v586
        %v1429 = vunpack.c.l.b16 %v587
        %v1430 = vunpack.c.h.b16 %v587
        %v1431 = vunpack.c.l.b16 %v588
        %v1432 = vunpack.c.h.b16 %v588
        %v1433 = vunpack.c.l.b16 %v589
        %v1434 = vunpack.c.h.b16 %v589
        %v1435 = vunpack.c.l.b16 %v590
        %v1436 = vunpack.c.h.b16 %v590
        %v1437 = vunpack.c.l.b16 %v591
        %v1438 = vunpack.c.h.b16 %v591
        %v1439 = vunpack.c.l.b16 %v592
        %v1440 = vunpack.c.h.b16 %v592
        %v1441 = vpack.c.b16 %v937, %v929
        %v1442 = vpack.c.b16 %v938, %v930
        %v1443 = vpack.c.b16 %v939, %v931
        %v1444 = vpack.c.b16 %v940, %v932
        %v1445 = vpack.c.b16 %v941, %v933
        %v1446 = vpack.c.b16 %v942, %v934
        %v1447 = vpack.c.b16 %v943, %v935
        %v1448 = vpack.c.b16 %v944, %v936
        %v1449 = vpack.c.b16 %v953, %v945
        %v1450 = vpack.c.b16 %v954, %v946
        %v1451 = vpack.c.b16 %v955, %v947
        %v1452 = vpack.c.b16 %v956, %v948
        %v1453 = vpack.c.b16 %v957, %v949
        %v1454 = vpack.c.b16 %v958, %v950
        %v1455 = vpack.c.b16 %v959, %v951
        %v1456 = vpack.c.b16 %v960, %v952
        %v1457 = vpack.c.b16 %v969, %v961
        %v1458 = vpack.c.b16 %v970, %v962
        %v1459 = vpack.c.b16 %v971, %v963
        %v1460 = vpack.c.b16 %v972, %v964
        %v1461 = vpack.c.b16 %v973, %v965
        %v1462 = vpack.c.b16 %v974, %v966
        %v1463 = vpack.c.b16 %v975, %v967
        %v1464 = vpack.c.b16 %v976, %v968
        %v1465 = vpack.c.b16 %v985, %v977
        %v1466 = vpack.c.b16 %v986, %v978
        %v1467 = vpack.c.b16 %v987, %v979
        %v1468 = vpack.c.b16 %v988, %v980
        %v1469 = vpack.c.b16 %v989, %v981
        %v1470 = vpack.c.b16 %v990, %v982
        %v1471 = vpack.c.b16 %v991, %v983
        %v1472 = vpack.c.b16 %v992, %v984
        %v1473 = vpack.c.b16 %v1001, %v993
        %v1474 = vpack.c.b16 %v1002, %v994
        %v1475 = vpack.c.b16 %v1003, %v995
        %v1476 = vpack.c.b16 %v1004, %v996
        %v1477 = vpack.c.b16 %v1005, %v997
        %v1478 = vpack.c.b16 %v1006, %v998
        %v1479 = vpack.c.b16 %v1007, %v999
        %v1480 = vpack.c.b16 %v1008, %v1000
        %v1481 = vpack.c.b16 %v1017, %v1009
        %v1482 = vpack.c.b16 %v1018, %v1010
        %v1483 = vpack.c.b16 %v1019, %v1011
        %v1484 = vpack.c.b16 %v1020, %v1012
        %v1485 = vpack.c.b16 %v1021, %v1013
        %v1486 = vpack.c.b16 %v1022, %v1014
        %v1487 = vpack.c.b16 %v1023, %v1015
        %v1488 = vpack.c.b16 %v1024, %v1016
        %v1489 = vpack.c.b16 %v1033, %v1025
        %v1490 = vpack.c.b16 %v1034, %v1026
        %v1491 = vpack.c.b16 %v1035, %v1027
        %v1492 = vpack.c.b16 %v1036, %v1028
        %v1493 = vpack.c.b16 %v1037, %v1029
        %v1494 = vpack.c.b16 %v1038, %v1030
        %v1495 = vpack.c.b16 %v1039, %v1031
        %v1496 = vpack.c.b16 %v1040, %v1032
        %v1497 = vpack.c.b16 %v1049, %v1041
        %v1498 = vpack.c.b16 %v1050, %v1042
        %v1499 = vpack.c.b16 %v1051, %v1043
        %v1500 = vpack.c.b16 %v1052, %v1044
        %v1501 = vpack.c.b16 %v1053, %v1045
        %v1502 = vpack.c.b16 %v1054, %v1046
        %v1503 = vpack.c.b16 %v1055, %v1047
        %v1504 = vpack.c.b16 %v1056, %v1048
        %v1505 = vpack.c.b16 %v1065, %v1057
        %v1506 = vpack.c.b16 %v1066, %v1058
        %v1507 = vpack.c.b16 %v1067, %v1059
        %v1508 = vpack.c.b16 %v1068, %v1060
        %v1509 = vpack.c.b16 %v1069, %v1061
        %v1510 = vpack.c.b16 %v1070, %v1062
        %v1511 = vpack.c.b16 %v1071, %v1063
        %v1512 = vpack.c.b16 %v1072, %v1064
        %v1513 = vpack.c.b16 %v1081, %v1073
        %v1514 = vpack.c.b16 %v1082, %v1074
        %v1515 = vpack.c.b16 %v1083, %v1075
        %v1516 = vpack.c.b16 %v1084, %v1076
        %v1517 = vpack.c.b16 %v1085, %v1077
        %v1518 = vpack.c.b16 %v1086, %v1078
        %v1519 = vpack.c.b16 %v1087, %v1079
        %v1520 = vpack.c.b16 %v1088, %v1080
        %v1521 = vpack.c.b16 %v1097, %v1089
        %v1522 = vpack.c.b16 %v1098, %v1090
        %v1523 = vpack.c.b16 %v1099, %v1091
        %v1524 = vpack.c.b16 %v1100, %v1092
        %v1525 = vpack.c.b16 %v1101, %v1093
        %v1526 = vpack.c.b16 %v1102, %v1094
        %v1527 = vpack.c.b16 %v1103, %v1095
        %v1528 = vpack.c.b16 %v1104, %v1096
        %v1529 = vpack.c.b16 %v1113, %v1105
        %v1530 = vpack.c.b16 %v1114, %v1106
        %v1531 = vpack.c.b16 %v1115, %v1107
        %v1532 = vpack.c.b16 %v1116, %v1108
        %v1533 = vpack.c.b16 %v1117, %v1109
        %v1534 = vpack.c.b16 %v1118, %v1110
        %v1535 = vpack.c.b16 %v1119, %v1111
        %v1536 = vpack.c.b16 %v1120, %v1112
        %v1537 = vpack.c.b16 %v1129, %v1121
        %v1538 = vpack.c.b16 %v1130, %v1122
        %v1539 = vpack.c.b16 %v1131, %v1123
        %v1540 = vpack.c.b16 %v1132, %v1124
        %v1541 = vpack.c.b16 %v1133, %v1125
        %v1542 = vpack.c.b16 %v1134, %v1126
        %v1543 = vpack.c.b16 %v1135, %v1127
        %v1544 = vpack.c.b16 %v1136, %v1128
        %v1545 = vpack.c.b16 %v1145, %v1137
        %v1546 = vpack.c.b16 %v1146, %v1138
        %v1547 = vpack.c.b16 %v1147, %v1139
        %v1548 = vpack.c.b16 %v1148, %v1140
        %v1549 = vpack.c.b16 %v1149, %v1141
        %v1550 = vpack.c.b16 %v1150, %v1142
        %v1551 = vpack.c.b16 %v1151, %v1143
        %v1552 = vpack.c.b16 %v1152, %v1144
        %v1553 = vpack.c.b16 %v1161, %v1153
        %v1554 = vpack.c.b16 %v1162, %v1154
        %v1555 = vpack.c.b16 %v1163, %v1155
        %v1556 = vpack.c.b16 %v1164, %v1156
        %v1557 = vpack.c.b16 %v1165, %v1157
        %v1558 = vpack.c.b16 %v1166, %v1158
        %v1559 = vpack.c.b16 %v1167, %v1159
        %v1560 = vpack.c.b16 %v1168, %v1160
        %v1561 = vpack.c.b16 %v1177, %v1169
        %v1562 = vpack.c.b16 %v1178, %v1170
        %v1563 = vpack.c.b16 %v1179, %v1171
        %v1564 = vpack.c.b16 %v1180, %v1172
        %v1565 = vpack.c.b16 %v1181, %v1173
        %v1566 = vpack.c.b16 %v1182, %v1174
        %v1567 = vpack.c.b16 %v1183, %v1175
        %v1568 = vpack.c.b16 %v1184, %v1176
        %v1569 = vpack.c.b16 %v1193, %v1185
        %v1570 = vpack.c.b16 %v1194, %v1186
        %v1571 = vpack.c.b16 %v1195, %v1187
        %v1572 = vpack.c.b16 %v1196, %v1188
        %v1573 = vpack.c.b16 %v1197, %v1189
        %v1574 = vpack.c.b16 %v1198, %v1190
        %v1575 = vpack.c.b16 %v1199, %v1191
        %v1576 = vpack.c.b16 %v1200, %v1192
        %v1577 = vpack.c.b16 %v1209, %v1201
        %v1578 = vpack.c.b16 %v1210, %v1202
        %v1579 = vpack.c.b16 %v1211, %v1203
        %v1580 = vpack.c.b16 %v1212, %v1204
        %v1581 = vpack.c.b16 %v1213, %v1205
        %v1582 = vpack.c.b16 %v1214, %v1206
        %v1583 = vpack.c.b16 %v1215, %v1207
        %v1584 = vpack.c.b16 %v1216, %v1208
        %v1585 = vpack.c.b16 %v1225, %v1217
        %v1586 = vpack.c.b16 %v1226, %v1218
        %v1587 = vpack.c.b16 %v1227, %v1219
        %v1588 = vpack.c.b16 %v1228, %v1220
        %v1589 = vpack.c.b16 %v1229, %v1221
        %v1590 = vpack.c.b16 %v1230, %v1222
        %v1591 = vpack.c.b16 %v1231, %v1223
        %v1592 = vpack.c.b16 %v1232, %v1224
        %v1593 = vpack.c.b16 %v1241, %v1233
        %v1594 = vpack.c.b16 %v1242, %v1234
        %v1595 = vpack.c.b16 %v1243, %v1235
        %v1596 = vpack.c.b16 %v1244, %v1236
        %v1597 = vpack.c.b16 %v1245, %v1237
        %v1598 = vpack.c.b16 %v1246, %v1238
        %v1599 = vpack.c.b16 %v1247, %v1239
        %v1600 = vpack.c.b16 %v1248, %v1240
        %v1601 = vpack.c.b16 %v1257, %v1249
        %v1602 = vpack.c.b16 %v1258, %v1250
        %v1603 = vpack.c.b16 %v1259, %v1251
        %v1604 = vpack.c.b16 %v1260, %v1252
        %v1605 = vpack.c.b16 %v1261, %v1253
        %v1606 = vpack.c.b16 %v1262, %v1254
        %v1607 = vpack.c.b16 %v1263, %v1255
        %v1608 = vpack.c.b16 %v1264, %v1256
        %v1609 = vpack.c.b16 %v1273, %v1265
        %v1610 = vpack.c.b16 %v1274, %v1266
        %v1611 = vpack.c.b16 %v1275, %v1267
        %v1612 = vpack.c.b16 %v1276, %v1268
        %v1613 = vpack.c.b16 %v1277, %v1269
        %v1614 = vpack.c.b16 %v1278, %v1270
        %v1615 = vpack.c.b16 %v1279, %v1271
        %v1616 = vpack.c.b16 %v1280, %v1272
        %v1617 = vpack.c.b16 %v1289, %v1281
        %v1618 = vpack.c.b16 %v1290, %v1282
        %v1619 = vpack.c.b16 %v1291, %v1283
        %v1620 = vpack.c.b16 %v1292, %v1284
        %v1621 = vpack.c.b16 %v1293, %v1285
        %v1622 = vpack.c.b16 %v1294, %v1286
        %v1623 = vpack.c.b16 %v1295, %v1287
        %v1624 = vpack.c.b16 %v1296, %v1288
        %v1625 = vpack.c.b16 %v1305, %v1297
        %v1626 = vpack.c.b16 %v1306, %v1298
        %v1627 = vpack.c.b16 %v1307, %v1299
        %v1628 = vpack.c.b16 %v1308, %v1300
        %v1629 = vpack.c.b16 %v1309, %v1301
        %v1630 = vpack.c.b16 %v1310, %v1302
        %v1631 = vpack.c.b16 %v1311, %v1303
        %v1632 = vpack.c.b16 %v1312, %v1304
        %v1633 = vpack.c.b16 %v1321, %v1313
        %v1634 = vpack.c.b16 %v1322, %v1314
        %v1635 = vpack.c.b16 %v1323, %v1315
        %v1636 = vpack.c.b16 %v1324, %v1316
        %v1637 = vpack.c.b16 %v1325, %v1317
        %v1638 = vpack.c.b16 %v1326, %v1318
        %v1639 = vpack.c.b16 %v1327, %v1319
        %v1640 = vpack.c.b16 %v1328, %v1320
        %v1641 = vpack.c.b16 %v1337, %v1329
        %v1642 = vpack.c.b16 %v1338, %v1330
        %v1643 = vpack.c.b16 %v1339, %v1331
        %v1644 = vpack.c.b16 %v1340, %v1332
        %v1645 = vpack.c.b16 %v1341, %v1333
        %v1646 = vpack.c.b16 %v1342, %v1334
        %v1647 = vpack.c.b16 %v1343, %v1335
        %v1648 = vpack.c.b16 %v1344, %v1336
        %v1649 = vpack.c.b16 %v1353, %v1345
        %v1650 = vpack.c.b16 %v1354, %v1346
        %v1651 = vpack.c.b16 %v1355, %v1347
        %v1652 = vpack.c.b16 %v1356, %v1348
        %v1653 = vpack.c.b16 %v1357, %v1349
        %v1654 = vpack.c.b16 %v1358, %v1350
        %v1655 = vpack.c.b16 %v1359, %v1351
        %v1656 = vpack.c.b16 %v1360, %v1352
        %v1657 = vpack.c.b16 %v1369, %v1361
        %v1658 = vpack.c.b16 %v1370, %v1362
        %v1659 = vpack.c.b16 %v1371, %v1363
        %v1660 = vpack.c.b16 %v1372, %v1364
        %v1661 = vpack.c.b16 %v1373, %v1365
        %v1662 = vpack.c.b16 %v1374, %v1366
        %v1663 = vpack.c.b16 %v1375, %v1367
        %v1664 = vpack.c.b16 %v1376, %v1368
        %v1665 = vpack.c.b16 %v1385, %v1377
        %v1666 = vpack.c.b16 %v1386, %v1378
        %v1667 = vpack.c.b16 %v1387, %v1379
        %v1668 = vpack.c.b16 %v1388, %v1380
        %v1669 = vpack.c.b16 %v1389, %v1381
        %v1670 = vpack.c.b16 %v1390, %v1382
        %v1671 = vpack.c.b16 %v1391, %v1383
        %v1672 = vpack.c.b16 %v1392, %v1384
        %v1673 = vpack.c.b16 %v1401, %v1393
        %v1674 = vpack.c.b16 %v1402, %v1394
        %v1675 = vpack.c.b16 %v1403, %v1395
        %v1676 = vpack.c.b16 %v1404, %v1396
        %v1677 = vpack.c.b16 %v1405, %v1397
        %v1678 = vpack.c.b16 %v1406, %v1398
        %v1679 = vpack.c.b16 %v1407, %v1399
        %v1680 = vpack.c.b16 %v1408, %v1400
        %v1681 = vpack.c.b16 %v1417, %v1409
        %v1682 = vpack.c.b16 %v1418, %v1410
        %v1683 = vpack.c.b16 %v1419, %v1411
        %v1684 = vpack.c.b16 %v1420, %v1412
        %v1685 = vpack.c.b16 %v1421, %v1413
        %v1686 = vpack.c.b16 %v1422, %v1414
        %v1687 = vpack.c.b16 %v1423, %v1415
        %v1688 = vpack.c.b16 %v1424, %v1416
        %v1689 = vpack.c.b16 %v1433, %v1425
        %v1690 = vpack.c.b16 %v1434, %v1426
        %v1691 = vpack.c.b16 %v1435, %v1427
        %v1692 = vpack.c.b16 %v1436, %v1428
        %v1693 = vpack.c.b16 %v1437, %v1429
        %v1694 = vpack.c.b16 %v1438, %v1430
        %v1695 = vpack.c.b16 %v1439, %v1431
        %v1696 = vpack.c.b16 %v1440, %v1432
        %1953 = vmatpush.bf16.msra.mxu0 %v1497
        %1954 = vmatpush.bf16.msra.mxu0 %v1489
        %1955 = vmatpush.bf16.msra.mxu0 %v1481
        %1956 = vmatpush.bf16.msra.mxu0 %v1473
        %1957 = vmatpush.bf16.msra.mxu0 %v1465
        %1958 = vmatpush.bf16.msra.mxu0 %v1457
        %1959 = vmatpush.bf16.msra.mxu0 %v1449
        %1960 = vmatpush.bf16.msra.mxu0 %v1441
        %1961 = vmatmul.bf16.gmra.mxu0 %v641
        %v1962 = vpop.f32.mrf.mxu0
        %v1963 = vadd.f32 0.0, %v1962
        %v1964 = vpop.f32.mrf.mxu0
        %v1965 = vadd.f32 0.0, %v1964
        %1966 = vmatmul.bf16.gmra.mxu0 %v645
        %v1967 = vpop.f32.mrf.mxu0
        %v1968 = vadd.f32 0.0, %v1967
        %v1969 = vpop.f32.mrf.mxu0
        %v1970 = vadd.f32 0.0, %v1969
        %1971 = vmatmul.bf16.gmra.mxu0 %v649
        %v1972 = vpop.f32.mrf.mxu0
        %v1973 = vadd.f32 0.0, %v1972
        %v1974 = vpop.f32.mrf.mxu0
        %v1975 = vadd.f32 0.0, %v1974
        %1976 = vmatmul.bf16.gmra.mxu0 %v653
        %v1977 = vpop.f32.mrf.mxu0
        %v1978 = vadd.f32 0.0, %v1977
        %v1979 = vpop.f32.mrf.mxu0
        %v1980 = vadd.f32 0.0, %v1979
        %1981 = vdwg.mxu0
        %1982 = vmatpush.bf16.msra.mxu0 %v1561
        %1983 = vmatpush.bf16.msra.mxu0 %v1553
        %1984 = vmatpush.bf16.msra.mxu0 %v1545
        %1985 = vmatpush.bf16.msra.mxu0 %v1537
        %1986 = vmatpush.bf16.msra.mxu0 %v1529
        %1987 = vmatpush.bf16.msra.mxu0 %v1521
        %1988 = vmatpush.bf16.msra.mxu0 %v1513
        %1989 = vmatpush.bf16.msra.mxu0 %v1505
        %1990 = vmatmul.bf16.gmra.mxu0 %v642
        %v1991 = vpop.f32.mrf.mxu0
        %v1992 = vadd.f32 %v1963, %v1991
        %v1993 = vpop.f32.mrf.mxu0
        %v1994 = vadd.f32 %v1965, %v1993
        %1995 = vmatmul.bf16.gmra.mxu0 %v646
        %v1996 = vpop.f32.mrf.mxu0
        %v1997 = vadd.f32 %v1968, %v1996
        %v1998 = vpop.f32.mrf.mxu0
        %v1999 = vadd.f32 %v1970, %v1998
        %2000 = vmatmul.bf16.gmra.mxu0 %v650
        %v2001 = vpop.f32.mrf.mxu0
        %v2002 = vadd.f32 %v1973, %v2001
        %v2003 = vpop.f32.mrf.mxu0
        %v2004 = vadd.f32 %v1975, %v2003
        %2005 = vmatmul.bf16.gmra.mxu0 %v654
        %v2006 = vpop.f32.mrf.mxu0
        %v2007 = vadd.f32 %v1978, %v2006
        %v2008 = vpop.f32.mrf.mxu0
        %v2009 = vadd.f32 %v1980, %v2008
        %2010 = vdwg.mxu0
        %2011 = vmatpush.bf16.msra.mxu0 %v1625
        %2012 = vmatpush.bf16.msra.mxu0 %v1617
        %2013 = vmatpush.bf16.msra.mxu0 %v1609
        %2014 = vmatpush.bf16.msra.mxu0 %v1601
        %2015 = vmatpush.bf16.msra.mxu0 %v1593
        %2016 = vmatpush.bf16.msra.mxu0 %v1585
        %2017 = vmatpush.bf16.msra.mxu0 %v1577
        %2018 = vmatpush.bf16.msra.mxu0 %v1569
        %2019 = vmatmul.bf16.gmra.mxu0 %v643
        %v2020 = vpop.f32.mrf.mxu0
        %v2021 = vadd.f32 %v1992, %v2020
        %v2022 = vpop.f32.mrf.mxu0
        %v2023 = vadd.f32 %v1994, %v2022
        %2024 = vmatmul.bf16.gmra.mxu0 %v647
        %v2025 = vpop.f32.mrf.mxu0
        %v2026 = vadd.f32 %v1997, %v2025
        %v2027 = vpop.f32.mrf.mxu0
        %v2028 = vadd.f32 %v1999, %v2027
        %2029 = vmatmul.bf16.gmra.mxu0 %v651
        %v2030 = vpop.f32.mrf.mxu0
        %v2031 = vadd.f32 %v2002, %v2030
        %v2032 = vpop.f32.mrf.mxu0
        %v2033 = vadd.f32 %v2004, %v2032
        %2034 = vmatmul.bf16.gmra.mxu0 %v655
        %v2035 = vpop.f32.mrf.mxu0
        %v2036 = vadd.f32 %v2007, %v2035
        %v2037 = vpop.f32.mrf.mxu0
        %v2038 = vadd.f32 %v2009, %v2037
        %2039 = vdwg.mxu0
        %2040 = vmatpush.bf16.msra.mxu0 %v1689
        %2041 = vmatpush.bf16.msra.mxu0 %v1681
        %2042 = vmatpush.bf16.msra.mxu0 %v1673
        %2043 = vmatpush.bf16.msra.mxu0 %v1665
        %2044 = vmatpush.bf16.msra.mxu0 %v1657
        %2045 = vmatpush.bf16.msra.mxu0 %v1649
        %2046 = vmatpush.bf16.msra.mxu0 %v1641
        %2047 = vmatpush.bf16.msra.mxu0 %v1633
        %2048 = vmatmul.bf16.gmra.mxu0 %v644
        %v2049 = vpop.f32.mrf.mxu0
        %v2050 = vadd.f32 %v2021, %v2049
        %v2051 = vpop.f32.mrf.mxu0
        %v2052 = vadd.f32 %v2023, %v2051
        %2053 = vmatmul.bf16.gmra.mxu0 %v648
        %v2054 = vpop.f32.mrf.mxu0
        %v2055 = vadd.f32 %v2026, %v2054
        %v2056 = vpop.f32.mrf.mxu0
        %v2057 = vadd.f32 %v2028, %v2056
        %2058 = vmatmul.bf16.gmra.mxu0 %v652
        %v2059 = vpop.f32.mrf.mxu0
        %v2060 = vadd.f32 %v2031, %v2059
        %v2061 = vpop.f32.mrf.mxu0
        %v2062 = vadd.f32 %v2033, %v2061
        %2063 = vmatmul.bf16.gmra.mxu0 %v656
        %v2064 = vpop.f32.mrf.mxu0
        %v2065 = vadd.f32 %v2036, %v2064
        %v2066 = vpop.f32.mrf.mxu0
        %v2067 = vadd.f32 %v2038, %v2066
        %2068 = vdwg.mxu0
        %2069 = vmatpush.bf16.msra.mxu0 %v1498
        %2070 = vmatpush.bf16.msra.mxu0 %v1490
        %2071 = vmatpush.bf16.msra.mxu0 %v1482
        %2072 = vmatpush.bf16.msra.mxu0 %v1474
        %2073 = vmatpush.bf16.msra.mxu0 %v1466
        %2074 = vmatpush.bf16.msra.mxu0 %v1458
        %2075 = vmatpush.bf16.msra.mxu0 %v1450
        %2076 = vmatpush.bf16.msra.mxu0 %v1442
        %2077 = vmatmul.bf16.gmra.mxu0 %v641
        %v2078 = vpop.f32.mrf.mxu0
        %v2079 = vadd.f32 0.0, %v2078
        %v2080 = vpop.f32.mrf.mxu0
        %v2081 = vadd.f32 0.0, %v2080
        %2082 = vmatmul.bf16.gmra.mxu0 %v645
        %v2083 = vpop.f32.mrf.mxu0
        %v2084 = vadd.f32 0.0, %v2083
        %v2085 = vpop.f32.mrf.mxu0
        %v2086 = vadd.f32 0.0, %v2085
        %2087 = vmatmul.bf16.gmra.mxu0 %v649
        %v2088 = vpop.f32.mrf.mxu0
        %v2089 = vadd.f32 0.0, %v2088
        %v2090 = vpop.f32.mrf.mxu0
        %v2091 = vadd.f32 0.0, %v2090
        %2092 = vmatmul.bf16.gmra.mxu0 %v653
        %v2093 = vpop.f32.mrf.mxu0
        %v2094 = vadd.f32 0.0, %v2093
        %v2095 = vpop.f32.mrf.mxu0
        %v2096 = vadd.f32 0.0, %v2095
        %2097 = vdwg.mxu0
        %2098 = vmatpush.bf16.msra.mxu0 %v1562
        %2099 = vmatpush.bf16.msra.mxu0 %v1554
        %2100 = vmatpush.bf16.msra.mxu0 %v1546
        %2101 = vmatpush.bf16.msra.mxu0 %v1538
        %2102 = vmatpush.bf16.msra.mxu0 %v1530
        %2103 = vmatpush.bf16.msra.mxu0 %v1522
        %2104 = vmatpush.bf16.msra.mxu0 %v1514
        %2105 = vmatpush.bf16.msra.mxu0 %v1506
        %2106 = vmatmul.bf16.gmra.mxu0 %v642
        %v2107 = vpop.f32.mrf.mxu0
        %v2108 = vadd.f32 %v2079, %v2107
        %v2109 = vpop.f32.mrf.mxu0
        %v2110 = vadd.f32 %v2081, %v2109
        %2111 = vmatmul.bf16.gmra.mxu0 %v646
        %v2112 = vpop.f32.mrf.mxu0
        %v2113 = vadd.f32 %v2084, %v2112
        %v2114 = vpop.f32.mrf.mxu0
        %v2115 = vadd.f32 %v2086, %v2114
        %2116 = vmatmul.bf16.gmra.mxu0 %v650
        %v2117 = vpop.f32.mrf.mxu0
        %v2118 = vadd.f32 %v2089, %v2117
        %v2119 = vpop.f32.mrf.mxu0
        %v2120 = vadd.f32 %v2091, %v2119
        %2121 = vmatmul.bf16.gmra.mxu0 %v654
        %v2122 = vpop.f32.mrf.mxu0
        %v2123 = vadd.f32 %v2094, %v2122
        %v2124 = vpop.f32.mrf.mxu0
        %v2125 = vadd.f32 %v2096, %v2124
        %2126 = vdwg.mxu0
        %2127 = vmatpush.bf16.msra.mxu0 %v1626
        %2128 = vmatpush.bf16.msra.mxu0 %v1618
        %2129 = vmatpush.bf16.msra.mxu0 %v1610
        %2130 = vmatpush.bf16.msra.mxu0 %v1602
        %2131 = vmatpush.bf16.msra.mxu0 %v1594
        %2132 = vmatpush.bf16.msra.mxu0 %v1586
        %2133 = vmatpush.bf16.msra.mxu0 %v1578
        %2134 = vmatpush.bf16.msra.mxu0 %v1570
        %2135 = vmatmul.bf16.gmra.mxu0 %v643
        %v2136 = vpop.f32.mrf.mxu0
        %v2137 = vadd.f32 %v2108, %v2136
        %v2138 = vpop.f32.mrf.mxu0
        %v2139 = vadd.f32 %v2110, %v2138
        %2140 = vmatmul.bf16.gmra.mxu0 %v647
        %v2141 = vpop.f32.mrf.mxu0
        %v2142 = vadd.f32 %v2113, %v2141
        %v2143 = vpop.f32.mrf.mxu0
        %v2144 = vadd.f32 %v2115, %v2143
        %2145 = vmatmul.bf16.gmra.mxu0 %v651
        %v2146 = vpop.f32.mrf.mxu0
        %v2147 = vadd.f32 %v2118, %v2146
        %v2148 = vpop.f32.mrf.mxu0
        %v2149 = vadd.f32 %v2120, %v2148
        %2150 = vmatmul.bf16.gmra.mxu0 %v655
        %v2151 = vpop.f32.mrf.mxu0
        %v2152 = vadd.f32 %v2123, %v2151
        %v2153 = vpop.f32.mrf.mxu0
        %v2154 = vadd.f32 %v2125, %v2153
        %2155 = vdwg.mxu0
        %2156 = vmatpush.bf16.msra.mxu0 %v1690
        %2157 = vmatpush.bf16.msra.mxu0 %v1682
        %2158 = vmatpush.bf16.msra.mxu0 %v1674
        %2159 = vmatpush.bf16.msra.mxu0 %v1666
        %2160 = vmatpush.bf16.msra.mxu0 %v1658
        %2161 = vmatpush.bf16.msra.mxu0 %v1650
        %2162 = vmatpush.bf16.msra.mxu0 %v1642
        %2163 = vmatpush.bf16.msra.mxu0 %v1634
        %2164 = vmatmul.bf16.gmra.mxu0 %v644
        %v2165 = vpop.f32.mrf.mxu0
        %v2166 = vadd.f32 %v2137, %v2165
        %v2167 = vpop.f32.mrf.mxu0
        %v2168 = vadd.f32 %v2139, %v2167
        %2169 = vmatmul.bf16.gmra.mxu0 %v648
        %v2170 = vpop.f32.mrf.mxu0
        %v2171 = vadd.f32 %v2142, %v2170
        %v2172 = vpop.f32.mrf.mxu0
        %v2173 = vadd.f32 %v2144, %v2172
        %2174 = vmatmul.bf16.gmra.mxu0 %v652
        %v2175 = vpop.f32.mrf.mxu0
        %v2176 = vadd.f32 %v2147, %v2175
        %v2177 = vpop.f32.mrf.mxu0
        %v2178 = vadd.f32 %v2149, %v2177
        %2179 = vmatmul.bf16.gmra.mxu0 %v656
        %v2180 = vpop.f32.mrf.mxu0
        %v2181 = vadd.f32 %v2152, %v2180
        %v2182 = vpop.f32.mrf.mxu0
        %v2183 = vadd.f32 %v2154, %v2182
        %2184 = vdwg.mxu0
        %2185 = vmatpush.bf16.msra.mxu0 %v1499
        %2186 = vmatpush.bf16.msra.mxu0 %v1491
        %2187 = vmatpush.bf16.msra.mxu0 %v1483
        %2188 = vmatpush.bf16.msra.mxu0 %v1475
        %2189 = vmatpush.bf16.msra.mxu0 %v1467
        %2190 = vmatpush.bf16.msra.mxu0 %v1459
        %2191 = vmatpush.bf16.msra.mxu0 %v1451
        %2192 = vmatpush.bf16.msra.mxu0 %v1443
        %2193 = vmatmul.bf16.gmra.mxu0 %v641
        %v2194 = vpop.f32.mrf.mxu0
        %v2195 = vadd.f32 0.0, %v2194
        %v2196 = vpop.f32.mrf.mxu0
        %v2197 = vadd.f32 0.0, %v2196
        %2198 = vmatmul.bf16.gmra.mxu0 %v645
        %v2199 = vpop.f32.mrf.mxu0
        %v2200 = vadd.f32 0.0, %v2199
        %v2201 = vpop.f32.mrf.mxu0
        %v2202 = vadd.f32 0.0, %v2201
        %2203 = vmatmul.bf16.gmra.mxu0 %v649
        %v2204 = vpop.f32.mrf.mxu0
        %v2205 = vadd.f32 0.0, %v2204
        %v2206 = vpop.f32.mrf.mxu0
        %v2207 = vadd.f32 0.0, %v2206
        %2208 = vmatmul.bf16.gmra.mxu0 %v653
        %v2209 = vpop.f32.mrf.mxu0
        %v2210 = vadd.f32 0.0, %v2209
        %v2211 = vpop.f32.mrf.mxu0
        %v2212 = vadd.f32 0.0, %v2211
        %2213 = vdwg.mxu0
        %2214 = vmatpush.bf16.msra.mxu0 %v1563
        %2215 = vmatpush.bf16.msra.mxu0 %v1555
        %2216 = vmatpush.bf16.msra.mxu0 %v1547
        %2217 = vmatpush.bf16.msra.mxu0 %v1539
        %2218 = vmatpush.bf16.msra.mxu0 %v1531
        %2219 = vmatpush.bf16.msra.mxu0 %v1523
        %2220 = vmatpush.bf16.msra.mxu0 %v1515
        %2221 = vmatpush.bf16.msra.mxu0 %v1507
        %2222 = vmatmul.bf16.gmra.mxu0 %v642
        %v2223 = vpop.f32.mrf.mxu0
        %v2224 = vadd.f32 %v2195, %v2223
        %v2225 = vpop.f32.mrf.mxu0
        %v2226 = vadd.f32 %v2197, %v2225
        %2227 = vmatmul.bf16.gmra.mxu0 %v646
        %v2228 = vpop.f32.mrf.mxu0
        %v2229 = vadd.f32 %v2200, %v2228
        %v2230 = vpop.f32.mrf.mxu0
        %v2231 = vadd.f32 %v2202, %v2230
        %2232 = vmatmul.bf16.gmra.mxu0 %v650
        %v2233 = vpop.f32.mrf.mxu0
        %v2234 = vadd.f32 %v2205, %v2233
        %v2235 = vpop.f32.mrf.mxu0
        %v2236 = vadd.f32 %v2207, %v2235
        %2237 = vmatmul.bf16.gmra.mxu0 %v654
        %v2238 = vpop.f32.mrf.mxu0
        %v2239 = vadd.f32 %v2210, %v2238
        %v2240 = vpop.f32.mrf.mxu0
        %v2241 = vadd.f32 %v2212, %v2240
        %2242 = vdwg.mxu0
        %2243 = vmatpush.bf16.msra.mxu0 %v1627
        %2244 = vmatpush.bf16.msra.mxu0 %v1619
        %2245 = vmatpush.bf16.msra.mxu0 %v1611
        %2246 = vmatpush.bf16.msra.mxu0 %v1603
        %2247 = vmatpush.bf16.msra.mxu0 %v1595
        %2248 = vmatpush.bf16.msra.mxu0 %v1587
        %2249 = vmatpush.bf16.msra.mxu0 %v1579
        %2250 = vmatpush.bf16.msra.mxu0 %v1571
        %2251 = vmatmul.bf16.gmra.mxu0 %v643
        %v2252 = vpop.f32.mrf.mxu0
        %v2253 = vadd.f32 %v2224, %v2252
        %v2254 = vpop.f32.mrf.mxu0
        %v2255 = vadd.f32 %v2226, %v2254
        %2256 = vmatmul.bf16.gmra.mxu0 %v647
        %v2257 = vpop.f32.mrf.mxu0
        %v2258 = vadd.f32 %v2229, %v2257
        %v2259 = vpop.f32.mrf.mxu0
        %v2260 = vadd.f32 %v2231, %v2259
        %2261 = vmatmul.bf16.gmra.mxu0 %v651
        %v2262 = vpop.f32.mrf.mxu0
        %v2263 = vadd.f32 %v2234, %v2262
        %v2264 = vpop.f32.mrf.mxu0
        %v2265 = vadd.f32 %v2236, %v2264
        %2266 = vmatmul.bf16.gmra.mxu0 %v655
        %v2267 = vpop.f32.mrf.mxu0
        %v2268 = vadd.f32 %v2239, %v2267
        %v2269 = vpop.f32.mrf.mxu0
        %v2270 = vadd.f32 %v2241, %v2269
        %2271 = vdwg.mxu0
        %2272 = vmatpush.bf16.msra.mxu0 %v1691
        %2273 = vmatpush.bf16.msra.mxu0 %v1683
        %2274 = vmatpush.bf16.msra.mxu0 %v1675
        %2275 = vmatpush.bf16.msra.mxu0 %v1667
        %2276 = vmatpush.bf16.msra.mxu0 %v1659
        %2277 = vmatpush.bf16.msra.mxu0 %v1651
        %2278 = vmatpush.bf16.msra.mxu0 %v1643
        %2279 = vmatpush.bf16.msra.mxu0 %v1635
        %2280 = vmatmul.bf16.gmra.mxu0 %v644
        %v2281 = vpop.f32.mrf.mxu0
        %v2282 = vadd.f32 %v2253, %v2281
        %v2283 = vpop.f32.mrf.mxu0
        %v2284 = vadd.f32 %v2255, %v2283
        %2285 = vmatmul.bf16.gmra.mxu0 %v648
        %v2286 = vpop.f32.mrf.mxu0
        %v2287 = vadd.f32 %v2258, %v2286
        %v2288 = vpop.f32.mrf.mxu0
        %v2289 = vadd.f32 %v2260, %v2288
        %2290 = vmatmul.bf16.gmra.mxu0 %v652
        %v2291 = vpop.f32.mrf.mxu0
        %v2292 = vadd.f32 %v2263, %v2291
        %v2293 = vpop.f32.mrf.mxu0
        %v2294 = vadd.f32 %v2265, %v2293
        %2295 = vmatmul.bf16.gmra.mxu0 %v656
        %v2296 = vpop.f32.mrf.mxu0
        %v2297 = vadd.f32 %v2268, %v2296
        %v2298 = vpop.f32.mrf.mxu0
        %v2299 = vadd.f32 %v2270, %v2298
        %2300 = vdwg.mxu0
        %2301 = vmatpush.bf16.msra.mxu0 %v1500
        %2302 = vmatpush.bf16.msra.mxu0 %v1492
        %2303 = vmatpush.bf16.msra.mxu0 %v1484
        %2304 = vmatpush.bf16.msra.mxu0 %v1476
        %2305 = vmatpush.bf16.msra.mxu0 %v1468
        %2306 = vmatpush.bf16.msra.mxu0 %v1460
        %2307 = vmatpush.bf16.msra.mxu0 %v1452
        %2308 = vmatpush.bf16.msra.mxu0 %v1444
        %2309 = vmatmul.bf16.gmra.mxu0 %v641
        %v2310 = vpop.f32.mrf.mxu0
        %v2311 = vadd.f32 0.0, %v2310
        %v2312 = vpop.f32.mrf.mxu0
        %v2313 = vadd.f32 0.0, %v2312
        %2314 = vmatmul.bf16.gmra.mxu0 %v645
        %v2315 = vpop.f32.mrf.mxu0
        %v2316 = vadd.f32 0.0, %v2315
        %v2317 = vpop.f32.mrf.mxu0
        %v2318 = vadd.f32 0.0, %v2317
        %2319 = vmatmul.bf16.gmra.mxu0 %v649
        %v2320 = vpop.f32.mrf.mxu0
        %v2321 = vadd.f32 0.0, %v2320
        %v2322 = vpop.f32.mrf.mxu0
        %v2323 = vadd.f32 0.0, %v2322
        %2324 = vmatmul.bf16.gmra.mxu0 %v653
        %v2325 = vpop.f32.mrf.mxu0
        %v2326 = vadd.f32 0.0, %v2325
        %v2327 = vpop.f32.mrf.mxu0
        %v2328 = vadd.f32 0.0, %v2327
        %2329 = vdwg.mxu0
        %2330 = vmatpush.bf16.msra.mxu0 %v1564
        %2331 = vmatpush.bf16.msra.mxu0 %v1556
        %2332 = vmatpush.bf16.msra.mxu0 %v1548
        %2333 = vmatpush.bf16.msra.mxu0 %v1540
        %2334 = vmatpush.bf16.msra.mxu0 %v1532
        %2335 = vmatpush.bf16.msra.mxu0 %v1524
        %2336 = vmatpush.bf16.msra.mxu0 %v1516
        %2337 = vmatpush.bf16.msra.mxu0 %v1508
        %2338 = vmatmul.bf16.gmra.mxu0 %v642
        %v2339 = vpop.f32.mrf.mxu0
        %v2340 = vadd.f32 %v2311, %v2339
        %v2341 = vpop.f32.mrf.mxu0
        %v2342 = vadd.f32 %v2313, %v2341
        %2343 = vmatmul.bf16.gmra.mxu0 %v646
        %v2344 = vpop.f32.mrf.mxu0
        %v2345 = vadd.f32 %v2316, %v2344
        %v2346 = vpop.f32.mrf.mxu0
        %v2347 = vadd.f32 %v2318, %v2346
        %2348 = vmatmul.bf16.gmra.mxu0 %v650
        %v2349 = vpop.f32.mrf.mxu0
        %v2350 = vadd.f32 %v2321, %v2349
        %v2351 = vpop.f32.mrf.mxu0
        %v2352 = vadd.f32 %v2323, %v2351
        %2353 = vmatmul.bf16.gmra.mxu0 %v654
        %v2354 = vpop.f32.mrf.mxu0
        %v2355 = vadd.f32 %v2326, %v2354
        %v2356 = vpop.f32.mrf.mxu0
        %v2357 = vadd.f32 %v2328, %v2356
        %2358 = vdwg.mxu0
        %2359 = vmatpush.bf16.msra.mxu0 %v1628
        %2360 = vmatpush.bf16.msra.mxu0 %v1620
        %2361 = vmatpush.bf16.msra.mxu0 %v1612
        %2362 = vmatpush.bf16.msra.mxu0 %v1604
        %2363 = vmatpush.bf16.msra.mxu0 %v1596
        %2364 = vmatpush.bf16.msra.mxu0 %v1588
        %2365 = vmatpush.bf16.msra.mxu0 %v1580
        %2366 = vmatpush.bf16.msra.mxu0 %v1572
        %2367 = vmatmul.bf16.gmra.mxu0 %v643
        %v2368 = vpop.f32.mrf.mxu0
        %v2369 = vadd.f32 %v2340, %v2368
        %v2370 = vpop.f32.mrf.mxu0
        %v2371 = vadd.f32 %v2342, %v2370
        %2372 = vmatmul.bf16.gmra.mxu0 %v647
        %v2373 = vpop.f32.mrf.mxu0
        %v2374 = vadd.f32 %v2345, %v2373
        %v2375 = vpop.f32.mrf.mxu0
        %v2376 = vadd.f32 %v2347, %v2375
        %2377 = vmatmul.bf16.gmra.mxu0 %v651
        %v2378 = vpop.f32.mrf.mxu0
        %v2379 = vadd.f32 %v2350, %v2378
        %v2380 = vpop.f32.mrf.mxu0
        %v2381 = vadd.f32 %v2352, %v2380
        %2382 = vmatmul.bf16.gmra.mxu0 %v655
        %v2383 = vpop.f32.mrf.mxu0
        %v2384 = vadd.f32 %v2355, %v2383
        %v2385 = vpop.f32.mrf.mxu0
        %v2386 = vadd.f32 %v2357, %v2385
        %2387 = vdwg.mxu0
        %2388 = vmatpush.bf16.msra.mxu0 %v1692
        %2389 = vmatpush.bf16.msra.mxu0 %v1684
        %2390 = vmatpush.bf16.msra.mxu0 %v1676
        %2391 = vmatpush.bf16.msra.mxu0 %v1668
        %2392 = vmatpush.bf16.msra.mxu0 %v1660
        %2393 = vmatpush.bf16.msra.mxu0 %v1652
        %2394 = vmatpush.bf16.msra.mxu0 %v1644
        %2395 = vmatpush.bf16.msra.mxu0 %v1636
        %2396 = vmatmul.bf16.gmra.mxu0 %v644
        %v2397 = vpop.f32.mrf.mxu0
        %v2398 = vadd.f32 %v2369, %v2397
        %v2399 = vpop.f32.mrf.mxu0
        %v2400 = vadd.f32 %v2371, %v2399
        %2401 = vmatmul.bf16.gmra.mxu0 %v648
        %v2402 = vpop.f32.mrf.mxu0
        %v2403 = vadd.f32 %v2374, %v2402
        %v2404 = vpop.f32.mrf.mxu0
        %v2405 = vadd.f32 %v2376, %v2404
        %2406 = vmatmul.bf16.gmra.mxu0 %v652
        %v2407 = vpop.f32.mrf.mxu0
        %v2408 = vadd.f32 %v2379, %v2407
        %v2409 = vpop.f32.mrf.mxu0
        %v2410 = vadd.f32 %v2381, %v2409
        %2411 = vmatmul.bf16.gmra.mxu0 %v656
        %v2412 = vpop.f32.mrf.mxu0
        %v2413 = vadd.f32 %v2384, %v2412
        %v2414 = vpop.f32.mrf.mxu0
        %v2415 = vadd.f32 %v2386, %v2414
        %2416 = vdwg.mxu0
        %2417 = vmatpush.bf16.msra.mxu0 %v1501
        %2418 = vmatpush.bf16.msra.mxu0 %v1493
        %2419 = vmatpush.bf16.msra.mxu0 %v1485
        %2420 = vmatpush.bf16.msra.mxu0 %v1477
        %2421 = vmatpush.bf16.msra.mxu0 %v1469
        %2422 = vmatpush.bf16.msra.mxu0 %v1461
        %2423 = vmatpush.bf16.msra.mxu0 %v1453
        %2424 = vmatpush.bf16.msra.mxu0 %v1445
        %2425 = vmatmul.bf16.gmra.mxu0 %v641
        %v2426 = vpop.f32.mrf.mxu0
        %v2427 = vadd.f32 0.0, %v2426
        %v2428 = vpop.f32.mrf.mxu0
        %v2429 = vadd.f32 0.0, %v2428
        %2430 = vmatmul.bf16.gmra.mxu0 %v645
        %v2431 = vpop.f32.mrf.mxu0
        %v2432 = vadd.f32 0.0, %v2431
        %v2433 = vpop.f32.mrf.mxu0
        %v2434 = vadd.f32 0.0, %v2433
        %2435 = vmatmul.bf16.gmra.mxu0 %v649
        %v2436 = vpop.f32.mrf.mxu0
        %v2437 = vadd.f32 0.0, %v2436
        %v2438 = vpop.f32.mrf.mxu0
        %v2439 = vadd.f32 0.0, %v2438
        %2440 = vmatmul.bf16.gmra.mxu0 %v653
        %v2441 = vpop.f32.mrf.mxu0
        %v2442 = vadd.f32 0.0, %v2441
        %v2443 = vpop.f32.mrf.mxu0
        %v2444 = vadd.f32 0.0, %v2443
        %2445 = vdwg.mxu0
        %2446 = vmatpush.bf16.msra.mxu0 %v1565
        %2447 = vmatpush.bf16.msra.mxu0 %v1557
        %2448 = vmatpush.bf16.msra.mxu0 %v1549
        %2449 = vmatpush.bf16.msra.mxu0 %v1541
        %2450 = vmatpush.bf16.msra.mxu0 %v1533
        %2451 = vmatpush.bf16.msra.mxu0 %v1525
        %2452 = vmatpush.bf16.msra.mxu0 %v1517
        %2453 = vmatpush.bf16.msra.mxu0 %v1509
        %2454 = vmatmul.bf16.gmra.mxu0 %v642
        %v2455 = vpop.f32.mrf.mxu0
        %v2456 = vadd.f32 %v2427, %v2455
        %v2457 = vpop.f32.mrf.mxu0
        %v2458 = vadd.f32 %v2429, %v2457
        %2459 = vmatmul.bf16.gmra.mxu0 %v646
        %v2460 = vpop.f32.mrf.mxu0
        %v2461 = vadd.f32 %v2432, %v2460
        %v2462 = vpop.f32.mrf.mxu0
        %v2463 = vadd.f32 %v2434, %v2462
        %2464 = vmatmul.bf16.gmra.mxu0 %v650
        %v2465 = vpop.f32.mrf.mxu0
        %v2466 = vadd.f32 %v2437, %v2465
        %v2467 = vpop.f32.mrf.mxu0
        %v2468 = vadd.f32 %v2439, %v2467
        %2469 = vmatmul.bf16.gmra.mxu0 %v654
        %v2470 = vpop.f32.mrf.mxu0
        %v2471 = vadd.f32 %v2442, %v2470
        %v2472 = vpop.f32.mrf.mxu0
        %v2473 = vadd.f32 %v2444, %v2472
        %2474 = vdwg.mxu0
        %2475 = vmatpush.bf16.msra.mxu0 %v1629
        %2476 = vmatpush.bf16.msra.mxu0 %v1621
        %2477 = vmatpush.bf16.msra.mxu0 %v1613
        %2478 = vmatpush.bf16.msra.mxu0 %v1605
        %2479 = vmatpush.bf16.msra.mxu0 %v1597
        %2480 = vmatpush.bf16.msra.mxu0 %v1589
        %2481 = vmatpush.bf16.msra.mxu0 %v1581
        %2482 = vmatpush.bf16.msra.mxu0 %v1573
        %2483 = vmatmul.bf16.gmra.mxu0 %v643
        %v2484 = vpop.f32.mrf.mxu0
        %v2485 = vadd.f32 %v2456, %v2484
        %v2486 = vpop.f32.mrf.mxu0
        %v2487 = vadd.f32 %v2458, %v2486
        %2488 = vmatmul.bf16.gmra.mxu0 %v647
        %v2489 = vpop.f32.mrf.mxu0
        %v2490 = vadd.f32 %v2461, %v2489
        %v2491 = vpop.f32.mrf.mxu0
        %v2492 = vadd.f32 %v2463, %v2491
        %2493 = vmatmul.bf16.gmra.mxu0 %v651
        %v2494 = vpop.f32.mrf.mxu0
        %v2495 = vadd.f32 %v2466, %v2494
        %v2496 = vpop.f32.mrf.mxu0
        %v2497 = vadd.f32 %v2468, %v2496
        %2498 = vmatmul.bf16.gmra.mxu0 %v655
        %v2499 = vpop.f32.mrf.mxu0
        %v2500 = vadd.f32 %v2471, %v2499
        %v2501 = vpop.f32.mrf.mxu0
        %v2502 = vadd.f32 %v2473, %v2501
        %2503 = vdwg.mxu0
        %2504 = vmatpush.bf16.msra.mxu0 %v1693
        %2505 = vmatpush.bf16.msra.mxu0 %v1685
        %2506 = vmatpush.bf16.msra.mxu0 %v1677
        %2507 = vmatpush.bf16.msra.mxu0 %v1669
        %2508 = vmatpush.bf16.msra.mxu0 %v1661
        %2509 = vmatpush.bf16.msra.mxu0 %v1653
        %2510 = vmatpush.bf16.msra.mxu0 %v1645
        %2511 = vmatpush.bf16.msra.mxu0 %v1637
        %2512 = vmatmul.bf16.gmra.mxu0 %v644
        %v2513 = vpop.f32.mrf.mxu0
        %v2514 = vadd.f32 %v2485, %v2513
        %v2515 = vpop.f32.mrf.mxu0
        %v2516 = vadd.f32 %v2487, %v2515
        %2517 = vmatmul.bf16.gmra.mxu0 %v648
        %v2518 = vpop.f32.mrf.mxu0
        %v2519 = vadd.f32 %v2490, %v2518
        %v2520 = vpop.f32.mrf.mxu0
        %v2521 = vadd.f32 %v2492, %v2520
        %2522 = vmatmul.bf16.gmra.mxu0 %v652
        %v2523 = vpop.f32.mrf.mxu0
        %v2524 = vadd.f32 %v2495, %v2523
        %v2525 = vpop.f32.mrf.mxu0
        %v2526 = vadd.f32 %v2497, %v2525
        %2527 = vmatmul.bf16.gmra.mxu0 %v656
        %v2528 = vpop.f32.mrf.mxu0
        %v2529 = vadd.f32 %v2500, %v2528
        %v2530 = vpop.f32.mrf.mxu0
        %v2531 = vadd.f32 %v2502, %v2530
        %2532 = vdwg.mxu0
        %2533 = vmatpush.bf16.msra.mxu0 %v1502
        %2534 = vmatpush.bf16.msra.mxu0 %v1494
        %2535 = vmatpush.bf16.msra.mxu0 %v1486
        %2536 = vmatpush.bf16.msra.mxu0 %v1478
        %2537 = vmatpush.bf16.msra.mxu0 %v1470
        %2538 = vmatpush.bf16.msra.mxu0 %v1462
        %2539 = vmatpush.bf16.msra.mxu0 %v1454
        %2540 = vmatpush.bf16.msra.mxu0 %v1446
        %2541 = vmatmul.bf16.gmra.mxu0 %v641
        %v2542 = vpop.f32.mrf.mxu0
        %v2543 = vadd.f32 0.0, %v2542
        %v2544 = vpop.f32.mrf.mxu0
        %v2545 = vadd.f32 0.0, %v2544
        %2546 = vmatmul.bf16.gmra.mxu0 %v645
        %v2547 = vpop.f32.mrf.mxu0
        %v2548 = vadd.f32 0.0, %v2547
        %v2549 = vpop.f32.mrf.mxu0
        %v2550 = vadd.f32 0.0, %v2549
        %2551 = vmatmul.bf16.gmra.mxu0 %v649
        %v2552 = vpop.f32.mrf.mxu0
        %v2553 = vadd.f32 0.0, %v2552
        %v2554 = vpop.f32.mrf.mxu0
        %v2555 = vadd.f32 0.0, %v2554
        %2556 = vmatmul.bf16.gmra.mxu0 %v653
        %v2557 = vpop.f32.mrf.mxu0
        %v2558 = vadd.f32 0.0, %v2557
        %v2559 = vpop.f32.mrf.mxu0
        %v2560 = vadd.f32 0.0, %v2559
        %2561 = vdwg.mxu0
        %2562 = vmatpush.bf16.msra.mxu0 %v1566
        %2563 = vmatpush.bf16.msra.mxu0 %v1558
        %2564 = vmatpush.bf16.msra.mxu0 %v1550
        %2565 = vmatpush.bf16.msra.mxu0 %v1542
        %2566 = vmatpush.bf16.msra.mxu0 %v1534
        %2567 = vmatpush.bf16.msra.mxu0 %v1526
        %2568 = vmatpush.bf16.msra.mxu0 %v1518
        %2569 = vmatpush.bf16.msra.mxu0 %v1510
        %2570 = vmatmul.bf16.gmra.mxu0 %v642
        %v2571 = vpop.f32.mrf.mxu0
        %v2572 = vadd.f32 %v2543, %v2571
        %v2573 = vpop.f32.mrf.mxu0
        %v2574 = vadd.f32 %v2545, %v2573
        %2575 = vmatmul.bf16.gmra.mxu0 %v646
        %v2576 = vpop.f32.mrf.mxu0
        %v2577 = vadd.f32 %v2548, %v2576
        %v2578 = vpop.f32.mrf.mxu0
        %v2579 = vadd.f32 %v2550, %v2578
        %2580 = vmatmul.bf16.gmra.mxu0 %v650
        %v2581 = vpop.f32.mrf.mxu0
        %v2582 = vadd.f32 %v2553, %v2581
        %v2583 = vpop.f32.mrf.mxu0
        %v2584 = vadd.f32 %v2555, %v2583
        %2585 = vmatmul.bf16.gmra.mxu0 %v654
        %v2586 = vpop.f32.mrf.mxu0
        %v2587 = vadd.f32 %v2558, %v2586
        %v2588 = vpop.f32.mrf.mxu0
        %v2589 = vadd.f32 %v2560, %v2588
        %2590 = vdwg.mxu0
        %2591 = vmatpush.bf16.msra.mxu0 %v1630
        %2592 = vmatpush.bf16.msra.mxu0 %v1622
        %2593 = vmatpush.bf16.msra.mxu0 %v1614
        %2594 = vmatpush.bf16.msra.mxu0 %v1606
        %2595 = vmatpush.bf16.msra.mxu0 %v1598
        %2596 = vmatpush.bf16.msra.mxu0 %v1590
        %2597 = vmatpush.bf16.msra.mxu0 %v1582
        %2598 = vmatpush.bf16.msra.mxu0 %v1574
        %2599 = vmatmul.bf16.gmra.mxu0 %v643
        %v2600 = vpop.f32.mrf.mxu0
        %v2601 = vadd.f32 %v2572, %v2600
        %v2602 = vpop.f32.mrf.mxu0
        %v2603 = vadd.f32 %v2574, %v2602
        %2604 = vmatmul.bf16.gmra.mxu0 %v647
        %v2605 = vpop.f32.mrf.mxu0
        %v2606 = vadd.f32 %v2577, %v2605
        %v2607 = vpop.f32.mrf.mxu0
        %v2608 = vadd.f32 %v2579, %v2607
        %2609 = vmatmul.bf16.gmra.mxu0 %v651
        %v2610 = vpop.f32.mrf.mxu0
        %v2611 = vadd.f32 %v2582, %v2610
        %v2612 = vpop.f32.mrf.mxu0
        %v2613 = vadd.f32 %v2584, %v2612
        %2614 = vmatmul.bf16.gmra.mxu0 %v655
        %v2615 = vpop.f32.mrf.mxu0
        %v2616 = vadd.f32 %v2587, %v2615
        %v2617 = vpop.f32.mrf.mxu0
        %v2618 = vadd.f32 %v2589, %v2617
        %2619 = vdwg.mxu0
        %2620 = vmatpush.bf16.msra.mxu0 %v1694
        %2621 = vmatpush.bf16.msra.mxu0 %v1686
        %2622 = vmatpush.bf16.msra.mxu0 %v1678
        %2623 = vmatpush.bf16.msra.mxu0 %v1670
        %2624 = vmatpush.bf16.msra.mxu0 %v1662
        %2625 = vmatpush.bf16.msra.mxu0 %v1654
        %2626 = vmatpush.bf16.msra.mxu0 %v1646
        %2627 = vmatpush.bf16.msra.mxu0 %v1638
        %2628 = vmatmul.bf16.gmra.mxu0 %v644
        %v2629 = vpop.f32.mrf.mxu0
        %v2630 = vadd.f32 %v2601, %v2629
        %v2631 = vpop.f32.mrf.mxu0
        %v2632 = vadd.f32 %v2603, %v2631
        %2633 = vmatmul.bf16.gmra.mxu0 %v648
        %v2634 = vpop.f32.mrf.mxu0
        %v2635 = vadd.f32 %v2606, %v2634
        %v2636 = vpop.f32.mrf.mxu0
        %v2637 = vadd.f32 %v2608, %v2636
        %2638 = vmatmul.bf16.gmra.mxu0 %v652
        %v2639 = vpop.f32.mrf.mxu0
        %v2640 = vadd.f32 %v2611, %v2639
        %v2641 = vpop.f32.mrf.mxu0
        %v2642 = vadd.f32 %v2613, %v2641
        %2643 = vmatmul.bf16.gmra.mxu0 %v656
        %v2644 = vpop.f32.mrf.mxu0
        %v2645 = vadd.f32 %v2616, %v2644
        %v2646 = vpop.f32.mrf.mxu0
        %v2647 = vadd.f32 %v2618, %v2646
        %2648 = vdwg.mxu0
        %2649 = vmatpush.bf16.msra.mxu0 %v1503
        %2650 = vmatpush.bf16.msra.mxu0 %v1495
        %2651 = vmatpush.bf16.msra.mxu0 %v1487
        %2652 = vmatpush.bf16.msra.mxu0 %v1479
        %2653 = vmatpush.bf16.msra.mxu0 %v1471
        %2654 = vmatpush.bf16.msra.mxu0 %v1463
        %2655 = vmatpush.bf16.msra.mxu0 %v1455
        %2656 = vmatpush.bf16.msra.mxu0 %v1447
        %2657 = vmatmul.bf16.gmra.mxu0 %v641
        %v2658 = vpop.f32.mrf.mxu0
        %v2659 = vadd.f32 0.0, %v2658
        %v2660 = vpop.f32.mrf.mxu0
        %v2661 = vadd.f32 0.0, %v2660
        %2662 = vmatmul.bf16.gmra.mxu0 %v645
        %v2663 = vpop.f32.mrf.mxu0
        %v2664 = vadd.f32 0.0, %v2663
        %v2665 = vpop.f32.mrf.mxu0
        %v2666 = vadd.f32 0.0, %v2665
        %2667 = vmatmul.bf16.gmra.mxu0 %v649
        %v2668 = vpop.f32.mrf.mxu0
        %v2669 = vadd.f32 0.0, %v2668
        %v2670 = vpop.f32.mrf.mxu0
        %v2671 = vadd.f32 0.0, %v2670
        %2672 = vmatmul.bf16.gmra.mxu0 %v653
        %v2673 = vpop.f32.mrf.mxu0
        %v2674 = vadd.f32 0.0, %v2673
        %v2675 = vpop.f32.mrf.mxu0
        %v2676 = vadd.f32 0.0, %v2675
        %2677 = vdwg.mxu0
        %2678 = vmatpush.bf16.msra.mxu0 %v1567
        %2679 = vmatpush.bf16.msra.mxu0 %v1559
        %2680 = vmatpush.bf16.msra.mxu0 %v1551
        %2681 = vmatpush.bf16.msra.mxu0 %v1543
        %2682 = vmatpush.bf16.msra.mxu0 %v1535
        %2683 = vmatpush.bf16.msra.mxu0 %v1527
        %2684 = vmatpush.bf16.msra.mxu0 %v1519
        %2685 = vmatpush.bf16.msra.mxu0 %v1511
        %2686 = vmatmul.bf16.gmra.mxu0 %v642
        %v2687 = vpop.f32.mrf.mxu0
        %v2688 = vadd.f32 %v2659, %v2687
        %v2689 = vpop.f32.mrf.mxu0
        %v2690 = vadd.f32 %v2661, %v2689
        %2691 = vmatmul.bf16.gmra.mxu0 %v646
        %v2692 = vpop.f32.mrf.mxu0
        %v2693 = vadd.f32 %v2664, %v2692
        %v2694 = vpop.f32.mrf.mxu0
        %v2695 = vadd.f32 %v2666, %v2694
        %2696 = vmatmul.bf16.gmra.mxu0 %v650
        %v2697 = vpop.f32.mrf.mxu0
        %v2698 = vadd.f32 %v2669, %v2697
        %v2699 = vpop.f32.mrf.mxu0
        %v2700 = vadd.f32 %v2671, %v2699
        %2701 = vmatmul.bf16.gmra.mxu0 %v654
        %v2702 = vpop.f32.mrf.mxu0
        %v2703 = vadd.f32 %v2674, %v2702
        %v2704 = vpop.f32.mrf.mxu0
        %v2705 = vadd.f32 %v2676, %v2704
        %2706 = vdwg.mxu0
        %2707 = vmatpush.bf16.msra.mxu0 %v1631
        %2708 = vmatpush.bf16.msra.mxu0 %v1623
        %2709 = vmatpush.bf16.msra.mxu0 %v1615
        %2710 = vmatpush.bf16.msra.mxu0 %v1607
        %2711 = vmatpush.bf16.msra.mxu0 %v1599
        %2712 = vmatpush.bf16.msra.mxu0 %v1591
        %2713 = vmatpush.bf16.msra.mxu0 %v1583
        %2714 = vmatpush.bf16.msra.mxu0 %v1575
        %2715 = vmatmul.bf16.gmra.mxu0 %v643
        %v2716 = vpop.f32.mrf.mxu0
        %v2717 = vadd.f32 %v2688, %v2716
        %v2718 = vpop.f32.mrf.mxu0
        %v2719 = vadd.f32 %v2690, %v2718
        %2720 = vmatmul.bf16.gmra.mxu0 %v647
        %v2721 = vpop.f32.mrf.mxu0
        %v2722 = vadd.f32 %v2693, %v2721
        %v2723 = vpop.f32.mrf.mxu0
        %v2724 = vadd.f32 %v2695, %v2723
        %2725 = vmatmul.bf16.gmra.mxu0 %v651
        %v2726 = vpop.f32.mrf.mxu0
        %v2727 = vadd.f32 %v2698, %v2726
        %v2728 = vpop.f32.mrf.mxu0
        %v2729 = vadd.f32 %v2700, %v2728
        %2730 = vmatmul.bf16.gmra.mxu0 %v655
        %v2731 = vpop.f32.mrf.mxu0
        %v2732 = vadd.f32 %v2703, %v2731
        %v2733 = vpop.f32.mrf.mxu0
        %v2734 = vadd.f32 %v2705, %v2733
        %2735 = vdwg.mxu0
        %2736 = vmatpush.bf16.msra.mxu0 %v1695
        %2737 = vmatpush.bf16.msra.mxu0 %v1687
        %2738 = vmatpush.bf16.msra.mxu0 %v1679
        %2739 = vmatpush.bf16.msra.mxu0 %v1671
        %2740 = vmatpush.bf16.msra.mxu0 %v1663
        %2741 = vmatpush.bf16.msra.mxu0 %v1655
        %2742 = vmatpush.bf16.msra.mxu0 %v1647
        %2743 = vmatpush.bf16.msra.mxu0 %v1639
        %2744 = vmatmul.bf16.gmra.mxu0 %v644
        %v2745 = vpop.f32.mrf.mxu0
        %v2746 = vadd.f32 %v2717, %v2745
        %v2747 = vpop.f32.mrf.mxu0
        %v2748 = vadd.f32 %v2719, %v2747
        %2749 = vmatmul.bf16.gmra.mxu0 %v648
        %v2750 = vpop.f32.mrf.mxu0
        %v2751 = vadd.f32 %v2722, %v2750
        %v2752 = vpop.f32.mrf.mxu0
        %v2753 = vadd.f32 %v2724, %v2752
        %2754 = vmatmul.bf16.gmra.mxu0 %v652
        %v2755 = vpop.f32.mrf.mxu0
        %v2756 = vadd.f32 %v2727, %v2755
        %v2757 = vpop.f32.mrf.mxu0
        %v2758 = vadd.f32 %v2729, %v2757
        %2759 = vmatmul.bf16.gmra.mxu0 %v656
        %v2760 = vpop.f32.mrf.mxu0
        %v2761 = vadd.f32 %v2732, %v2760
        %v2762 = vpop.f32.mrf.mxu0
        %v2763 = vadd.f32 %v2734, %v2762
        %2764 = vdwg.mxu0
        %2765 = vmatpush.bf16.msra.mxu0 %v1504
        %2766 = vmatpush.bf16.msra.mxu0 %v1496
        %2767 = vmatpush.bf16.msra.mxu0 %v1488
        %2768 = vmatpush.bf16.msra.mxu0 %v1480
        %2769 = vmatpush.bf16.msra.mxu0 %v1472
        %2770 = vmatpush.bf16.msra.mxu0 %v1464
        %2771 = vmatpush.bf16.msra.mxu0 %v1456
        %2772 = vmatpush.bf16.msra.mxu0 %v1448
        %2773 = vmatmul.bf16.gmra.mxu0 %v641
        %v2774 = vpop.f32.mrf.mxu0
        %v2775 = vadd.f32 0.0, %v2774
        %v2776 = vpop.f32.mrf.mxu0
        %v2777 = vadd.f32 0.0, %v2776
        %2778 = vmatmul.bf16.gmra.mxu0 %v645
        %v2779 = vpop.f32.mrf.mxu0
        %v2780 = vadd.f32 0.0, %v2779
        %v2781 = vpop.f32.mrf.mxu0
        %v2782 = vadd.f32 0.0, %v2781
        %2783 = vmatmul.bf16.gmra.mxu0 %v649
        %v2784 = vpop.f32.mrf.mxu0
        %v2785 = vadd.f32 0.0, %v2784
        %v2786 = vpop.f32.mrf.mxu0
        %v2787 = vadd.f32 0.0, %v2786
        %2788 = vmatmul.bf16.gmra.mxu0 %v653
        %v2789 = vpop.f32.mrf.mxu0
        %v2790 = vadd.f32 0.0, %v2789
        %v2791 = vpop.f32.mrf.mxu0
        %v2792 = vadd.f32 0.0, %v2791
        %2793 = vdwg.mxu0
        %2794 = vmatpush.bf16.msra.mxu0 %v1568
        %2795 = vmatpush.bf16.msra.mxu0 %v1560
        %2796 = vmatpush.bf16.msra.mxu0 %v1552
        %2797 = vmatpush.bf16.msra.mxu0 %v1544
        %2798 = vmatpush.bf16.msra.mxu0 %v1536
        %2799 = vmatpush.bf16.msra.mxu0 %v1528
        %2800 = vmatpush.bf16.msra.mxu0 %v1520
        %2801 = vmatpush.bf16.msra.mxu0 %v1512
        %2802 = vmatmul.bf16.gmra.mxu0 %v642
        %v2803 = vpop.f32.mrf.mxu0
        %v2804 = vadd.f32 %v2775, %v2803
        %v2805 = vpop.f32.mrf.mxu0
        %v2806 = vadd.f32 %v2777, %v2805
        %2807 = vmatmul.bf16.gmra.mxu0 %v646
        %v2808 = vpop.f32.mrf.mxu0
        %v2809 = vadd.f32 %v2780, %v2808
        %v2810 = vpop.f32.mrf.mxu0
        %v2811 = vadd.f32 %v2782, %v2810
        %2812 = vmatmul.bf16.gmra.mxu0 %v650
        %v2813 = vpop.f32.mrf.mxu0
        %v2814 = vadd.f32 %v2785, %v2813
        %v2815 = vpop.f32.mrf.mxu0
        %v2816 = vadd.f32 %v2787, %v2815
        %2817 = vmatmul.bf16.gmra.mxu0 %v654
        %v2818 = vpop.f32.mrf.mxu0
        %v2819 = vadd.f32 %v2790, %v2818
        %v2820 = vpop.f32.mrf.mxu0
        %v2821 = vadd.f32 %v2792, %v2820
        %2822 = vdwg.mxu0
        %2823 = vmatpush.bf16.msra.mxu0 %v1632
        %2824 = vmatpush.bf16.msra.mxu0 %v1624
        %2825 = vmatpush.bf16.msra.mxu0 %v1616
        %2826 = vmatpush.bf16.msra.mxu0 %v1608
        %2827 = vmatpush.bf16.msra.mxu0 %v1600
        %2828 = vmatpush.bf16.msra.mxu0 %v1592
        %2829 = vmatpush.bf16.msra.mxu0 %v1584
        %2830 = vmatpush.bf16.msra.mxu0 %v1576
        %2831 = vmatmul.bf16.gmra.mxu0 %v643
        %v2832 = vpop.f32.mrf.mxu0
        %v2833 = vadd.f32 %v2804, %v2832
        %v2834 = vpop.f32.mrf.mxu0
        %v2835 = vadd.f32 %v2806, %v2834
        %2836 = vmatmul.bf16.gmra.mxu0 %v647
        %v2837 = vpop.f32.mrf.mxu0
        %v2838 = vadd.f32 %v2809, %v2837
        %v2839 = vpop.f32.mrf.mxu0
        %v2840 = vadd.f32 %v2811, %v2839
        %2841 = vmatmul.bf16.gmra.mxu0 %v651
        %v2842 = vpop.f32.mrf.mxu0
        %v2843 = vadd.f32 %v2814, %v2842
        %v2844 = vpop.f32.mrf.mxu0
        %v2845 = vadd.f32 %v2816, %v2844
        %2846 = vmatmul.bf16.gmra.mxu0 %v655
        %v2847 = vpop.f32.mrf.mxu0
        %v2848 = vadd.f32 %v2819, %v2847
        %v2849 = vpop.f32.mrf.mxu0
        %v2850 = vadd.f32 %v2821, %v2849
        %2851 = vdwg.mxu0
        %2852 = vmatpush.bf16.msra.mxu0 %v1696
        %2853 = vmatpush.bf16.msra.mxu0 %v1688
        %2854 = vmatpush.bf16.msra.mxu0 %v1680
        %2855 = vmatpush.bf16.msra.mxu0 %v1672
        %2856 = vmatpush.bf16.msra.mxu0 %v1664
        %2857 = vmatpush.bf16.msra.mxu0 %v1656
        %2858 = vmatpush.bf16.msra.mxu0 %v1648
        %2859 = vmatpush.bf16.msra.mxu0 %v1640
        %2860 = vmatmul.bf16.gmra.mxu0 %v644
        %v2861 = vpop.f32.mrf.mxu0
        %v2862 = vadd.f32 %v2833, %v2861
        %v2863 = vpop.f32.mrf.mxu0
        %v2864 = vadd.f32 %v2835, %v2863
        %2865 = vmatmul.bf16.gmra.mxu0 %v648
        %v2866 = vpop.f32.mrf.mxu0
        %v2867 = vadd.f32 %v2838, %v2866
        %v2868 = vpop.f32.mrf.mxu0
        %v2869 = vadd.f32 %v2840, %v2868
        %2870 = vmatmul.bf16.gmra.mxu0 %v652
        %v2871 = vpop.f32.mrf.mxu0
        %v2872 = vadd.f32 %v2843, %v2871
        %v2873 = vpop.f32.mrf.mxu0
        %v2874 = vadd.f32 %v2845, %v2873
        %2875 = vmatmul.bf16.gmra.mxu0 %v656
        %v2876 = vpop.f32.mrf.mxu0
        %v2877 = vadd.f32 %v2848, %v2876
        %v2878 = vpop.f32.mrf.mxu0
        %v2879 = vadd.f32 %v2850, %v2878
        %2880 = vdwg.mxu0
        %v2881 = vpack.c.bf16 %v2166, %v2050
        %v2882 = vpack.c.bf16 %v2398, %v2282
        %v2883 = vpack.c.bf16 %v2630, %v2514
        %v2884 = vpack.c.bf16 %v2862, %v2746
        %v2885 = vpack.c.bf16 %v2168, %v2052
        %v2886 = vpack.c.bf16 %v2400, %v2284
        %v2887 = vpack.c.bf16 %v2632, %v2516
        %v2888 = vpack.c.bf16 %v2864, %v2748
        %v2889 = vpack.c.bf16 %v2171, %v2055
        %v2890 = vpack.c.bf16 %v2403, %v2287
        %v2891 = vpack.c.bf16 %v2635, %v2519
        %v2892 = vpack.c.bf16 %v2867, %v2751
        %v2893 = vpack.c.bf16 %v2173, %v2057
        %v2894 = vpack.c.bf16 %v2405, %v2289
        %v2895 = vpack.c.bf16 %v2637, %v2521
        %v2896 = vpack.c.bf16 %v2869, %v2753
        %v2897 = vpack.c.bf16 %v2176, %v2060
        %v2898 = vpack.c.bf16 %v2408, %v2292
        %v2899 = vpack.c.bf16 %v2640, %v2524
        %v2900 = vpack.c.bf16 %v2872, %v2756
        %v2901 = vpack.c.bf16 %v2178, %v2062
        %v2902 = vpack.c.bf16 %v2410, %v2294
        %v2903 = vpack.c.bf16 %v2642, %v2526
        %v2904 = vpack.c.bf16 %v2874, %v2758
        %v2905 = vpack.c.bf16 %v2181, %v2065
        %v2906 = vpack.c.bf16 %v2413, %v2297
        %v2907 = vpack.c.bf16 %v2645, %v2529
        %v2908 = vpack.c.bf16 %v2877, %v2761
        %v2909 = vpack.c.bf16 %v2183, %v2067
        %v2910 = vpack.c.bf16 %v2415, %v2299
        %v2911 = vpack.c.bf16 %v2647, %v2531
        %v2912 = vpack.c.bf16 %v2879, %v2763
        %v2913 = vld [vmem:[%s309] sm:$0xf]
        %v2914 = vld [vmem:[%s309 + $0x4] sm:$0xf]
        %v2915 = vld [vmem:[%s309 + $0x8] sm:$0xf]
        %v2916 = vld [vmem:[%s309 + $0xc] sm:$0xf]
        %v2917 = vld [vmem:[%s309 + $0x10] sm:$0xf]
        %v2918 = vld [vmem:[%s309 + $0x14] sm:$0xf]
        %v2919 = vld [vmem:[%s309 + $0x18] sm:$0xf]
        %v2920 = vld [vmem:[%s309 + $0x1c] sm:$0xf]
        %v2921 = vld [vmem:[%s309 + $0x20] sm:$0xf]
        %v2922 = vld [vmem:[%s309 + $0x24] sm:$0xf]
        %v2923 = vld [vmem:[%s309 + $0x28] sm:$0xf]
        %v2924 = vld [vmem:[%s309 + $0x2c] sm:$0xf]
        %v2925 = vld [vmem:[%s309 + $0x30] sm:$0xf]
        %v2926 = vld [vmem:[%s309 + $0x34] sm:$0xf]
        %v2927 = vld [vmem:[%s309 + $0x38] sm:$0xf]
        %v2928 = vld [vmem:[%s309 + $0x3c] sm:$0xf]
        %v2929 = vld [vmem:[%s309 + $0x40] sm:$0xf]
        %v2930 = vld [vmem:[%s309 + $0x44] sm:$0xf]
        %v2931 = vld [vmem:[%s309 + $0x48] sm:$0xf]
        %v2932 = vld [vmem:[%s309 + $0x4c] sm:$0xf]
        %v2933 = vld [vmem:[%s309 + $0x50] sm:$0xf]
        %v2934 = vld [vmem:[%s309 + $0x54] sm:$0xf]
        %v2935 = vld [vmem:[%s309 + $0x58] sm:$0xf]
        %v2936 = vld [vmem:[%s309 + $0x5c] sm:$0xf]
        %v2937 = vld [vmem:[%s309 + $0x60] sm:$0xf]
        %v2938 = vld [vmem:[%s309 + $0x64] sm:$0xf]
        %v2939 = vld [vmem:[%s309 + $0x68] sm:$0xf]
        %v2940 = vld [vmem:[%s309 + $0x6c] sm:$0xf]
        %v2941 = vld [vmem:[%s309 + $0x70] sm:$0xf]
        %v2942 = vld [vmem:[%s309 + $0x74] sm:$0xf]
        %v2943 = vld [vmem:[%s309 + $0x78] sm:$0xf]
        %v2944 = vld [vmem:[%s309 + $0x7c] sm:$0xf]
        %v2945 = vld [vmem:[%s309 + $0x80] sm:$0xf]
        %v2946 = vld [vmem:[%s309 + $0x84] sm:$0xf]
        %v2947 = vld [vmem:[%s309 + $0x88] sm:$0xf]
        %v2948 = vld [vmem:[%s309 + $0x8c] sm:$0xf]
        %v2949 = vld [vmem:[%s309 + $0x90] sm:$0xf]
        %v2950 = vld [vmem:[%s309 + $0x94] sm:$0xf]
        %v2951 = vld [vmem:[%s309 + $0x98] sm:$0xf]
        %v2952 = vld [vmem:[%s309 + $0x9c] sm:$0xf]
        %v2953 = vld [vmem:[%s309 + $0xa0] sm:$0xf]
        %v2954 = vld [vmem:[%s309 + $0xa4] sm:$0xf]
        %v2955 = vld [vmem:[%s309 + $0xa8] sm:$0xf]
        %v2956 = vld [vmem:[%s309 + $0xac] sm:$0xf]
        %v2957 = vld [vmem:[%s309 + $0xb0] sm:$0xf]
        %v2958 = vld [vmem:[%s309 + $0xb4] sm:$0xf]
        %v2959 = vld [vmem:[%s309 + $0xb8] sm:$0xf]
        %v2960 = vld [vmem:[%s309 + $0xbc] sm:$0xf]
        %v2961 = vld [vmem:[%s309 + $0xc0] sm:$0xf]
        %v2962 = vld [vmem:[%s309 + $0xc4] sm:$0xf]
        %v2963 = vld [vmem:[%s309 + $0xc8] sm:$0xf]
        %v2964 = vld [vmem:[%s309 + $0xcc] sm:$0xf]
        %v2965 = vld [vmem:[%s309 + $0xd0] sm:$0xf]
        %v2966 = vld [vmem:[%s309 + $0xd4] sm:$0xf]
        %v2967 = vld [vmem:[%s309 + $0xd8] sm:$0xf]
        %v2968 = vld [vmem:[%s309 + $0xdc] sm:$0xf]
        %v2969 = vld [vmem:[%s309 + $0xe0] sm:$0xf]
        %v2970 = vld [vmem:[%s309 + $0xe4] sm:$0xf]
        %v2971 = vld [vmem:[%s309 + $0xe8] sm:$0xf]
        %v2972 = vld [vmem:[%s309 + $0xec] sm:$0xf]
        %v2973 = vld [vmem:[%s309 + $0xf0] sm:$0xf]
        %v2974 = vld [vmem:[%s309 + $0xf4] sm:$0xf]
        %v2975 = vld [vmem:[%s309 + $0xf8] sm:$0xf]
        %v2976 = vld [vmem:[%s309 + $0xfc] sm:$0xf]
        %v2977 = vld [vmem:[%s309 + $0x100] sm:$0xf]
        %v2978 = vld [vmem:[%s309 + $0x104] sm:$0xf]
        %v2979 = vld [vmem:[%s309 + $0x108] sm:$0xf]
        %v2980 = vld [vmem:[%s309 + $0x10c] sm:$0xf]
        %v2981 = vld [vmem:[%s309 + $0x110] sm:$0xf]
        %v2982 = vld [vmem:[%s309 + $0x114] sm:$0xf]
        %v2983 = vld [vmem:[%s309 + $0x118] sm:$0xf]
        %v2984 = vld [vmem:[%s309 + $0x11c] sm:$0xf]
        %v2985 = vld [vmem:[%s309 + $0x120] sm:$0xf]
        %v2986 = vld [vmem:[%s309 + $0x124] sm:$0xf]
        %v2987 = vld [vmem:[%s309 + $0x128] sm:$0xf]
        %v2988 = vld [vmem:[%s309 + $0x12c] sm:$0xf]
        %v2989 = vld [vmem:[%s309 + $0x130] sm:$0xf]
        %v2990 = vld [vmem:[%s309 + $0x134] sm:$0xf]
        %v2991 = vld [vmem:[%s309 + $0x138] sm:$0xf]
        %v2992 = vld [vmem:[%s309 + $0x13c] sm:$0xf]
        %v2993 = vld [vmem:[%s309 + $0x140] sm:$0xf]
        %v2994 = vld [vmem:[%s309 + $0x144] sm:$0xf]
        %v2995 = vld [vmem:[%s309 + $0x148] sm:$0xf]
        %v2996 = vld [vmem:[%s309 + $0x14c] sm:$0xf]
        %v2997 = vld [vmem:[%s309 + $0x150] sm:$0xf]
        %v2998 = vld [vmem:[%s309 + $0x154] sm:$0xf]
        %v2999 = vld [vmem:[%s309 + $0x158] sm:$0xf]
        %v3000 = vld [vmem:[%s309 + $0x15c] sm:$0xf]
        %v3001 = vld [vmem:[%s309 + $0x160] sm:$0xf]
        %v3002 = vld [vmem:[%s309 + $0x164] sm:$0xf]
        %v3003 = vld [vmem:[%s309 + $0x168] sm:$0xf]
        %v3004 = vld [vmem:[%s309 + $0x16c] sm:$0xf]
        %v3005 = vld [vmem:[%s309 + $0x170] sm:$0xf]
        %v3006 = vld [vmem:[%s309 + $0x174] sm:$0xf]
        %v3007 = vld [vmem:[%s309 + $0x178] sm:$0xf]
        %v3008 = vld [vmem:[%s309 + $0x17c] sm:$0xf]
        %v3009 = vld [vmem:[%s309 + $0x180] sm:$0xf]
        %v3010 = vld [vmem:[%s309 + $0x184] sm:$0xf]
        %v3011 = vld [vmem:[%s309 + $0x188] sm:$0xf]
        %v3012 = vld [vmem:[%s309 + $0x18c] sm:$0xf]
        %v3013 = vld [vmem:[%s309 + $0x190] sm:$0xf]
        %v3014 = vld [vmem:[%s309 + $0x194] sm:$0xf]
        %v3015 = vld [vmem:[%s309 + $0x198] sm:$0xf]
        %v3016 = vld [vmem:[%s309 + $0x19c] sm:$0xf]
        %v3017 = vld [vmem:[%s309 + $0x1a0] sm:$0xf]
        %v3018 = vld [vmem:[%s309 + $0x1a4] sm:$0xf]
        %v3019 = vld [vmem:[%s309 + $0x1a8] sm:$0xf]
        %v3020 = vld [vmem:[%s309 + $0x1ac] sm:$0xf]
        %v3021 = vld [vmem:[%s309 + $0x1b0] sm:$0xf]
        %v3022 = vld [vmem:[%s309 + $0x1b4] sm:$0xf]
        %v3023 = vld [vmem:[%s309 + $0x1b8] sm:$0xf]
        %v3024 = vld [vmem:[%s309 + $0x1bc] sm:$0xf]
        %v3025 = vld [vmem:[%s309 + $0x1c0] sm:$0xf]
        %v3026 = vld [vmem:[%s309 + $0x1c4] sm:$0xf]
        %v3027 = vld [vmem:[%s309 + $0x1c8] sm:$0xf]
        %v3028 = vld [vmem:[%s309 + $0x1cc] sm:$0xf]
        %v3029 = vld [vmem:[%s309 + $0x1d0] sm:$0xf]
        %v3030 = vld [vmem:[%s309 + $0x1d4] sm:$0xf]
        %v3031 = vld [vmem:[%s309 + $0x1d8] sm:$0xf]
        %v3032 = vld [vmem:[%s309 + $0x1dc] sm:$0xf]
        %v3033 = vld [vmem:[%s309 + $0x1e0] sm:$0xf]
        %v3034 = vld [vmem:[%s309 + $0x1e4] sm:$0xf]
        %v3035 = vld [vmem:[%s309 + $0x1e8] sm:$0xf]
        %v3036 = vld [vmem:[%s309 + $0x1ec] sm:$0xf]
        %v3037 = vld [vmem:[%s309 + $0x1f0] sm:$0xf]
        %v3038 = vld [vmem:[%s309 + $0x1f4] sm:$0xf]
        %v3039 = vld [vmem:[%s309 + $0x1f8] sm:$0xf]
        %v3040 = vld [vmem:[%s309 + $0x1fc] sm:$0xf]
        %v3073 = vunpack.c.l.b16 %v2881
        %v3074 = vunpack.c.h.b16 %v2881
        %v3075 = vunpack.c.l.b16 %v2882
        %v3076 = vunpack.c.h.b16 %v2882
        %v3077 = vunpack.c.l.b16 %v2883
        %v3078 = vunpack.c.h.b16 %v2883
        %v3079 = vunpack.c.l.b16 %v2884
        %v3080 = vunpack.c.h.b16 %v2884
        %v3081 = vunpack.c.l.b16 %v2885
        %v3082 = vunpack.c.h.b16 %v2885
        %v3083 = vunpack.c.l.b16 %v2886
        %v3084 = vunpack.c.h.b16 %v2886
        %v3085 = vunpack.c.l.b16 %v2887
        %v3086 = vunpack.c.h.b16 %v2887
        %v3087 = vunpack.c.l.b16 %v2888
        %v3088 = vunpack.c.h.b16 %v2888
        %v3089 = vunpack.c.l.b16 %v2889
        %v3090 = vunpack.c.h.b16 %v2889
        %v3091 = vunpack.c.l.b16 %v2890
        %v3092 = vunpack.c.h.b16 %v2890
        %v3093 = vunpack.c.l.b16 %v2891
        %v3094 = vunpack.c.h.b16 %v2891
        %v3095 = vunpack.c.l.b16 %v2892
        %v3096 = vunpack.c.h.b16 %v2892
        %v3097 = vunpack.c.l.b16 %v2893
        %v3098 = vunpack.c.h.b16 %v2893
        %v3099 = vunpack.c.l.b16 %v2894
        %v3100 = vunpack.c.h.b16 %v2894
        %v3101 = vunpack.c.l.b16 %v2895
        %v3102 = vunpack.c.h.b16 %v2895
        %v3103 = vunpack.c.l.b16 %v2896
        %v3104 = vunpack.c.h.b16 %v2896
        %v3105 = vunpack.c.l.b16 %v2897
        %v3106 = vunpack.c.h.b16 %v2897
        %v3107 = vunpack.c.l.b16 %v2898
        %v3108 = vunpack.c.h.b16 %v2898
        %v3109 = vunpack.c.l.b16 %v2899
        %v3110 = vunpack.c.h.b16 %v2899
        %v3111 = vunpack.c.l.b16 %v2900
        %v3112 = vunpack.c.h.b16 %v2900
        %v3113 = vunpack.c.l.b16 %v2901
        %v3114 = vunpack.c.h.b16 %v2901
        %v3115 = vunpack.c.l.b16 %v2902
        %v3116 = vunpack.c.h.b16 %v2902
        %v3117 = vunpack.c.l.b16 %v2903
        %v3118 = vunpack.c.h.b16 %v2903
        %v3119 = vunpack.c.l.b16 %v2904
        %v3120 = vunpack.c.h.b16 %v2904
        %v3121 = vunpack.c.l.b16 %v2905
        %v3122 = vunpack.c.h.b16 %v2905
        %v3123 = vunpack.c.l.b16 %v2906
        %v3124 = vunpack.c.h.b16 %v2906
        %v3125 = vunpack.c.l.b16 %v2907
        %v3126 = vunpack.c.h.b16 %v2907
        %v3127 = vunpack.c.l.b16 %v2908
        %v3128 = vunpack.c.h.b16 %v2908
        %v3129 = vunpack.c.l.b16 %v2909
        %v3130 = vunpack.c.h.b16 %v2909
        %v3131 = vunpack.c.l.b16 %v2910
        %v3132 = vunpack.c.h.b16 %v2910
        %v3133 = vunpack.c.l.b16 %v2911
        %v3134 = vunpack.c.h.b16 %v2911
        %v3135 = vunpack.c.l.b16 %v2912
        %v3136 = vunpack.c.h.b16 %v2912
        %v3137 = vpack.c.b16 %v3081, %v3073
        %v3138 = vpack.c.b16 %v3082, %v3074
        %v3139 = vpack.c.b16 %v3083, %v3075
        %v3140 = vpack.c.b16 %v3084, %v3076
        %v3141 = vpack.c.b16 %v3085, %v3077
        %v3142 = vpack.c.b16 %v3086, %v3078
        %v3143 = vpack.c.b16 %v3087, %v3079
        %v3144 = vpack.c.b16 %v3088, %v3080
        %v3145 = vpack.c.b16 %v3097, %v3089
        %v3146 = vpack.c.b16 %v3098, %v3090
        %v3147 = vpack.c.b16 %v3099, %v3091
        %v3148 = vpack.c.b16 %v3100, %v3092
        %v3149 = vpack.c.b16 %v3101, %v3093
        %v3150 = vpack.c.b16 %v3102, %v3094
        %v3151 = vpack.c.b16 %v3103, %v3095
        %v3152 = vpack.c.b16 %v3104, %v3096
        %v3153 = vpack.c.b16 %v3113, %v3105
        %v3154 = vpack.c.b16 %v3114, %v3106
        %v3155 = vpack.c.b16 %v3115, %v3107
        %v3156 = vpack.c.b16 %v3116, %v3108
        %v3157 = vpack.c.b16 %v3117, %v3109
        %v3158 = vpack.c.b16 %v3118, %v3110
        %v3159 = vpack.c.b16 %v3119, %v3111
        %v3160 = vpack.c.b16 %v3120, %v3112
        %v3161 = vpack.c.b16 %v3129, %v3121
        %v3162 = vpack.c.b16 %v3130, %v3122
        %v3163 = vpack.c.b16 %v3131, %v3123
        %v3164 = vpack.c.b16 %v3132, %v3124
        %v3165 = vpack.c.b16 %v3133, %v3125
        %v3166 = vpack.c.b16 %v3134, %v3126
        %v3167 = vpack.c.b16 %v3135, %v3127
        %v3168 = vpack.c.b16 %v3136, %v3128
        %v3329 = vunpack.c.l.b16 %v2913
        %v3330 = vunpack.c.l.b16 %v2914
        %v3331 = vunpack.c.l.b16 %v2915
        %v3332 = vunpack.c.l.b16 %v2916
        %v3333 = vunpack.c.l.b16 %v2917
        %v3334 = vunpack.c.l.b16 %v2918
        %v3335 = vunpack.c.l.b16 %v2919
        %v3336 = vunpack.c.l.b16 %v2920
        %v3337 = vunpack.c.l.b16 %v2921
        %v3338 = vunpack.c.l.b16 %v2922
        %v3339 = vunpack.c.l.b16 %v2923
        %v3340 = vunpack.c.l.b16 %v2924
        %v3341 = vunpack.c.l.b16 %v2925
        %v3342 = vunpack.c.l.b16 %v2926
        %v3343 = vunpack.c.l.b16 %v2927
        %v3344 = vunpack.c.l.b16 %v2928
        %v3345 = vunpack.c.l.b16 %v2929
        %v3346 = vunpack.c.l.b16 %v2930
        %v3347 = vunpack.c.l.b16 %v2931
        %v3348 = vunpack.c.l.b16 %v2932
        %v3349 = vunpack.c.l.b16 %v2933
        %v3350 = vunpack.c.l.b16 %v2934
        %v3351 = vunpack.c.l.b16 %v2935
        %v3352 = vunpack.c.l.b16 %v2936
        %v3353 = vunpack.c.l.b16 %v2937
        %v3354 = vunpack.c.l.b16 %v2938
        %v3355 = vunpack.c.l.b16 %v2939
        %v3356 = vunpack.c.l.b16 %v2940
        %v3357 = vunpack.c.l.b16 %v2941
        %v3358 = vunpack.c.l.b16 %v2942
        %v3359 = vunpack.c.l.b16 %v2943
        %v3360 = vunpack.c.l.b16 %v2944
        %v3361 = vunpack.c.l.b16 %v2945
        %v3362 = vunpack.c.l.b16 %v2946
        %v3363 = vunpack.c.l.b16 %v2947
        %v3364 = vunpack.c.l.b16 %v2948
        %v3365 = vunpack.c.l.b16 %v2949
        %v3366 = vunpack.c.l.b16 %v2950
        %v3367 = vunpack.c.l.b16 %v2951
        %v3368 = vunpack.c.l.b16 %v2952
        %v3369 = vunpack.c.l.b16 %v2953
        %v3370 = vunpack.c.l.b16 %v2954
        %v3371 = vunpack.c.l.b16 %v2955
        %v3372 = vunpack.c.l.b16 %v2956
        %v3373 = vunpack.c.l.b16 %v2957
        %v3374 = vunpack.c.l.b16 %v2958
        %v3375 = vunpack.c.l.b16 %v2959
        %v3376 = vunpack.c.l.b16 %v2960
        %v3377 = vunpack.c.l.b16 %v2961
        %v3378 = vunpack.c.l.b16 %v2962
        %v3379 = vunpack.c.l.b16 %v2963
        %v3380 = vunpack.c.l.b16 %v2964
        %v3381 = vunpack.c.l.b16 %v2965
        %v3382 = vunpack.c.l.b16 %v2966
        %v3383 = vunpack.c.l.b16 %v2967
        %v3384 = vunpack.c.l.b16 %v2968
        %v3385 = vunpack.c.l.b16 %v2969
        %v3386 = vunpack.c.l.b16 %v2970
        %v3387 = vunpack.c.l.b16 %v2971
        %v3388 = vunpack.c.l.b16 %v2972
        %v3389 = vunpack.c.l.b16 %v2973
        %v3390 = vunpack.c.l.b16 %v2974
        %v3391 = vunpack.c.l.b16 %v2975
        %v3392 = vunpack.c.l.b16 %v2976
        %v3393 = vunpack.c.l.b16 %v2977
        %v3394 = vunpack.c.l.b16 %v2978
        %v3395 = vunpack.c.l.b16 %v2979
        %v3396 = vunpack.c.l.b16 %v2980
        %v3397 = vunpack.c.l.b16 %v2981
        %v3398 = vunpack.c.l.b16 %v2982
        %v3399 = vunpack.c.l.b16 %v2983
        %v3400 = vunpack.c.l.b16 %v2984
        %v3401 = vunpack.c.l.b16 %v2985
        %v3402 = vunpack.c.l.b16 %v2986
        %v3403 = vunpack.c.l.b16 %v2987
        %v3404 = vunpack.c.l.b16 %v2988
        %v3405 = vunpack.c.l.b16 %v2989
        %v3406 = vunpack.c.l.b16 %v2990
        %v3407 = vunpack.c.l.b16 %v2991
        %v3408 = vunpack.c.l.b16 %v2992
        %v3409 = vunpack.c.l.b16 %v2993
        %v3410 = vunpack.c.l.b16 %v2994
        %v3411 = vunpack.c.l.b16 %v2995
        %v3412 = vunpack.c.l.b16 %v2996
        %v3413 = vunpack.c.l.b16 %v2997
        %v3414 = vunpack.c.l.b16 %v2998
        %v3415 = vunpack.c.l.b16 %v2999
        %v3416 = vunpack.c.l.b16 %v3000
        %v3417 = vunpack.c.l.b16 %v3001
        %v3418 = vunpack.c.l.b16 %v3002
        %v3419 = vunpack.c.l.b16 %v3003
        %v3420 = vunpack.c.l.b16 %v3004
        %v3421 = vunpack.c.l.b16 %v3005
        %v3422 = vunpack.c.l.b16 %v3006
        %v3423 = vunpack.c.l.b16 %v3007
        %v3424 = vunpack.c.l.b16 %v3008
        %v3425 = vunpack.c.l.b16 %v3009
        %v3426 = vunpack.c.l.b16 %v3010
        %v3427 = vunpack.c.l.b16 %v3011
        %v3428 = vunpack.c.l.b16 %v3012
        %v3429 = vunpack.c.l.b16 %v3013
        %v3430 = vunpack.c.l.b16 %v3014
        %v3431 = vunpack.c.l.b16 %v3015
        %v3432 = vunpack.c.l.b16 %v3016
        %v3433 = vunpack.c.l.b16 %v3017
        %v3434 = vunpack.c.l.b16 %v3018
        %v3435 = vunpack.c.l.b16 %v3019
        %v3436 = vunpack.c.l.b16 %v3020
        %v3437 = vunpack.c.l.b16 %v3021
        %v3438 = vunpack.c.l.b16 %v3022
        %v3439 = vunpack.c.l.b16 %v3023
        %v3440 = vunpack.c.l.b16 %v3024
        %v3441 = vunpack.c.l.b16 %v3025
        %v3442 = vunpack.c.l.b16 %v3026
        %v3443 = vunpack.c.l.b16 %v3027
        %v3444 = vunpack.c.l.b16 %v3028
        %v3445 = vunpack.c.l.b16 %v3029
        %v3446 = vunpack.c.l.b16 %v3030
        %v3447 = vunpack.c.l.b16 %v3031
        %v3448 = vunpack.c.l.b16 %v3032
        %v3449 = vunpack.c.l.b16 %v3033
        %v3450 = vunpack.c.l.b16 %v3034
        %v3451 = vunpack.c.l.b16 %v3035
        %v3452 = vunpack.c.l.b16 %v3036
        %v3453 = vunpack.c.l.b16 %v3037
        %v3454 = vunpack.c.l.b16 %v3038
        %v3455 = vunpack.c.l.b16 %v3039
        %v3456 = vunpack.c.l.b16 %v3040
        %v3457 = vpack.c.b16 %v3330, %v3329
        %v3458 = vpack.c.b16 %v3332, %v3331
        %v3459 = vpack.c.b16 %v3334, %v3333
        %v3460 = vpack.c.b16 %v3336, %v3335
        %v3461 = vpack.c.b16 %v3338, %v3337
        %v3462 = vpack.c.b16 %v3340, %v3339
        %v3463 = vpack.c.b16 %v3342, %v3341
        %v3464 = vpack.c.b16 %v3344, %v3343
        %v3465 = vpack.c.b16 %v3346, %v3345
        %v3466 = vpack.c.b16 %v3348, %v3347
        %v3467 = vpack.c.b16 %v3350, %v3349
        %v3468 = vpack.c.b16 %v3352, %v3351
        %v3469 = vpack.c.b16 %v3354, %v3353
        %v3470 = vpack.c.b16 %v3356, %v3355
        %v3471 = vpack.c.b16 %v3358, %v3357
        %v3472 = vpack.c.b16 %v3360, %v3359
        %v3473 = vpack.c.b16 %v3362, %v3361
        %v3474 = vpack.c.b16 %v3364, %v3363
        %v3475 = vpack.c.b16 %v3366, %v3365
        %v3476 = vpack.c.b16 %v3368, %v3367
        %v3477 = vpack.c.b16 %v3370, %v3369
        %v3478 = vpack.c.b16 %v3372, %v3371
        %v3479 = vpack.c.b16 %v3374, %v3373
        %v3480 = vpack.c.b16 %v3376, %v3375
        %v3481 = vpack.c.b16 %v3378, %v3377
        %v3482 = vpack.c.b16 %v3380, %v3379
        %v3483 = vpack.c.b16 %v3382, %v3381
        %v3484 = vpack.c.b16 %v3384, %v3383
        %v3485 = vpack.c.b16 %v3386, %v3385
        %v3486 = vpack.c.b16 %v3388, %v3387
        %v3487 = vpack.c.b16 %v3390, %v3389
        %v3488 = vpack.c.b16 %v3392, %v3391
        %v3489 = vpack.c.b16 %v3394, %v3393
        %v3490 = vpack.c.b16 %v3396, %v3395
        %v3491 = vpack.c.b16 %v3398, %v3397
        %v3492 = vpack.c.b16 %v3400, %v3399
        %v3493 = vpack.c.b16 %v3402, %v3401
        %v3494 = vpack.c.b16 %v3404, %v3403
        %v3495 = vpack.c.b16 %v3406, %v3405
        %v3496 = vpack.c.b16 %v3408, %v3407
        %v3497 = vpack.c.b16 %v3410, %v3409
        %v3498 = vpack.c.b16 %v3412, %v3411
        %v3499 = vpack.c.b16 %v3414, %v3413
        %v3500 = vpack.c.b16 %v3416, %v3415
        %v3501 = vpack.c.b16 %v3418, %v3417
        %v3502 = vpack.c.b16 %v3420, %v3419
        %v3503 = vpack.c.b16 %v3422, %v3421
        %v3504 = vpack.c.b16 %v3424, %v3423
        %v3505 = vpack.c.b16 %v3426, %v3425
        %v3506 = vpack.c.b16 %v3428, %v3427
        %v3507 = vpack.c.b16 %v3430, %v3429
        %v3508 = vpack.c.b16 %v3432, %v3431
        %v3509 = vpack.c.b16 %v3434, %v3433
        %v3510 = vpack.c.b16 %v3436, %v3435
        %v3511 = vpack.c.b16 %v3438, %v3437
        %v3512 = vpack.c.b16 %v3440, %v3439
        %v3513 = vpack.c.b16 %v3442, %v3441
        %v3514 = vpack.c.b16 %v3444, %v3443
        %v3515 = vpack.c.b16 %v3446, %v3445
        %v3516 = vpack.c.b16 %v3448, %v3447
        %v3517 = vpack.c.b16 %v3450, %v3449
        %v3518 = vpack.c.b16 %v3452, %v3451
        %v3519 = vpack.c.b16 %v3454, %v3453
        %v3520 = vpack.c.b16 %v3456, %v3455
        %3585 = vmatpush.bf16.msra.mxu0 %v3464
        %3586 = vmatpush.bf16.msra.mxu0 %v3463
        %3587 = vmatpush.bf16.msra.mxu0 %v3462
        %3588 = vmatpush.bf16.msra.mxu0 %v3461
        %3589 = vmatpush.bf16.msra.mxu0 %v3460
        %3590 = vmatpush.bf16.msra.mxu0 %v3459
        %3591 = vmatpush.bf16.msra.mxu0 %v3458
        %3592 = vmatpush.bf16.msra.mxu0 %v3457
        %3593 = vmatmul.bf16.gmra.mxu0 %v3137
        %v3594 = vpop.f32.mrf.mxu0
        %v3595 = vadd.f32 0.0, %v3594
        %v3596 = vpop.f32.mrf.mxu0
        %v3597 = vadd.f32 0.0, %v3596
        %3598 = vmatmul.bf16.gmra.mxu0 %v3145
        %v3599 = vpop.f32.mrf.mxu0
        %v3600 = vadd.f32 0.0, %v3599
        %v3601 = vpop.f32.mrf.mxu0
        %v3602 = vadd.f32 0.0, %v3601
        %3603 = vmatmul.bf16.gmra.mxu0 %v3153
        %v3604 = vpop.f32.mrf.mxu0
        %v3605 = vadd.f32 0.0, %v3604
        %v3606 = vpop.f32.mrf.mxu0
        %v3607 = vadd.f32 0.0, %v3606
        %3608 = vmatmul.bf16.gmra.mxu0 %v3161
        %v3609 = vpop.f32.mrf.mxu0
        %v3610 = vadd.f32 0.0, %v3609
        %v3611 = vpop.f32.mrf.mxu0
        %v3612 = vadd.f32 0.0, %v3611
        %3613 = vdwg.mxu0
        %3614 = vmatpush.bf16.msra.mxu0 %v3472
        %3615 = vmatpush.bf16.msra.mxu0 %v3471
        %3616 = vmatpush.bf16.msra.mxu0 %v3470
        %3617 = vmatpush.bf16.msra.mxu0 %v3469
        %3618 = vmatpush.bf16.msra.mxu0 %v3468
        %3619 = vmatpush.bf16.msra.mxu0 %v3467
        %3620 = vmatpush.bf16.msra.mxu0 %v3466
        %3621 = vmatpush.bf16.msra.mxu0 %v3465
        %3622 = vmatmul.bf16.gmra.mxu0 %v3138
        %v3623 = vpop.f32.mrf.mxu0
        %v3624 = vadd.f32 %v3595, %v3623
        %v3625 = vpop.f32.mrf.mxu0
        %v3626 = vadd.f32 %v3597, %v3625
        %3627 = vmatmul.bf16.gmra.mxu0 %v3146
        %v3628 = vpop.f32.mrf.mxu0
        %v3629 = vadd.f32 %v3600, %v3628
        %v3630 = vpop.f32.mrf.mxu0
        %v3631 = vadd.f32 %v3602, %v3630
        %3632 = vmatmul.bf16.gmra.mxu0 %v3154
        %v3633 = vpop.f32.mrf.mxu0
        %v3634 = vadd.f32 %v3605, %v3633
        %v3635 = vpop.f32.mrf.mxu0
        %v3636 = vadd.f32 %v3607, %v3635
        %3637 = vmatmul.bf16.gmra.mxu0 %v3162
        %v3638 = vpop.f32.mrf.mxu0
        %v3639 = vadd.f32 %v3610, %v3638
        %v3640 = vpop.f32.mrf.mxu0
        %v3641 = vadd.f32 %v3612, %v3640
        %3642 = vdwg.mxu0
        %3643 = vmatpush.bf16.msra.mxu0 %v3480
        %3644 = vmatpush.bf16.msra.mxu0 %v3479
        %3645 = vmatpush.bf16.msra.mxu0 %v3478
        %3646 = vmatpush.bf16.msra.mxu0 %v3477
        %3647 = vmatpush.bf16.msra.mxu0 %v3476
        %3648 = vmatpush.bf16.msra.mxu0 %v3475
        %3649 = vmatpush.bf16.msra.mxu0 %v3474
        %3650 = vmatpush.bf16.msra.mxu0 %v3473
        %3651 = vmatmul.bf16.gmra.mxu0 %v3139
        %v3652 = vpop.f32.mrf.mxu0
        %v3653 = vadd.f32 %v3624, %v3652
        %v3654 = vpop.f32.mrf.mxu0
        %v3655 = vadd.f32 %v3626, %v3654
        %3656 = vmatmul.bf16.gmra.mxu0 %v3147
        %v3657 = vpop.f32.mrf.mxu0
        %v3658 = vadd.f32 %v3629, %v3657
        %v3659 = vpop.f32.mrf.mxu0
        %v3660 = vadd.f32 %v3631, %v3659
        %3661 = vmatmul.bf16.gmra.mxu0 %v3155
        %v3662 = vpop.f32.mrf.mxu0
        %v3663 = vadd.f32 %v3634, %v3662
        %v3664 = vpop.f32.mrf.mxu0
        %v3665 = vadd.f32 %v3636, %v3664
        %3666 = vmatmul.bf16.gmra.mxu0 %v3163
        %v3667 = vpop.f32.mrf.mxu0
        %v3668 = vadd.f32 %v3639, %v3667
        %v3669 = vpop.f32.mrf.mxu0
        %v3670 = vadd.f32 %v3641, %v3669
        %3671 = vdwg.mxu0
        %3672 = vmatpush.bf16.msra.mxu0 %v3488
        %3673 = vmatpush.bf16.msra.mxu0 %v3487
        %3674 = vmatpush.bf16.msra.mxu0 %v3486
        %3675 = vmatpush.bf16.msra.mxu0 %v3485
        %3676 = vmatpush.bf16.msra.mxu0 %v3484
        %3677 = vmatpush.bf16.msra.mxu0 %v3483
        %3678 = vmatpush.bf16.msra.mxu0 %v3482
        %3679 = vmatpush.bf16.msra.mxu0 %v3481
        %3680 = vmatmul.bf16.gmra.mxu0 %v3140
        %v3681 = vpop.f32.mrf.mxu0
        %v3682 = vadd.f32 %v3653, %v3681
        %v3683 = vpop.f32.mrf.mxu0
        %v3684 = vadd.f32 %v3655, %v3683
        %3685 = vmatmul.bf16.gmra.mxu0 %v3148
        %v3686 = vpop.f32.mrf.mxu0
        %v3687 = vadd.f32 %v3658, %v3686
        %v3688 = vpop.f32.mrf.mxu0
        %v3689 = vadd.f32 %v3660, %v3688
        %3690 = vmatmul.bf16.gmra.mxu0 %v3156
        %v3691 = vpop.f32.mrf.mxu0
        %v3692 = vadd.f32 %v3663, %v3691
        %v3693 = vpop.f32.mrf.mxu0
        %v3694 = vadd.f32 %v3665, %v3693
        %3695 = vmatmul.bf16.gmra.mxu0 %v3164
        %v3696 = vpop.f32.mrf.mxu0
        %v3697 = vadd.f32 %v3668, %v3696
        %v3698 = vpop.f32.mrf.mxu0
        %v3699 = vadd.f32 %v3670, %v3698
        %3700 = vdwg.mxu0
        %3701 = vmatpush.bf16.msra.mxu0 %v3496
        %3702 = vmatpush.bf16.msra.mxu0 %v3495
        %3703 = vmatpush.bf16.msra.mxu0 %v3494
        %3704 = vmatpush.bf16.msra.mxu0 %v3493
        %3705 = vmatpush.bf16.msra.mxu0 %v3492
        %3706 = vmatpush.bf16.msra.mxu0 %v3491
        %3707 = vmatpush.bf16.msra.mxu0 %v3490
        %3708 = vmatpush.bf16.msra.mxu0 %v3489
        %3709 = vmatmul.bf16.gmra.mxu0 %v3141
        %v3710 = vpop.f32.mrf.mxu0
        %v3711 = vadd.f32 %v3682, %v3710
        %v3712 = vpop.f32.mrf.mxu0
        %v3713 = vadd.f32 %v3684, %v3712
        %3714 = vmatmul.bf16.gmra.mxu0 %v3149
        %v3715 = vpop.f32.mrf.mxu0
        %v3716 = vadd.f32 %v3687, %v3715
        %v3717 = vpop.f32.mrf.mxu0
        %v3718 = vadd.f32 %v3689, %v3717
        %3719 = vmatmul.bf16.gmra.mxu0 %v3157
        %v3720 = vpop.f32.mrf.mxu0
        %v3721 = vadd.f32 %v3692, %v3720
        %v3722 = vpop.f32.mrf.mxu0
        %v3723 = vadd.f32 %v3694, %v3722
        %3724 = vmatmul.bf16.gmra.mxu0 %v3165
        %v3725 = vpop.f32.mrf.mxu0
        %v3726 = vadd.f32 %v3697, %v3725
        %v3727 = vpop.f32.mrf.mxu0
        %v3728 = vadd.f32 %v3699, %v3727
        %3729 = vdwg.mxu0
        %3730 = vmatpush.bf16.msra.mxu0 %v3504
        %3731 = vmatpush.bf16.msra.mxu0 %v3503
        %3732 = vmatpush.bf16.msra.mxu0 %v3502
        %3733 = vmatpush.bf16.msra.mxu0 %v3501
        %3734 = vmatpush.bf16.msra.mxu0 %v3500
        %3735 = vmatpush.bf16.msra.mxu0 %v3499
        %3736 = vmatpush.bf16.msra.mxu0 %v3498
        %3737 = vmatpush.bf16.msra.mxu0 %v3497
        %3738 = vmatmul.bf16.gmra.mxu0 %v3142
        %v3739 = vpop.f32.mrf.mxu0
        %v3740 = vadd.f32 %v3711, %v3739
        %v3741 = vpop.f32.mrf.mxu0
        %v3742 = vadd.f32 %v3713, %v3741
        %3743 = vmatmul.bf16.gmra.mxu0 %v3150
        %v3744 = vpop.f32.mrf.mxu0
        %v3745 = vadd.f32 %v3716, %v3744
        %v3746 = vpop.f32.mrf.mxu0
        %v3747 = vadd.f32 %v3718, %v3746
        %3748 = vmatmul.bf16.gmra.mxu0 %v3158
        %v3749 = vpop.f32.mrf.mxu0
        %v3750 = vadd.f32 %v3721, %v3749
        %v3751 = vpop.f32.mrf.mxu0
        %v3752 = vadd.f32 %v3723, %v3751
        %3753 = vmatmul.bf16.gmra.mxu0 %v3166
        %v3754 = vpop.f32.mrf.mxu0
        %v3755 = vadd.f32 %v3726, %v3754
        %v3756 = vpop.f32.mrf.mxu0
        %v3757 = vadd.f32 %v3728, %v3756
        %3758 = vdwg.mxu0
        %3759 = vmatpush.bf16.msra.mxu0 %v3512
        %3760 = vmatpush.bf16.msra.mxu0 %v3511
        %3761 = vmatpush.bf16.msra.mxu0 %v3510
        %3762 = vmatpush.bf16.msra.mxu0 %v3509
        %3763 = vmatpush.bf16.msra.mxu0 %v3508
        %3764 = vmatpush.bf16.msra.mxu0 %v3507
        %3765 = vmatpush.bf16.msra.mxu0 %v3506
        %3766 = vmatpush.bf16.msra.mxu0 %v3505
        %3767 = vmatmul.bf16.gmra.mxu0 %v3143
        %v3768 = vpop.f32.mrf.mxu0
        %v3769 = vadd.f32 %v3740, %v3768
        %v3770 = vpop.f32.mrf.mxu0
        %v3771 = vadd.f32 %v3742, %v3770
        %3772 = vmatmul.bf16.gmra.mxu0 %v3151
        %v3773 = vpop.f32.mrf.mxu0
        %v3774 = vadd.f32 %v3745, %v3773
        %v3775 = vpop.f32.mrf.mxu0
        %v3776 = vadd.f32 %v3747, %v3775
        %3777 = vmatmul.bf16.gmra.mxu0 %v3159
        %v3778 = vpop.f32.mrf.mxu0
        %v3779 = vadd.f32 %v3750, %v3778
        %v3780 = vpop.f32.mrf.mxu0
        %v3781 = vadd.f32 %v3752, %v3780
        %3782 = vmatmul.bf16.gmra.mxu0 %v3167
        %v3783 = vpop.f32.mrf.mxu0
        %v3784 = vadd.f32 %v3755, %v3783
        %v3785 = vpop.f32.mrf.mxu0
        %v3786 = vadd.f32 %v3757, %v3785
        %3787 = vdwg.mxu0
        %3788 = vmatpush.bf16.msra.mxu0 %v3520
        %3789 = vmatpush.bf16.msra.mxu0 %v3519
        %3790 = vmatpush.bf16.msra.mxu0 %v3518
        %3791 = vmatpush.bf16.msra.mxu0 %v3517
        %3792 = vmatpush.bf16.msra.mxu0 %v3516
        %3793 = vmatpush.bf16.msra.mxu0 %v3515
        %3794 = vmatpush.bf16.msra.mxu0 %v3514
        %3795 = vmatpush.bf16.msra.mxu0 %v3513
        %3796 = vmatmul.bf16.gmra.mxu0 %v3144
        %v3797 = vpop.f32.mrf.mxu0
        %v3798 = vadd.f32 %v3769, %v3797
        %v3799 = vpop.f32.mrf.mxu0
        %v3800 = vadd.f32 %v3771, %v3799
        %3801 = vmatmul.bf16.gmra.mxu0 %v3152
        %v3802 = vpop.f32.mrf.mxu0
        %v3803 = vadd.f32 %v3774, %v3802
        %v3804 = vpop.f32.mrf.mxu0
        %v3805 = vadd.f32 %v3776, %v3804
        %3806 = vmatmul.bf16.gmra.mxu0 %v3160
        %v3807 = vpop.f32.mrf.mxu0
        %v3808 = vadd.f32 %v3779, %v3807
        %v3809 = vpop.f32.mrf.mxu0
        %v3810 = vadd.f32 %v3781, %v3809
        %3811 = vmatmul.bf16.gmra.mxu0 %v3168
        %v3812 = vpop.f32.mrf.mxu0
        %v3813 = vadd.f32 %v3784, %v3812
        %v3814 = vpop.f32.mrf.mxu0
        %v3815 = vadd.f32 %v3786, %v3814
        %3816 = vdwg.mxu0
        %vm3817 = vcmask 64512
        %3818 = vst.msk [vmem:[%s319] sm:$0xff] %vm3817, %v3798
        %3819 = vst.msk [vmem:[%s319 + $0x8] sm:$0xff] %vm3817, %v3800
        %3820 = vst.msk [vmem:[%s319 + $0x10] sm:$0xff] %vm3817, %v3803
        %3821 = vst.msk [vmem:[%s319 + $0x18] sm:$0xff] %vm3817, %v3805
        %3822 = vst.msk [vmem:[%s319 + $0x20] sm:$0xff] %vm3817, %v3808
        %3823 = vst.msk [vmem:[%s319 + $0x28] sm:$0xff] %vm3817, %v3810
        %3824 = vst.msk [vmem:[%s319 + $0x30] sm:$0xff] %vm3817, %v3813
        %3825 = vst.msk [vmem:[%s319 + $0x38] sm:$0xff] %vm3817, %v3815
        %3826 = vst [vmem:[%s292] sm:$0xff] %v2881
        %3827 = vst [vmem:[%s292 + $0x8] sm:$0xff] %v2882
        %3828 = vst [vmem:[%s292 + $0x10] sm:$0xff] %v2883
        %3829 = vst [vmem:[%s292 + $0x18] sm:$0xff] %v2884
        %3830 = vst [vmem:[%s292 + $0x20] sm:$0xff] %v2885
        %3831 = vst [vmem:[%s292 + $0x28] sm:$0xff] %v2886
        %3832 = vst [vmem:[%s292 + $0x30] sm:$0xff] %v2887
        %3833 = vst [vmem:[%s292 + $0x38] sm:$0xff] %v2888
        %3834 = vst [vmem:[%s292 + $0x40] sm:$0xff] %v2889
        %3835 = vst [vmem:[%s292 + $0x48] sm:$0xff] %v2890
        %3836 = vst [vmem:[%s292 + $0x50] sm:$0xff] %v2891
        %3837 = vst [vmem:[%s292 + $0x58] sm:$0xff] %v2892
        %3838 = vst [vmem:[%s292 + $0x60] sm:$0xff] %v2893
        %3839 = vst [vmem:[%s292 + $0x68] sm:$0xff] %v2894
        %3840 = vst [vmem:[%s292 + $0x70] sm:$0xff] %v2895
        %3841 = vst [vmem:[%s292 + $0x78] sm:$0xff] %v2896
        %3842 = vst [vmem:[%s292 + $0x80] sm:$0xff] %v2897
        %3843 = vst [vmem:[%s292 + $0x88] sm:$0xff] %v2898
        %3844 = vst [vmem:[%s292 + $0x90] sm:$0xff] %v2899
        %3845 = vst [vmem:[%s292 + $0x98] sm:$0xff] %v2900
        %3846 = vst [vmem:[%s292 + $0xa0] sm:$0xff] %v2901
        %3847 = vst [vmem:[%s292 + $0xa8] sm:$0xff] %v2902
        %3848 = vst [vmem:[%s292 + $0xb0] sm:$0xff] %v2903
        %3849 = vst [vmem:[%s292 + $0xb8] sm:$0xff] %v2904
        %3850 = vst [vmem:[%s292 + $0xc0] sm:$0xff] %v2905
        %3851 = vst [vmem:[%s292 + $0xc8] sm:$0xff] %v2906
        %3852 = vst [vmem:[%s292 + $0xd0] sm:$0xff] %v2907
        %3853 = vst [vmem:[%s292 + $0xd8] sm:$0xff] %v2908
        %3854 = vst [vmem:[%s292 + $0xe0] sm:$0xff] %v2909
        %3855 = vst [vmem:[%s292 + $0xe8] sm:$0xff] %v2910
        %3856 = vst [vmem:[%s292 + $0xf0] sm:$0xff] %v2911
        %3857 = vst [vmem:[%s292 + $0xf8] sm:$0xff] %v2912
        %s3858 = sand.u32 %s125, 1
        %s3859 = scalar_lea.sflag [#allocation4], %s3858
        %s3860 = sand.u32 %s125, 1
        %s3861 = smul.addr %s3860, 256
        %s3862 = scalar_lea.vmem [#allocation7], %s3861
        %s3863 = smul.u32 8, %s29
        %p3864 = scmp.lt.s32.totalorder %s30, 1
        %s3865 = scalar_select %p3864, %s30, 1
        %p3866 = scmp.lt.s32.totalorder %s3863, 15
        %s3867 = scalar_select %p3866, %s3863, 15
        %s3868 = smul.addr %s3865, 16
        %s3869 = sadd.s32 %s3867, %s3868
        %s3870 = smul.addr %s3869, 8
        %s3871 = scalar_lea.vmem %s4, %s3870
        // Predicated region
        $region41: #{tpu_custom_call.1} parent=31 // pred_check
          %p3872 = pneg %p135
        $region42: #{tpu_custom_call.1} parent=31 // pred_check_branch
          %3874 = sbr.rel (%p3872) target = $region44
        $region43: #{tpu_custom_call.1} parent=31 // pred_region
          %s3875 = smul.u32 8, %s29
          %3877 = vsyncadd %s3859, 0
          %s3878 = smul.addr %s3875, 8
          %s3879 = smul.addr %s30, 128
          %s3880 = sadd.s32 %s3878, %s3879
          %s3881 = smul.addr %s3880, 4
          %s3882 = scalar_lea.hbm %s3, %s3881
          %s3883 = sshll.u32 %s3862, 4
          %s3884 = int_to_ptr.vmem [resolvable:$true] %s3883
          %s3885 = sshll.u32 %s3882, 4
          %s3886 = int_to_ptr.hbm [resolvable:$true] %s3885
          %3891 = dma.vmem_to_hbm [thread:$0]  %s3884, 4096, %s3886, %s3859, 512, 512, 32
        $region44: #{tpu_custom_call.1} parent=31 // pred_fallthru
          _
        // Predicated region
        $region45: #{tpu_custom_call.1} parent=31 // pred_check
          %p3892 = pneg %p163
        $region46: #{tpu_custom_call.1} parent=31 // pred_check_branch
          %3894 = sbr.rel (%p3892) target = $region48
        $region47: #{tpu_custom_call.1} parent=31 // pred_region
          %s3895 = smul.u32 8, %s29
        $region48: #{tpu_custom_call.1} parent=31 // pred_fallthru
          _
      $region32: #{tpu_custom_call.1} parent=5 // pred_fallthru
        _
      %p3896 = scmp.le.s32.totalorder 2, %s20
      // Predicated region
      $region49: #{tpu_custom_call.1} parent=5 // pred_check
        %p3897 = pneg %p3896
      $region50: #{tpu_custom_call.1} parent=5 // pred_check_branch
        %3899 = sbr.rel (%p3897) target = $region52
      $region51: #{tpu_custom_call.1} parent=5 // pred_region
        %s3900 = ssub.s32 %s20, 2
        // Predicated region
        $region53: #{tpu_custom_call.1} parent=51 // pred_check
          %p3901 = pneg %p141
        $region54: #{tpu_custom_call.1} parent=51 // pred_check_branch
          %3903 = sbr.rel (%p3901) target = $region56
        $region55: #{tpu_custom_call.1} parent=51 // pred_region
          %s3904 = sand.u32 %s126, 1
          %s3905 = scalar_lea.sflag [#allocation4], %s3904
          %s3906 = sand.u32 %s126, 1
          %s3907 = smul.addr %s3906, 256
          %s3908 = scalar_lea.vmem [#allocation7], %s3907
          %3910 = dma.done %s3905, 4096
        $region56: #{tpu_custom_call.1} parent=51 // pred_fallthru
          _
        // Predicated region
        $region57: #{tpu_custom_call.1} parent=51 // pred_check
          %p3911 = pneg %p169
        $region58: #{tpu_custom_call.1} parent=51 // pred_check_branch
          %3913 = sbr.rel (%p3911) target = $region60
        $region59: #{tpu_custom_call.1} parent=51 // pred_region
          %s3914 = smul.u32 8, %s31
          %p3915 = scmp.lt.s32.totalorder %s32, 1
          %s3916 = scalar_select %p3915, %s32, 1
          %p3917 = scmp.lt.s32.totalorder %s3914, 15
          %s3918 = scalar_select %p3917, %s3914, 15
          %s3919 = smul.addr %s3916, 16
          %s3920 = sadd.s32 %s3918, %s3919
          %s3921 = smul.addr %s3920, 8
          %s3922 = scalar_lea.vmem %s4, %s3921
        $region60: #{tpu_custom_call.1} parent=51 // pred_fallthru
          _
      $region52: #{tpu_custom_call.1} parent=5 // pred_fallthru
        _
    $region6: #{tpu_custom_call.1} parent=1 // loop_footer
      %s24 = sadd.s32 1, %s20
    $region7: #{tpu_custom_call.1} parent=1 // loop_footer_branch
      %19 = sbr.rel target = $region3
    $region8: #{tpu_custom_call.1} parent=1 // loop_exit
      _
    %3923 = vsyncpa [#allocation3], 1
    %s3924 = scalar_lea.sflag [#allocation3], 1
    %3925 = vsyncpa %s3924, 1
    %3926 = vsyncpa [#allocation6], 1
    %s3927 = scalar_lea.sflag [#allocation6], 1
    %3928 = vsyncpa %s3927, 1
    %3929 = vsyncpa [#allocation4], 1
    %s3930 = scalar_lea.sflag [#allocation4], 1
    %3931 = vsyncpa %s3930, 1

</llo_original>
